<compile_context>
chip_gen: v7x
topology: tpu7x:2x2x1
jax: 0.10.0
libtpu: 0.0.40
codegen_flags: <defaults>
</compile_context>

<pallas_src>
import math
from functools import partial

import jax
import jax.numpy as jnp
from jax import lax
from jax.experimental import pallas as pl
from jax.experimental.pallas import tpu as pltpu

EVENT_DIM = 128      # event vectors are 128-d (module docstring)
MAX_TIME = 16        # synthetic time-embedding vocabulary size
DIM_FF = 2048        # nn.TransformerEncoderLayer default dim_feedforward
LN_EPS = 1e-5        # nn.LayerNorm default eps
ARC_S = 30.0         # ArcFace scale
ARC_M = 0.50         # ArcFace angular margin
_COS_M = math.cos(ARC_M)
_SIN_M = math.sin(ARC_M)
_TH = math.cos(math.pi - ARC_M)
_MM = math.sin(math.pi - ARC_M) * ARC_M


def _vmem_limit():
    """Generation-aware VMEM limit (64 MiB/TC on v7x, 128 MiB on v5e/v6e)."""
    try:
        cap = int(pltpu.get_tpu_info().vmem_capacity_bytes)
    except Exception:
        cap = 64 * 1024 * 1024
    return max(32 * 1024 * 1024, min(cap - 16 * 1024 * 1024, 112 * 1024 * 1024))


def _layernorm(x, g, b):
    mu = jnp.mean(x, axis=-1, keepdims=True)
    xc = x - mu
    var = jnp.mean(xc * xc, axis=-1, keepdims=True)
    return xc * lax.rsqrt(var + LN_EPS) * g + b


def _pick_batch_tile(B, S):
    # Batch tile = parallel grid axis (megacore on v7x) AND the VMEM cap for the
    # per-head attention scores (BT*S*S*4 bytes).  Tiles below the full batch must
    # be multiples of 8 (sublane constraint on the (BT, D) output block).
    if B <= 8 or B % 8 != 0:
        return B
    budget = 2 * 1024 * 1024
    bt = B
    for cand in (64, 32, 16, 8):
        if B % cand == 0:
            bt = cand
            if cand * S * S * 4 <= budget:
                break
    return bt


def _ffn_row_tile(R):
    for t in (256, 128, 64, 32, 16, 8):
        if R % t == 0:
            return t
    return R


def _class_tile(c):
    for t in (1024, 512, 256, 128):
        if c % t == 0:
            return t
    return c


# ----------------------------------------------------------------------------
# Fused encoder kernel: grid = (batch_tile, layer).
#   layer 0      : fused embedding (event Linear + time-emb one-hot matmul) into x_scr
#   every layer  : post-norm TransformerEncoderLayer (ReLU FFN, eval -> no dropout)
#   last layer   : write only the last time step (BT, D) to HBM
# Activations stay resident in VMEM scratch; per-layer weights streamed by BlockSpec.
# ----------------------------------------------------------------------------
def _encoder_kernel(H, S, BT, use_mask,
                    ev_ref, tid_ref, mask_ref,
                    we_ref, be_ref, ttab_ref,
                    wqkv_ref, bqkv_ref, wo_ref, bo_ref,
                    ln1g_ref, ln1b_ref,
                    w1_ref, b1_ref, w2_ref, b2_ref,
                    ln2g_ref, ln2b_ref,
                    out_ref, x_scr):
    D = out_ref.shape[-1]
    E = ev_ref.shape[-1]
    T = ttab_ref.shape[0]
    dh = D // H
    R = BT * S
    layer = pl.program_id(1)

    # ---- layer 0: fused embedding (no separate embed kernel / HBM round trip) ----
    @pl.when(layer == 0)
    def _():
        ev = ev_ref[...].reshape(R, E)                                   # bf16
        emb = jnp.dot(ev, we_ref[...], preferred_element_type=jnp.float32) + be_ref[...]
        tid = tid_ref[...].reshape(R, 1)                                 # int32
        onehot = (tid == lax.broadcasted_iota(jnp.int32, (R, T), 1)).astype(jnp.float32)
        temb = jnp.dot(onehot, ttab_ref[...], preferred_element_type=jnp.float32)
        x_scr[...] = emb + temb

    x = x_scr[...]                                                       # (R, D) f32 resident
    xb = x.astype(jnp.bfloat16)

    # ---- fused QKV projection; cast to bf16 immediately after the bias add ----
    qkv = (jnp.dot(xb, wqkv_ref[...], preferred_element_type=jnp.float32)
           + bqkv_ref[...]).astype(jnp.bfloat16)                         # (R, 3D) bf16
    qkv3 = qkv.reshape(BT, S, 3 * D)

    # ---- attention: per-head, batch-tiled -> zero XLU transposes, scores capped at (BT, S, S) ----
    scale = 1.0 / math.sqrt(dh)
    heads = []
    for h in range(H):
        qh = qkv3[:, :, h * dh:(h + 1) * dh]                             # (BT, S, dh) bf16
        kh = qkv3[:, :, D + h * dh:D + (h + 1) * dh]
        vh = qkv3[:, :, 2 * D + h * dh:2 * D + (h + 1) * dh]
        sc = jnp.einsum('bqd,bkd->bqk', qh, kh,
                        preferred_element_type=jnp.float32) * scale      # (BT, S, S) f32
        if use_mask:
            sc = sc + mask_ref[...]                                      # (BT, 1, S) key-pad mask
        m = jnp.max(sc, axis=-1, keepdims=True)
        e = jnp.exp(sc - m)
        p = (e * pl.reciprocal(jnp.sum(e, axis=-1, keepdims=True), approx=True)
             ).astype(jnp.bfloat16)
        heads.append(jnp.einsum('bqk,bkd->bqd', p, vh,
                                preferred_element_type=jnp.float32).astype(jnp.bfloat16))
    o = jnp.concatenate(heads, axis=-1).reshape(R, D)                    # (R, D) bf16

    attn = jnp.dot(o, wo_ref[...], preferred_element_type=jnp.float32) + bo_ref[...]
    y = _layernorm(x + attn, ln1g_ref[...], ln1b_ref[...])               # f32 elementwise path
    x_scr[...] = y

    # ---- FFN: row-tiled so the (rows, DIM_FF) activation never exceeds RT rows ----
    RT = _ffn_row_tile(R)

    def ffn_chunk(c, carry):
        r0 = pl.multiple_of(c * RT, RT)
        yb = x_scr[pl.ds(r0, RT), :]
        h1 = jnp.maximum(
            jnp.dot(yb.astype(jnp.bfloat16), w1_ref[...],
                    preferred_element_type=jnp.float32) + b1_ref[...], 0.0)
        h2 = jnp.dot(h1.astype(jnp.bfloat16), w2_ref[...],
                     preferred_element_type=jnp.float32) + b2_ref[...]
        x_scr[pl.ds(r0, RT), :] = _layernorm(yb + h2, ln2g_ref[...], ln2b_ref[...])
        return carry

    lax.fori_loop(0, R // RT, ffn_chunk, 0)

    # ---- only features = x[-1] is consumed downstream: write just the last time step ----
    @pl.when(layer == pl.num_programs(1) - 1)
    def _():
        out_ref[...] = x_scr[...].reshape(BT, S, D)[:, S - 1, :]


# ----------------------------------------------------------------------------
# ArcFace head kernel: inputs are pre-normalized in the wrapper; f32 cosine via
# dot_general contracting dim 1 with dim 1 (no wn.T), class-tiled grid.
# ----------------------------------------------------------------------------
def _arcface_kernel(f_ref, w_ref, lab_ref, out_ref):
    cosine = lax.dot_general(f_ref[...], w_ref[...],
                             (((1,), (1,)), ((), ())),
                             preferred_element_type=jnp.float32)         # (B, TC) f32
    cosine = jnp.clip(cosine, -1.0, 1.0)
    sine = jnp.sqrt(jnp.clip(1.0 - cosine * cosine, 0.0, 1.0))
    phi = cosine * _COS_M - sine * _SIN_M                                # cos(theta + m)
    # TODO(synk): exact zae_engine ArcFaceLoss margin variant unknown; standard hard
    # threshold (cosine > cos(pi-m) ? phi : cosine - sin(pi-m)*m) is implemented here.
    phi = jnp.where(cosine > _TH, phi, cosine - _MM)
    Bq, Ct = cosine.shape
    col = lax.broadcasted_iota(jnp.int32, (Bq, Ct), 1) + pl.program_id(0) * Ct
    onehot = col == lab_ref[...]
    out_ref[...] = jnp.where(onehot, ARC_S * phi, ARC_S * cosine)


# ----------------------------------------------------------------------------
# Parameter init (deterministic, PyTorch-style fan-in uniform for Linears).
# QKV fused and per-layer weights stacked along a layer axis so the encoder kernel
# can stream them (BlockSpec index_map = layer id).  MXU weights bf16; biases/LN f32.
# ----------------------------------------------------------------------------
def init_params(key, d_model, nhead, num_layers, num_classes):
    def lin(k, fan_in, fan_out):
        kw, kb = jax.random.split(k)
        lim = 1.0 / math.sqrt(fan_in)
        w = jax.random.uniform(kw, (fan_in, fan_out), jnp.float32, -lim, lim)
        b = jax.random.uniform(kb, (1, fan_out), jnp.float32, -lim, lim)
        return w, b

    keys = jax.random.split(key, 3 + num_layers)
    event_w, event_b = lin(keys[0], EVENT_DIM, d_model)
    time_table = 0.02 * jax.random.normal(keys[1], (MAX_TIME, d_model), jnp.float32)
    arc_w = jax.random.normal(keys[2], (num_classes, d_model), jnp.float32) * \
        math.sqrt(2.0 / (num_classes + d_model))

    wqkv, bqkv, wo, bo, w1, b1, w2, b2 = [], [], [], [], [], [], [], []
    for i in range(num_layers):
        lk = jax.random.split(keys[3 + i], 6)
        wq, bq_ = lin(lk[0], d_model, d_model)
        wk, bk_ = lin(lk[1], d_model, d_model)
        wv, bv_ = lin(lk[2], d_model, d_model)
        wo_i, bo_i = lin(lk[3], d_model, d_model)
        w1_i, b1_i = lin(lk[4], d_model, DIM_FF)
        w2_i, b2_i = lin(lk[5], DIM_FF, d_model)
        wqkv.append(jnp.concatenate([wq, wk, wv], axis=1))
        bqkv.append(jnp.concatenate([bq_, bk_, bv_], axis=1))
        wo.append(wo_i); bo.append(bo_i)
        w1.append(w1_i); b1.append(b1_i)
        w2.append(w2_i); b2.append(b2_i)

    ones = jnp.ones((num_layers, 1, d_model), jnp.float32)
    zeros = jnp.zeros((num_layers, 1, d_model), jnp.float32)
    return dict(
        event_w=event_w.astype(jnp.bfloat16), event_b=event_b,
        time_table=time_table, arc_w=arc_w,
        wqkv=jnp.stack(wqkv).astype(jnp.bfloat16), bqkv=jnp.stack(bqkv),
        wo=jnp.stack(wo).astype(jnp.bfloat16), bo=jnp.stack(bo),
        w1=jnp.stack(w1).astype(jnp.bfloat16), b1=jnp.stack(b1),
        w2=jnp.stack(w2).astype(jnp.bfloat16), b2=jnp.stack(b2),
        ln1g=ones, ln1b=zeros, ln2g=ones, ln2b=zeros,
        nhead=nhead, d_model=d_model, num_layers=num_layers)


# ----------------------------------------------------------------------------
# Forward wrapper (glue in plain JAX, hot path in Pallas)
# ----------------------------------------------------------------------------
def user_id_model_forward(params, event_vecs, time_vecs, labels, mask=None):
    S, B, E = event_vecs.shape
    D = params['d_model']
    H = params['nhead']
    L = params['num_layers']
    C = params['arc_w'].shape[0]

    BT = _pick_batch_tile(B, S)
    NB = B // BT
    vmem = _vmem_limit()

    # batch-major layouts so the batch-tile axis is a leading (unconstrained) block dim
    ev_b = jnp.transpose(event_vecs, (1, 0, 2)).astype(jnp.bfloat16)           # (B, S, E)
    tid_b = jnp.transpose(time_vecs, (1, 0)).astype(jnp.int32).reshape(B, S, 1)  # (B, S, 1)
    if mask is None:
        use_mask = False
        mask_b = jnp.zeros((B, 1, S), jnp.float32)                             # unused in-kernel
    else:
        use_mask = True
        # NOTE: fully-padded rows get uniform attention (not NaN as PyTorch would produce)
        mask_b = jnp.where(mask, -1e9, 0.0).astype(jnp.float32).reshape(B, 1, S)

    kernel = partial(_encoder_kernel, H, S, BT, use_mask)
    features = pl.pallas_call(
        kernel,
        out_shape=jax.ShapeDtypeStruct((B, D), jnp.float32),
        grid=(NB, L),
        in_specs=[
            pl.BlockSpec((BT, S, E), lambda nb, l: (nb, 0, 0)),        # event vecs (bf16)
            pl.BlockSpec((BT, S, 1), lambda nb, l: (nb, 0, 0)),        # time ids (int32)
            pl.BlockSpec((BT, 1, S), lambda nb, l: (nb, 0, 0)),        # additive key-pad mask
            pl.BlockSpec((E, D), lambda nb, l: (0, 0)),                # event W (bf16), resident
            pl.BlockSpec((1, D), lambda nb, l: (0, 0)),                # event bias
            pl.BlockSpec((MAX_TIME, D), lambda nb, l: (0, 0)),         # time-emb table, resident
            pl.BlockSpec((None, D, 3 * D), lambda nb, l: (l, 0, 0)),   # wqkv (bf16)
            pl.BlockSpec((None, 1, 3 * D), lambda nb, l: (l, 0, 0)),   # bqkv
            pl.BlockSpec((None, D, D), lambda nb, l: (l, 0, 0)),       # wo (bf16)
            pl.BlockSpec((None, 1, D), lambda nb, l: (l, 0, 0)),       # bo
            pl.BlockSpec((None, 1, D), lambda nb, l: (l, 0, 0)),       # ln1 gamma
            pl.BlockSpec((None, 1, D), lambda nb, l: (l, 0, 0)),       # ln1 beta
            pl.BlockSpec((None, D, DIM_FF), lambda nb, l: (l, 0, 0)),  # w1 (bf16)
            pl.BlockSpec((None, 1, DIM_FF), lambda nb, l: (l, 0, 0)),  # b1
            pl.BlockSpec((None, DIM_FF, D), lambda nb, l: (l, 0, 0)),  # w2 (bf16)
            pl.BlockSpec((None, 1, D), lambda nb, l: (l, 0, 0)),       # b2
            pl.BlockSpec((None, 1, D), lambda nb, l: (l, 0, 0)),       # ln2 gamma
            pl.BlockSpec((None, 1, D), lambda nb, l: (l, 0, 0)),       # ln2 beta
        ],
        out_specs=pl.BlockSpec((BT, D), lambda nb, l: (nb, 0)),        # last-time-step features only
        scratch_shapes=[pltpu.VMEM((BT * S, D), jnp.float32)],         # resident activations
        compiler_params=pltpu.CompilerParams(
            dimension_semantics=("parallel", "arbitrary"), vmem_limit_bytes=vmem),
    )(ev_b, tid_b, mask_b,
      params['event_w'], params['event_b'], params['time_table'],
      params['wqkv'], params['bqkv'], params['wo'], params['bo'],
      params['ln1g'], params['ln1b'],
      params['w1'], params['b1'], params['w2'], params['b2'],
      params['ln2g'], params['ln2b'])

    # --- ArcFace head: normalize once in the wrapper (hoisted out of the class-tile grid) ---
    fn = features * lax.rsqrt(jnp.sum(features * features, axis=-1, keepdims=True) + 1e-12)
    aw = params['arc_w']
    wn = aw * lax.rsqrt(jnp.sum(aw * aw, axis=-1, keepdims=True) + 1e-12)
    labels2 = labels.reshape(B, 1).astype(jnp.int32)

    TC = _class_tile(C)
    logits = pl.pallas_call(
        _arcface_kernel,
        out_shape=jax.ShapeDtypeStruct((B, C), jnp.float32),
        grid=(C // TC,),
        in_specs=[pl.BlockSpec((B, D), lambda j: (0, 0)),
                  pl.BlockSpec((TC, D), lambda j: (j, 0)),
                  pl.BlockSpec((B, 1), lambda j: (0, 0))],
        out_specs=pl.BlockSpec((B, TC), lambda j: (0, j)),
        compiler_params=pltpu.CompilerParams(
            dimension_semantics=("parallel",), vmem_limit_bytes=vmem),
    )(fn, wn, labels2)

    return logits, features


if __name__ == "__main__":
    d_model, nhead, num_layers, num_classes = 32, 4, 2, 10
    S, B = 8, 2

    key = jax.random.PRNGKey(0)
    k_ev, k_t, k_lab, k_par = jax.random.split(key, 4)
    event_vecs = jax.random.normal(k_ev, (S, B, EVENT_DIM), jnp.float32)
    time_vecs = jax.random.randint(k_t, (S, B), 0, MAX_TIME)
    labels = jax.random.randint(k_lab, (B,), 0, num_classes)

    params = init_params(k_par, d_model, nhead, num_layers, num_classes)

    logits, features = user_id_model_forward(params, event_vecs, time_vecs, labels, mask=None)
    jax.block_until_ready((logits, features))

    assert logits.shape == (B, num_classes), logits.shape
    assert features.shape == (B, d_model), features.shape
    assert bool(jnp.all(jnp.isfinite(logits))) and bool(jnp.all(jnp.isfinite(features)))
    print("KERNEL_OK")
</pallas_src>

<mosaic_0001>
module attributes {stable_mosaic.version = 11 : i64} {
  func.func @_encoder_kernel(%arg0: i32, %arg1: i32, %arg2: memref<2x8x128xbf16, #tpu.memory_space<vmem>>, %arg3: memref<2x8x1xi32, #tpu.memory_space<vmem>>, %arg4: memref<2x1x8xf32, #tpu.memory_space<vmem>>, %arg5: memref<128x32xbf16, #tpu.memory_space<vmem>>, %arg6: memref<1x32xf32, #tpu.memory_space<vmem>>, %arg7: memref<16x32xf32, #tpu.memory_space<vmem>>, %arg8: memref<1x32x96xbf16, #tpu.memory_space<vmem>>, %arg9: memref<1x1x96xf32, #tpu.memory_space<vmem>>, %arg10: memref<1x32x32xbf16, #tpu.memory_space<vmem>>, %arg11: memref<1x1x32xf32, #tpu.memory_space<vmem>>, %arg12: memref<1x1x32xf32, #tpu.memory_space<vmem>>, %arg13: memref<1x1x32xf32, #tpu.memory_space<vmem>>, %arg14: memref<1x32x2048xbf16, #tpu.memory_space<vmem>>, %arg15: memref<1x1x2048xf32, #tpu.memory_space<vmem>>, %arg16: memref<1x2048x32xbf16, #tpu.memory_space<vmem>>, %arg17: memref<1x1x32xf32, #tpu.memory_space<vmem>>, %arg18: memref<1x1x32xf32, #tpu.memory_space<vmem>>, %arg19: memref<1x1x32xf32, #tpu.memory_space<vmem>>, %arg20: memref<2x32xf32, #tpu.memory_space<vmem>>, %arg21: memref<16x32xf32, #tpu.memory_space<vmem>>) attributes {dimension_semantics = [#tpu.dimension_semantics<parallel>, #tpu.dimension_semantics<arbitrary>], iteration_bounds = array<i64: 1, 2>, scalar_prefetch = 0 : i64, scratch_operands = 1 : i64, tpu.core_type = #tpu.core_type<tc>, window_params = [{transform_indices = @transform_0, window_bounds = array<i64: 2, 8, 128>}, {transform_indices = @transform_1, window_bounds = array<i64: 2, 8, 1>}, {transform_indices = @transform_2, window_bounds = array<i64: 2, 1, 8>}, {pipeline_mode = #tpu.pipeline_mode<synchronous>, transform_indices = @transform_3, window_bounds = array<i64: 128, 32>}, {pipeline_mode = #tpu.pipeline_mode<synchronous>, transform_indices = @transform_4, window_bounds = array<i64: 1, 32>}, {pipeline_mode = #tpu.pipeline_mode<synchronous>, transform_indices = @transform_5, window_bounds = array<i64: 16, 32>}, {transform_indices = @transform_6, window_bounds = array<i64: 1, 32, 96>}, {transform_indices = @transform_7, window_bounds = array<i64: 1, 1, 96>}, {transform_indices = @transform_8, window_bounds = array<i64: 1, 32, 32>}, {transform_indices = @transform_9, window_bounds = array<i64: 1, 1, 32>}, {transform_indices = @transform_10, window_bounds = array<i64: 1, 1, 32>}, {transform_indices = @transform_11, window_bounds = array<i64: 1, 1, 32>}, {transform_indices = @transform_12, window_bounds = array<i64: 1, 32, 2048>}, {transform_indices = @transform_13, window_bounds = array<i64: 1, 1, 2048>}, {transform_indices = @transform_14, window_bounds = array<i64: 1, 2048, 32>}, {transform_indices = @transform_15, window_bounds = array<i64: 1, 1, 32>}, {transform_indices = @transform_16, window_bounds = array<i64: 1, 1, 32>}, {transform_indices = @transform_17, window_bounds = array<i64: 1, 1, 32>}, {transform_indices = @transform_18, window_bounds = array<i64: 2, 32>}]} {
    %c0_i32 = arith.constant 0 : i32
    %0 = arith.cmpi eq, %arg1, %c0_i32 : i32
    %1 = arith.extui %0 : i1 to i32
    %c0_i32_0 = arith.constant 0 : i32
    %2 = arith.cmpi ne, %1, %c0_i32_0 : i32
    scf.if %2 {
      %c0_79 = arith.constant 0 : index
      %c0_80 = arith.constant 0 : index
      %c0_81 = arith.constant 0 : index
      %177 = vector.load %arg2[%c0_79, %c0_80, %c0_81] : memref<2x8x128xbf16, #tpu.memory_space<vmem>>, vector<2x8x128xbf16>
      %178 = vector.shape_cast %177 : vector<2x8x128xbf16> to vector<16x128xbf16>
      %c0_82 = arith.constant 0 : index
      %c0_83 = arith.constant 0 : index
      %179 = vector.load %arg5[%c0_82, %c0_83] : memref<128x32xbf16, #tpu.memory_space<vmem>>, vector<128x32xbf16>
      %cst_84 = arith.constant dense<0.000000e+00> : vector<16x32xf32>
      %180 = tpu.matmul %178, %179, %cst_84 {dimension_numbers = #tpu.dot_dimension_numbers<[1], [0], [0], [1], [0, 0, 1, 1], [], []>} : vector<16x128xbf16>, vector<128x32xbf16>, vector<16x32xf32> -> vector<16x32xf32>
      %c0_85 = arith.constant 0 : index
      %c0_86 = arith.constant 0 : index
      %181 = vector.load %arg6[%c0_85, %c0_86] : memref<1x32xf32, #tpu.memory_space<vmem>>, vector<1x32xf32>
      %182 = vector.broadcast %181 : vector<1x32xf32> to vector<16x32xf32>
      %183 = arith.addf %180, %182 : vector<16x32xf32>
      %c0_87 = arith.constant 0 : index
      %c0_88 = arith.constant 0 : index
      %c0_89 = arith.constant 0 : index
      %184 = vector.load %arg3[%c0_87, %c0_88, %c0_89] : memref<2x8x1xi32, #tpu.memory_space<vmem>>, vector<2x8x1xi32>
      %185 = vector.shape_cast %184 : vector<2x8x1xi32> to vector<16x1xi32>
      %186 = tpu.iota {dimensions = array<i32: 1>} : vector<16x16xi32>
      %187 = vector.broadcast %185 : vector<16x1xi32> to vector<16x16xi32>
      %188 = arith.cmpi eq, %187, %186 : vector<16x16xi32>
      %189 = arith.extui %188 : vector<16x16xi1> to vector<16x16xi32>
      %190 = arith.sitofp %189 : vector<16x16xi32> to vector<16x16xf32>
      %c0_90 = arith.constant 0 : index
      %c0_91 = arith.constant 0 : index
      %191 = vector.load %arg7[%c0_90, %c0_91] : memref<16x32xf32, #tpu.memory_space<vmem>>, vector<16x32xf32>
      %cst_92 = arith.constant dense<0.000000e+00> : vector<16x32xf32>
      %192 = tpu.matmul %190, %191, %cst_92 {dimension_numbers = #tpu.dot_dimension_numbers<[1], [0], [0], [1], [0, 0, 1, 1], [], []>} : vector<16x16xf32>, vector<16x32xf32>, vector<16x32xf32> -> vector<16x32xf32>
      %193 = arith.addf %183, %192 : vector<16x32xf32>
      %c0_93 = arith.constant 0 : index
      %c0_94 = arith.constant 0 : index
      %194 = vector.load %arg21[%c0_93, %c0_94] : memref<16x32xf32, #tpu.memory_space<vmem>>, vector<16x32xf32>
      tpu.vector_store %arg21[%c0_93, %c0_94], %193 {strides = array<i32>} : memref<16x32xf32, #tpu.memory_space<vmem>>, vector<16x32xf32>,
    } else {
    }
    %c0 = arith.constant 0 : index
    %c0_1 = arith.constant 0 : index
    %3 = vector.load %arg21[%c0, %c0_1] : memref<16x32xf32, #tpu.memory_space<vmem>>, vector<16x32xf32>
    %4 = arith.truncf %3 : vector<16x32xf32> to vector<16x32xbf16>
    %c0_2 = arith.constant 0 : index
    %c0_3 = arith.constant 0 : index
    %c0_4 = arith.constant 0 : index
    %5 = vector.load %arg8[%c0_2, %c0_3, %c0_4] : memref<1x32x96xbf16, #tpu.memory_space<vmem>>, vector<1x32x96xbf16>
    %6 = vector.shape_cast %5 : vector<1x32x96xbf16> to vector<32x96xbf16>
    %cst = arith.constant dense<0.000000e+00> : vector<16x96xf32>
    %7 = tpu.matmul %4, %6, %cst {dimension_numbers = #tpu.dot_dimension_numbers<[1], [0], [0], [1], [0, 0, 1, 1], [], []>} : vector<16x32xbf16>, vector<32x96xbf16>, vector<16x96xf32> -> vector<16x96xf32>
    %c0_5 = arith.constant 0 : index
    %c0_6 = arith.constant 0 : index
    %c0_7 = arith.constant 0 : index
    %8 = vector.load %arg9[%c0_5, %c0_6, %c0_7] : memref<1x1x96xf32, #tpu.memory_space<vmem>>, vector<1x1x96xf32>
    %9 = vector.shape_cast %8 : vector<1x1x96xf32> to vector<1x96xf32>
    %10 = vector.broadcast %9 : vector<1x96xf32> to vector<16x96xf32>
    %11 = arith.addf %7, %10 : vector<16x96xf32>
    %12 = arith.truncf %11 : vector<16x96xf32> to vector<16x96xbf16>
    %13 = vector.shape_cast %12 : vector<16x96xbf16> to vector<2x8x96xbf16>
    %14 = vector.extract_strided_slice %13 {offsets = [0, 0, 0], sizes = [2, 8, 8], strides = [1, 1, 1]} : vector<2x8x96xbf16> to vector<2x8x8xbf16>
    %15 = vector.extract_strided_slice %13 {offsets = [0, 0, 32], sizes = [2, 8, 8], strides = [1, 1, 1]} : vector<2x8x96xbf16> to vector<2x8x8xbf16>
    %16 = vector.extract_strided_slice %13 {offsets = [0, 0, 64], sizes = [2, 8, 8], strides = [1, 1, 1]} : vector<2x8x96xbf16> to vector<2x8x8xbf16>
    "tpu.trace_start"() <{level = 10 : i32, message = "bqd,bkd->bqk"}> : () -> ()
    %cst_8 = arith.constant dense<0.000000e+00> : vector<2x8x8xf32>
    %17 = tpu.matmul %14, %15, %cst_8 {dimension_numbers = #tpu.dot_dimension_numbers<[2], [2], [1], [1], [0, 0, 0, 1, 1, 1], [0], [0]>} : vector<2x8x8xbf16>, vector<2x8x8xbf16>, vector<2x8x8xf32> -> vector<2x8x8xf32>
    "tpu.trace_stop"() : () -> ()
    %cst_9 = arith.constant 0.353553385 : f32
    %18 = vector.broadcast %cst_9 : f32 to vector<2x8x8xf32>
    %19 = arith.mulf %17, %18 : vector<2x8x8xf32>
    %cst_10 = arith.constant dense<0xFF800000> : vector<2x8xf32>
    %20 = vector.multi_reduction <maximumf>, %19, %cst_10 [2] : vector<2x8x8xf32> to vector<2x8xf32>
    %21 = vector.shape_cast %20 : vector<2x8xf32> to vector<2x8x1xf32>
    %22 = vector.broadcast %21 : vector<2x8x1xf32> to vector<2x8x8xf32>
    %23 = arith.subf %19, %22 : vector<2x8x8xf32>
    %24 = math.exp %23 : vector<2x8x8xf32>
    %cst_11 = arith.constant dense<0.000000e+00> : vector<2x8xf32>
    %25 = vector.multi_reduction <add>, %24, %cst_11 [2] : vector<2x8x8xf32> to vector<2x8xf32>
    %26 = vector.shape_cast %25 : vector<2x8xf32> to vector<2x8x1xf32>
    %27 = tpu.reciprocal %26 {approx = true} : vector<2x8x1xf32> -> vector<2x8x1xf32>
    %28 = vector.broadcast %27 : vector<2x8x1xf32> to vector<2x8x8xf32>
    %29 = arith.mulf %24, %28 : vector<2x8x8xf32>
    %30 = arith.truncf %29 : vector<2x8x8xf32> to vector<2x8x8xbf16>
    "tpu.trace_start"() <{level = 10 : i32, message = "bqk,bkd->bqd"}> : () -> ()
    %cst_12 = arith.constant dense<0.000000e+00> : vector<2x8x8xf32>
    %31 = tpu.matmul %30, %16, %cst_12 {dimension_numbers = #tpu.dot_dimension_numbers<[2], [1], [1], [2], [0, 0, 0, 1, 1, 2], [0], [0]>} : vector<2x8x8xbf16>, vector<2x8x8xbf16>, vector<2x8x8xf32> -> vector<2x8x8xf32>
    "tpu.trace_stop"() : () -> ()
    %32 = arith.truncf %31 : vector<2x8x8xf32> to vector<2x8x8xbf16>
    %33 = vector.extract_strided_slice %13 {offsets = [0, 0, 8], sizes = [2, 8, 8], strides = [1, 1, 1]} : vector<2x8x96xbf16> to vector<2x8x8xbf16>
    %34 = vector.extract_strided_slice %13 {offsets = [0, 0, 40], sizes = [2, 8, 8], strides = [1, 1, 1]} : vector<2x8x96xbf16> to vector<2x8x8xbf16>
    %35 = vector.extract_strided_slice %13 {offsets = [0, 0, 72], sizes = [2, 8, 8], strides = [1, 1, 1]} : vector<2x8x96xbf16> to vector<2x8x8xbf16>
    "tpu.trace_start"() <{level = 10 : i32, message = "bqd,bkd->bqk"}> : () -> ()
    %cst_13 = arith.constant dense<0.000000e+00> : vector<2x8x8xf32>
    %36 = tpu.matmul %33, %34, %cst_13 {dimension_numbers = #tpu.dot_dimension_numbers<[2], [2], [1], [1], [0, 0, 0, 1, 1, 1], [0], [0]>} : vector<2x8x8xbf16>, vector<2x8x8xbf16>, vector<2x8x8xf32> -> vector<2x8x8xf32>
    "tpu.trace_stop"() : () -> ()
    %cst_14 = arith.constant 0.353553385 : f32
    %37 = vector.broadcast %cst_14 : f32 to vector<2x8x8xf32>
    %38 = arith.mulf %36, %37 : vector<2x8x8xf32>
    %cst_15 = arith.constant dense<0xFF800000> : vector<2x8xf32>
    %39 = vector.multi_reduction <maximumf>, %38, %cst_15 [2] : vector<2x8x8xf32> to vector<2x8xf32>
    %40 = vector.shape_cast %39 : vector<2x8xf32> to vector<2x8x1xf32>
    %41 = vector.broadcast %40 : vector<2x8x1xf32> to vector<2x8x8xf32>
    %42 = arith.subf %38, %41 : vector<2x8x8xf32>
    %43 = math.exp %42 : vector<2x8x8xf32>
    %cst_16 = arith.constant dense<0.000000e+00> : vector<2x8xf32>
    %44 = vector.multi_reduction <add>, %43, %cst_16 [2] : vector<2x8x8xf32> to vector<2x8xf32>
    %45 = vector.shape_cast %44 : vector<2x8xf32> to vector<2x8x1xf32>
    %46 = tpu.reciprocal %45 {approx = true} : vector<2x8x1xf32> -> vector<2x8x1xf32>
    %47 = vector.broadcast %46 : vector<2x8x1xf32> to vector<2x8x8xf32>
    %48 = arith.mulf %43, %47 : vector<2x8x8xf32>
    %49 = arith.truncf %48 : vector<2x8x8xf32> to vector<2x8x8xbf16>
    "tpu.trace_start"() <{level = 10 : i32, message = "bqk,bkd->bqd"}> : () -> ()
    %cst_17 = arith.constant dense<0.000000e+00> : vector<2x8x8xf32>
    %50 = tpu.matmul %49, %35, %cst_17 {dimension_numbers = #tpu.dot_dimension_numbers<[2], [1], [1], [2], [0, 0, 0, 1, 1, 2], [0], [0]>} : vector<2x8x8xbf16>, vector<2x8x8xbf16>, vector<2x8x8xf32> -> vector<2x8x8xf32>
    "tpu.trace_stop"() : () -> ()
    %51 = arith.truncf %50 : vector<2x8x8xf32> to vector<2x8x8xbf16>
    %52 = vector.extract_strided_slice %13 {offsets = [0, 0, 16], sizes = [2, 8, 8], strides = [1, 1, 1]} : vector<2x8x96xbf16> to vector<2x8x8xbf16>
    %53 = vector.extract_strided_slice %13 {offsets = [0, 0, 48], sizes = [2, 8, 8], strides = [1, 1, 1]} : vector<2x8x96xbf16> to vector<2x8x8xbf16>
    %54 = vector.extract_strided_slice %13 {offsets = [0, 0, 80], sizes = [2, 8, 8], strides = [1, 1, 1]} : vector<2x8x96xbf16> to vector<2x8x8xbf16>
    "tpu.trace_start"() <{level = 10 : i32, message = "bqd,bkd->bqk"}> : () -> ()
    %cst_18 = arith.constant dense<0.000000e+00> : vector<2x8x8xf32>
    %55 = tpu.matmul %52, %53, %cst_18 {dimension_numbers = #tpu.dot_dimension_numbers<[2], [2], [1], [1], [0, 0, 0, 1, 1, 1], [0], [0]>} : vector<2x8x8xbf16>, vector<2x8x8xbf16>, vector<2x8x8xf32> -> vector<2x8x8xf32>
    "tpu.trace_stop"() : () -> ()
    %cst_19 = arith.constant 0.353553385 : f32
    %56 = vector.broadcast %cst_19 : f32 to vector<2x8x8xf32>
    %57 = arith.mulf %55, %56 : vector<2x8x8xf32>
    %cst_20 = arith.constant dense<0xFF800000> : vector<2x8xf32>
    %58 = vector.multi_reduction <maximumf>, %57, %cst_20 [2] : vector<2x8x8xf32> to vector<2x8xf32>
    %59 = vector.shape_cast %58 : vector<2x8xf32> to vector<2x8x1xf32>
    %60 = vector.broadcast %59 : vector<2x8x1xf32> to vector<2x8x8xf32>
    %61 = arith.subf %57, %60 : vector<2x8x8xf32>
    %62 = math.exp %61 : vector<2x8x8xf32>
    %cst_21 = arith.constant dense<0.000000e+00> : vector<2x8xf32>
    %63 = vector.multi_reduction <add>, %62, %cst_21 [2] : vector<2x8x8xf32> to vector<2x8xf32>
    %64 = vector.shape_cast %63 : vector<2x8xf32> to vector<2x8x1xf32>
    %65 = tpu.reciprocal %64 {approx = true} : vector<2x8x1xf32> -> vector<2x8x1xf32>
    %66 = vector.broadcast %65 : vector<2x8x1xf32> to vector<2x8x8xf32>
    %67 = arith.mulf %62, %66 : vector<2x8x8xf32>
    %68 = arith.truncf %67 : vector<2x8x8xf32> to vector<2x8x8xbf16>
    "tpu.trace_start"() <{level = 10 : i32, message = "bqk,bkd->bqd"}> : () -> ()
    %cst_22 = arith.constant dense<0.000000e+00> : vector<2x8x8xf32>
    %69 = tpu.matmul %68, %54, %cst_22 {dimension_numbers = #tpu.dot_dimension_numbers<[2], [1], [1], [2], [0, 0, 0, 1, 1, 2], [0], [0]>} : vector<2x8x8xbf16>, vector<2x8x8xbf16>, vector<2x8x8xf32> -> vector<2x8x8xf32>
    "tpu.trace_stop"() : () -> ()
    %70 = arith.truncf %69 : vector<2x8x8xf32> to vector<2x8x8xbf16>
    %71 = vector.extract_strided_slice %13 {offsets = [0, 0, 24], sizes = [2, 8, 8], strides = [1, 1, 1]} : vector<2x8x96xbf16> to vector<2x8x8xbf16>
    %72 = vector.extract_strided_slice %13 {offsets = [0, 0, 56], sizes = [2, 8, 8], strides = [1, 1, 1]} : vector<2x8x96xbf16> to vector<2x8x8xbf16>
    %73 = vector.extract_strided_slice %13 {offsets = [0, 0, 88], sizes = [2, 8, 8], strides = [1, 1, 1]} : vector<2x8x96xbf16> to vector<2x8x8xbf16>
    "tpu.trace_start"() <{level = 10 : i32, message = "bqd,bkd->bqk"}> : () -> ()
    %cst_23 = arith.constant dense<0.000000e+00> : vector<2x8x8xf32>
    %74 = tpu.matmul %71, %72, %cst_23 {dimension_numbers = #tpu.dot_dimension_numbers<[2], [2], [1], [1], [0, 0, 0, 1, 1, 1], [0], [0]>} : vector<2x8x8xbf16>, vector<2x8x8xbf16>, vector<2x8x8xf32> -> vector<2x8x8xf32>
    "tpu.trace_stop"() : () -> ()
    %cst_24 = arith.constant 0.353553385 : f32
    %75 = vector.broadcast %cst_24 : f32 to vector<2x8x8xf32>
    %76 = arith.mulf %74, %75 : vector<2x8x8xf32>
    %cst_25 = arith.constant dense<0xFF800000> : vector<2x8xf32>
    %77 = vector.multi_reduction <maximumf>, %76, %cst_25 [2] : vector<2x8x8xf32> to vector<2x8xf32>
    %78 = vector.shape_cast %77 : vector<2x8xf32> to vector<2x8x1xf32>
    %79 = vector.broadcast %78 : vector<2x8x1xf32> to vector<2x8x8xf32>
    %80 = arith.subf %76, %79 : vector<2x8x8xf32>
    %81 = math.exp %80 : vector<2x8x8xf32>
    %cst_26 = arith.constant dense<0.000000e+00> : vector<2x8xf32>
    %82 = vector.multi_reduction <add>, %81, %cst_26 [2] : vector<2x8x8xf32> to vector<2x8xf32>
    %83 = vector.shape_cast %82 : vector<2x8xf32> to vector<2x8x1xf32>
    %84 = tpu.reciprocal %83 {approx = true} : vector<2x8x1xf32> -> vector<2x8x1xf32>
    %85 = vector.broadcast %84 : vector<2x8x1xf32> to vector<2x8x8xf32>
    %86 = arith.mulf %81, %85 : vector<2x8x8xf32>
    %87 = arith.truncf %86 : vector<2x8x8xf32> to vector<2x8x8xbf16>
    "tpu.trace_start"() <{level = 10 : i32, message = "bqk,bkd->bqd"}> : () -> ()
    %cst_27 = arith.constant dense<0.000000e+00> : vector<2x8x8xf32>
    %88 = tpu.matmul %87, %73, %cst_27 {dimension_numbers = #tpu.dot_dimension_numbers<[2], [1], [1], [2], [0, 0, 0, 1, 1, 2], [0], [0]>} : vector<2x8x8xbf16>, vector<2x8x8xbf16>, vector<2x8x8xf32> -> vector<2x8x8xf32>
    "tpu.trace_stop"() : () -> ()
    %89 = arith.truncf %88 : vector<2x8x8xf32> to vector<2x8x8xbf16>
    %90 = tpu.concatenate %32, %51, %70, %89 in 2 : vector<2x8x8xbf16>, vector<2x8x8xbf16>, vector<2x8x8xbf16>, vector<2x8x8xbf16> -> vector<2x8x32xbf16>
    %91 = vector.shape_cast %90 : vector<2x8x32xbf16> to vector<16x32xbf16>
    %c0_28 = arith.constant 0 : index
    %c0_29 = arith.constant 0 : index
    %c0_30 = arith.constant 0 : index
    %92 = vector.load %arg10[%c0_28, %c0_29, %c0_30] : memref<1x32x32xbf16, #tpu.memory_space<vmem>>, vector<1x32x32xbf16>
    %93 = vector.shape_cast %92 : vector<1x32x32xbf16> to vector<32x32xbf16>
    %cst_31 = arith.constant dense<0.000000e+00> : vector<16x32xf32>
    %94 = tpu.matmul %91, %93, %cst_31 {dimension_numbers = #tpu.dot_dimension_numbers<[1], [0], [0], [1], [0, 0, 1, 1], [], []>} : vector<16x32xbf16>, vector<32x32xbf16>, vector<16x32xf32> -> vector<16x32xf32>
    %c0_32 = arith.constant 0 : index
    %c0_33 = arith.constant 0 : index
    %c0_34 = arith.constant 0 : index
    %95 = vector.load %arg11[%c0_32, %c0_33, %c0_34] : memref<1x1x32xf32, #tpu.memory_space<vmem>>, vector<1x1x32xf32>
    %96 = vector.shape_cast %95 : vector<1x1x32xf32> to vector<1x32xf32>
    %97 = vector.broadcast %96 : vector<1x32xf32> to vector<16x32xf32>
    %98 = arith.addf %94, %97 : vector<16x32xf32>
    %99 = arith.addf %3, %98 : vector<16x32xf32>
    %c0_35 = arith.constant 0 : index
    %c0_36 = arith.constant 0 : index
    %c0_37 = arith.constant 0 : index
    %100 = vector.load %arg12[%c0_35, %c0_36, %c0_37] : memref<1x1x32xf32, #tpu.memory_space<vmem>>, vector<1x1x32xf32>
    %101 = vector.shape_cast %100 : vector<1x1x32xf32> to vector<1x32xf32>
    %c0_38 = arith.constant 0 : index
    %c0_39 = arith.constant 0 : index
    %c0_40 = arith.constant 0 : index
    %102 = vector.load %arg13[%c0_38, %c0_39, %c0_40] : memref<1x1x32xf32, #tpu.memory_space<vmem>>, vector<1x1x32xf32>
    %103 = vector.shape_cast %102 : vector<1x1x32xf32> to vector<1x32xf32>
    %cst_41 = arith.constant dense<0.000000e+00> : vector<16xf32>
    %104 = vector.multi_reduction <add>, %99, %cst_41 [1] : vector<16x32xf32> to vector<16xf32>
    %105 = vector.shape_cast %104 : vector<16xf32> to vector<16x1xf32>
    %cst_42 = arith.constant 3.200000e+01 : f32
    %106 = vector.broadcast %cst_42 : f32 to vector<16x1xf32>
    %107 = arith.divf %105, %106 : vector<16x1xf32>
    %108 = vector.broadcast %107 : vector<16x1xf32> to vector<16x32xf32>
    %109 = arith.subf %99, %108 : vector<16x32xf32>
    %110 = arith.mulf %109, %109 : vector<16x32xf32>
    %cst_43 = arith.constant dense<0.000000e+00> : vector<16xf32>
    %111 = vector.multi_reduction <add>, %110, %cst_43 [1] : vector<16x32xf32> to vector<16xf32>
    %112 = vector.shape_cast %111 : vector<16xf32> to vector<16x1xf32>
    %cst_44 = arith.constant 3.200000e+01 : f32
    %113 = vector.broadcast %cst_44 : f32 to vector<16x1xf32>
    %114 = arith.divf %112, %113 : vector<16x1xf32>
    %cst_45 = arith.constant 9.99999974E-6 : f32
    %115 = vector.broadcast %cst_45 : f32 to vector<16x1xf32>
    %116 = arith.addf %114, %115 : vector<16x1xf32>
    %117 = math.rsqrt %116 : vector<16x1xf32>
    %118 = vector.broadcast %117 : vector<16x1xf32> to vector<16x32xf32>
    %119 = arith.mulf %109, %118 : vector<16x32xf32>
    %120 = vector.broadcast %101 : vector<1x32xf32> to vector<16x32xf32>
    %121 = arith.mulf %119, %120 : vector<16x32xf32>
    %122 = vector.broadcast %103 : vector<1x32xf32> to vector<16x32xf32>
    %123 = arith.addf %121, %122 : vector<16x32xf32>
    %c0_46 = arith.constant 0 : index
    %c0_47 = arith.constant 0 : index
    %124 = vector.load %arg21[%c0_46, %c0_47] : memref<16x32xf32, #tpu.memory_space<vmem>>, vector<16x32xf32>
    tpu.vector_store %arg21[%c0_46, %c0_47], %123 {strides = array<i32>} : memref<16x32xf32, #tpu.memory_space<vmem>>, vector<16x32xf32>,
    %c0_i32_48 = arith.constant 0 : i32
    %c16_i32 = arith.constant 16 : i32
    %125 = arith.muli %c0_i32_48, %c16_i32 : i32
    %126 = tpu.assume_multiple %125, 16 : i32
    %127 = arith.index_cast %126 : i32 to index
    %c0_49 = arith.constant 0 : index
    %128 = vector.load %arg21[%127, %c0_49] : memref<16x32xf32, #tpu.memory_space<vmem>>, vector<16x32xf32>
    %129 = arith.truncf %128 : vector<16x32xf32> to vector<16x32xbf16>
    %c0_50 = arith.constant 0 : index
    %c0_51 = arith.constant 0 : index
    %c0_52 = arith.constant 0 : index
    %130 = vector.load %arg14[%c0_50, %c0_51, %c0_52] : memref<1x32x2048xbf16, #tpu.memory_space<vmem>>, vector<1x32x2048xbf16>
    %131 = vector.shape_cast %130 : vector<1x32x2048xbf16> to vector<32x2048xbf16>
    %cst_53 = arith.constant dense<0.000000e+00> : vector<16x2048xf32>
    %132 = tpu.matmul %129, %131, %cst_53 {dimension_numbers = #tpu.dot_dimension_numbers<[1], [0], [0], [1], [0, 0, 1, 1], [], []>} : vector<16x32xbf16>, vector<32x2048xbf16>, vector<16x2048xf32> -> vector<16x2048xf32>
    %c0_54 = arith.constant 0 : index
    %c0_55 = arith.constant 0 : index
    %c0_56 = arith.constant 0 : index
    %133 = vector.load %arg15[%c0_54, %c0_55, %c0_56] : memref<1x1x2048xf32, #tpu.memory_space<vmem>>, vector<1x1x2048xf32>
    %134 = vector.shape_cast %133 : vector<1x1x2048xf32> to vector<1x2048xf32>
    %135 = vector.broadcast %134 : vector<1x2048xf32> to vector<16x2048xf32>
    %136 = arith.addf %132, %135 : vector<16x2048xf32>
    %cst_57 = arith.constant 0.000000e+00 : f32
    %137 = vector.broadcast %cst_57 : f32 to vector<16x2048xf32>
    %138 = arith.maximumf %136, %137 : vector<16x2048xf32>
    %139 = arith.truncf %138 : vector<16x2048xf32> to vector<16x2048xbf16>
    %c0_58 = arith.constant 0 : index
    %c0_59 = arith.constant 0 : index
    %c0_60 = arith.constant 0 : index
    %140 = vector.load %arg16[%c0_58, %c0_59, %c0_60] : memref<1x2048x32xbf16, #tpu.memory_space<vmem>>, vector<1x2048x32xbf16>
    %141 = vector.shape_cast %140 : vector<1x2048x32xbf16> to vector<2048x32xbf16>
    %cst_61 = arith.constant dense<0.000000e+00> : vector<16x32xf32>
    %142 = tpu.matmul %139, %141, %cst_61 {dimension_numbers = #tpu.dot_dimension_numbers<[1], [0], [0], [1], [0, 0, 1, 1], [], []>} : vector<16x2048xbf16>, vector<2048x32xbf16>, vector<16x32xf32> -> vector<16x32xf32>
    %c0_62 = arith.constant 0 : index
    %c0_63 = arith.constant 0 : index
    %c0_64 = arith.constant 0 : index
    %143 = vector.load %arg17[%c0_62, %c0_63, %c0_64] : memref<1x1x32xf32, #tpu.memory_space<vmem>>, vector<1x1x32xf32>
    %144 = vector.shape_cast %143 : vector<1x1x32xf32> to vector<1x32xf32>
    %145 = vector.broadcast %144 : vector<1x32xf32> to vector<16x32xf32>
    %146 = arith.addf %142, %145 : vector<16x32xf32>
    %147 = arith.addf %128, %146 : vector<16x32xf32>
    %c0_65 = arith.constant 0 : index
    %c0_66 = arith.constant 0 : index
    %c0_67 = arith.constant 0 : index
    %148 = vector.load %arg18[%c0_65, %c0_66, %c0_67] : memref<1x1x32xf32, #tpu.memory_space<vmem>>, vector<1x1x32xf32>
    %149 = vector.shape_cast %148 : vector<1x1x32xf32> to vector<1x32xf32>
    %c0_68 = arith.constant 0 : index
    %c0_69 = arith.constant 0 : index
    %c0_70 = arith.constant 0 : index
    %150 = vector.load %arg19[%c0_68, %c0_69, %c0_70] : memref<1x1x32xf32, #tpu.memory_space<vmem>>, vector<1x1x32xf32>
    %151 = vector.shape_cast %150 : vector<1x1x32xf32> to vector<1x32xf32>
    %cst_71 = arith.constant dense<0.000000e+00> : vector<16xf32>
    %152 = vector.multi_reduction <add>, %147, %cst_71 [1] : vector<16x32xf32> to vector<16xf32>
    %153 = vector.shape_cast %152 : vector<16xf32> to vector<16x1xf32>
    %cst_72 = arith.constant 3.200000e+01 : f32
    %154 = vector.broadcast %cst_72 : f32 to vector<16x1xf32>
    %155 = arith.divf %153, %154 : vector<16x1xf32>
    %156 = vector.broadcast %155 : vector<16x1xf32> to vector<16x32xf32>
    %157 = arith.subf %147, %156 : vector<16x32xf32>
    %158 = arith.mulf %157, %157 : vector<16x32xf32>
    %cst_73 = arith.constant dense<0.000000e+00> : vector<16xf32>
    %159 = vector.multi_reduction <add>, %158, %cst_73 [1] : vector<16x32xf32> to vector<16xf32>
    %160 = vector.shape_cast %159 : vector<16xf32> to vector<16x1xf32>
    %cst_74 = arith.constant 3.200000e+01 : f32
    %161 = vector.broadcast %cst_74 : f32 to vector<16x1xf32>
    %162 = arith.divf %160, %161 : vector<16x1xf32>
    %cst_75 = arith.constant 9.99999974E-6 : f32
    %163 = vector.broadcast %cst_75 : f32 to vector<16x1xf32>
    %164 = arith.addf %162, %163 : vector<16x1xf32>
    %165 = math.rsqrt %164 : vector<16x1xf32>
    %166 = vector.broadcast %165 : vector<16x1xf32> to vector<16x32xf32>
    %167 = arith.mulf %157, %166 : vector<16x32xf32>
    %168 = vector.broadcast %149 : vector<1x32xf32> to vector<16x32xf32>
    %169 = arith.mulf %167, %168 : vector<16x32xf32>
    %170 = vector.broadcast %151 : vector<1x32xf32> to vector<16x32xf32>
    %171 = arith.addf %169, %170 : vector<16x32xf32>
    %172 = arith.index_cast %126 : i32 to index
    %c0_76 = arith.constant 0 : index
    %173 = vector.load %arg21[%172, %c0_76] : memref<16x32xf32, #tpu.memory_space<vmem>>, vector<16x32xf32>
    tpu.vector_store %arg21[%172, %c0_76], %171 {strides = array<i32>} : memref<16x32xf32, #tpu.memory_space<vmem>>, vector<16x32xf32>,
    %c1_i32 = arith.constant 1 : i32
    %c1_i32_77 = arith.constant 1 : i32
    %174 = arith.cmpi eq, %arg1, %c1_i32_77 : i32
    %175 = arith.extui %174 : i1 to i32
    %c0_i32_78 = arith.constant 0 : i32
    %176 = arith.cmpi ne, %175, %c0_i32_78 : i32
    scf.if %176 {
      %c0_79 = arith.constant 0 : index
      %c0_80 = arith.constant 0 : index
      %177 = vector.load %arg21[%c0_79, %c0_80] : memref<16x32xf32, #tpu.memory_space<vmem>>, vector<16x32xf32>
      %178 = vector.shape_cast %177 : vector<16x32xf32> to vector<2x8x32xf32>
      %179 = vector.extract_strided_slice %178 {offsets = [0, 7, 0], sizes = [2, 1, 32], strides = [1, 1, 1]} : vector<2x8x32xf32> to vector<2x1x32xf32>
      %180 = vector.shape_cast %179 : vector<2x1x32xf32> to vector<2x32xf32>
      %c0_81 = arith.constant 0 : index
      %c0_82 = arith.constant 0 : index
      %181 = vector.load %arg20[%c0_81, %c0_82] : memref<2x32xf32, #tpu.memory_space<vmem>>, vector<2x32xf32>
      tpu.vector_store %arg20[%c0_81, %c0_82], %180 {strides = array<i32>} : memref<2x32xf32, #tpu.memory_space<vmem>>, vector<2x32xf32>,
    } else {
    }
    return
  }
  func.func @transform_0(%arg0: i32, %arg1: i32) -> (i32, i32, i32) {
    %c0_i32 = arith.constant 0 : i32
    %c0_i32_0 = arith.constant 0 : i32
    %c0_i32_1 = arith.constant 0 : i32
    return %arg0, %c0_i32, %c0_i32_0 : i32, i32, i32
  }
  func.func @transform_1(%arg0: i32, %arg1: i32) -> (i32, i32, i32) {
    %c0_i32 = arith.constant 0 : i32
    %c0_i32_0 = arith.constant 0 : i32
    %c0_i32_1 = arith.constant 0 : i32
    return %arg0, %c0_i32, %c0_i32_0 : i32, i32, i32
  }
  func.func @transform_2(%arg0: i32, %arg1: i32) -> (i32, i32, i32) {
    %c0_i32 = arith.constant 0 : i32
    %c0_i32_0 = arith.constant 0 : i32
    %c0_i32_1 = arith.constant 0 : i32
    return %arg0, %c0_i32, %c0_i32_0 : i32, i32, i32
  }
  func.func @transform_3(%arg0: i32, %arg1: i32) -> (i32, i32) {
    %c0_i32 = arith.constant 0 : i32
    %c0_i32_0 = arith.constant 0 : i32
    %c0_i32_1 = arith.constant 0 : i32
    return %c0_i32, %c0_i32_0 : i32, i32
  }
  func.func @transform_4(%arg0: i32, %arg1: i32) -> (i32, i32) {
    %c0_i32 = arith.constant 0 : i32
    %c0_i32_0 = arith.constant 0 : i32
    %c0_i32_1 = arith.constant 0 : i32
    return %c0_i32, %c0_i32_0 : i32, i32
  }
  func.func @transform_5(%arg0: i32, %arg1: i32) -> (i32, i32) {
    %c0_i32 = arith.constant 0 : i32
    %c0_i32_0 = arith.constant 0 : i32
    %c0_i32_1 = arith.constant 0 : i32
    return %c0_i32, %c0_i32_0 : i32, i32
  }
  func.func @transform_6(%arg0: i32, %arg1: i32) -> (i32, i32, i32) {
    %c0_i32 = arith.constant 0 : i32
    %c0_i32_0 = arith.constant 0 : i32
    %c0_i32_1 = arith.constant 0 : i32
    return %arg1, %c0_i32, %c0_i32_0 : i32, i32, i32
  }
  func.func @transform_7(%arg0: i32, %arg1: i32) -> (i32, i32, i32) {
    %c0_i32 = arith.constant 0 : i32
    %c0_i32_0 = arith.constant 0 : i32
    %c0_i32_1 = arith.constant 0 : i32
    return %arg1, %c0_i32, %c0_i32_0 : i32, i32, i32
  }
  func.func @transform_8(%arg0: i32, %arg1: i32) -> (i32, i32, i32) {
    %c0_i32 = arith.constant 0 : i32
    %c0_i32_0 = arith.constant 0 : i32
    %c0_i32_1 = arith.constant 0 : i32
    return %arg1, %c0_i32, %c0_i32_0 : i32, i32, i32
  }
  func.func @transform_9(%arg0: i32, %arg1: i32) -> (i32, i32, i32) {
    %c0_i32 = arith.constant 0 : i32
    %c0_i32_0 = arith.constant 0 : i32
    %c0_i32_1 = arith.constant 0 : i32
    return %arg1, %c0_i32, %c0_i32_0 : i32, i32, i32
  }
  func.func @transform_10(%arg0: i32, %arg1: i32) -> (i32, i32, i32) {
    %c0_i32 = arith.constant 0 : i32
    %c0_i32_0 = arith.constant 0 : i32
    %c0_i32_1 = arith.constant 0 : i32
    return %arg1, %c0_i32, %c0_i32_0 : i32, i32, i32
  }
  func.func @transform_11(%arg0: i32, %arg1: i32) -> (i32, i32, i32) {
    %c0_i32 = arith.constant 0 : i32
    %c0_i32_0 = arith.constant 0 : i32
    %c0_i32_1 = arith.constant 0 : i32
    return %arg1, %c0_i32, %c0_i32_0 : i32, i32, i32
  }
  func.func @transform_12(%arg0: i32, %arg1: i32) -> (i32, i32, i32) {
    %c0_i32 = arith.constant 0 : i32
    %c0_i32_0 = arith.constant 0 : i32
    %c0_i32_1 = arith.constant 0 : i32
    return %arg1, %c0_i32, %c0_i32_0 : i32, i32, i32
  }
  func.func @transform_13(%arg0: i32, %arg1: i32) -> (i32, i32, i32) {
    %c0_i32 = arith.constant 0 : i32
    %c0_i32_0 = arith.constant 0 : i32
    %c0_i32_1 = arith.constant 0 : i32
    return %arg1, %c0_i32, %c0_i32_0 : i32, i32, i32
  }
  func.func @transform_14(%arg0: i32, %arg1: i32) -> (i32, i32, i32) {
    %c0_i32 = arith.constant 0 : i32
    %c0_i32_0 = arith.constant 0 : i32
    %c0_i32_1 = arith.constant 0 : i32
    return %arg1, %c0_i32, %c0_i32_0 : i32, i32, i32
  }
  func.func @transform_15(%arg0: i32, %arg1: i32) -> (i32, i32, i32) {
    %c0_i32 = arith.constant 0 : i32
    %c0_i32_0 = arith.constant 0 : i32
    %c0_i32_1 = arith.constant 0 : i32
    return %arg1, %c0_i32, %c0_i32_0 : i32, i32, i32
  }
  func.func @transform_16(%arg0: i32, %arg1: i32) -> (i32, i32, i32) {
    %c0_i32 = arith.constant 0 : i32
    %c0_i32_0 = arith.constant 0 : i32
    %c0_i32_1 = arith.constant 0 : i32
    return %arg1, %c0_i32, %c0_i32_0 : i32, i32, i32
  }
  func.func @transform_17(%arg0: i32, %arg1: i32) -> (i32, i32, i32) {
    %c0_i32 = arith.constant 0 : i32
    %c0_i32_0 = arith.constant 0 : i32
    %c0_i32_1 = arith.constant 0 : i32
    return %arg1, %c0_i32, %c0_i32_0 : i32, i32, i32
  }
  func.func @transform_18(%arg0: i32, %arg1: i32) -> (i32, i32) {
    %c0_i32 = arith.constant 0 : i32
    %c0_i32_0 = arith.constant 0 : i32
    return %arg0, %c0_i32 : i32, i32
  }
}

</mosaic_0001>

<llo_original>
// kernel: tpu_custom_call.1
$region0: #{tpu_custom_call.1}
  #allocation0 [shape = 'u32[]', space=smem, size = 0x4, offset = 0x4, fixed_abs, tag = 'smem constant byte address 0x4 - core index']
  #allocation1 [shape = 'u32[144,128]{1,0:T(1,128)}', space=vmem, size = 0x12000, scoped, tag = 'internal scratch']
  #allocation2 [shape = 'f32[16,32]{1,0:T(8,128)}', space=vmem, size = 0x2000, scoped, tag = 'scratch operand']
  %s0 = inlined_call_operand.vmem [shape: bf16[2,8,128], index: 0, kind: input, shape index: {}]
  %s1 = inlined_call_operand.vmem [shape: s32[2,8,1], index: 1, kind: input, shape index: {}]
  %s2 = inlined_call_operand.vmem [shape: f32[2,1,8], index: 2, kind: input, shape index: {}]
  %s3 = inlined_call_operand.vmem [shape: bf16[128,32], index: 3, kind: input, shape index: {}]
  %s4 = inlined_call_operand.vmem [shape: f32[1,32], index: 4, kind: input, shape index: {}]
  %s5 = inlined_call_operand.vmem [shape: f32[16,32], index: 5, kind: input, shape index: {}]
  %s6 = inlined_call_operand.vmem [shape: bf16[2,32,96], index: 6, kind: input, shape index: {}]
  %s7 = inlined_call_operand.vmem [shape: f32[2,1,96], index: 7, kind: input, shape index: {}]
  %s8 = inlined_call_operand.vmem [shape: bf16[2,32,32], index: 8, kind: input, shape index: {}]
  %s9 = inlined_call_operand.vmem [shape: f32[2,1,32], index: 9, kind: input, shape index: {}]
  %s10 = inlined_call_operand.vmem [shape: f32[2,1,32], index: 10, kind: input, shape index: {}]
  %s11 = inlined_call_operand.vmem [shape: f32[2,1,32], index: 11, kind: input, shape index: {}]
  %s12 = inlined_call_operand.vmem [shape: bf16[2,32,2048], index: 12, kind: input, shape index: {}]
  %s13 = inlined_call_operand.vmem [shape: f32[2,1,2048], index: 13, kind: input, shape index: {}]
  %s14 = inlined_call_operand.vmem [shape: bf16[2,2048,32], index: 14, kind: input, shape index: {}]
  %s15 = inlined_call_operand.vmem [shape: f32[2,1,32], index: 15, kind: input, shape index: {}]
  %s16 = inlined_call_operand.vmem [shape: f32[2,1,32], index: 16, kind: input, shape index: {}]
  %s17 = inlined_call_operand.vmem [shape: f32[2,1,32], index: 17, kind: input, shape index: {}]
  %s18 = inlined_call_operand.hbm [shape: f32[2,32], index: 18, kind: output, shape index: {}]
  %s19 = sld [smem:[#allocation0]]
  $region113: #{tpu_custom_call.1} parent=0
    _
  %s21 = ssub.s32 1, %s19
  %s22 = scalar_select 0, %s21, %s19
  $region1: #{tpu_custom_call.1} parent=0
    #allocation3 [shape = 'u8[1024]{0}', space=vmem, size = 0x400, scoped, tag = 'output window, operand 0, single buffered']
    #allocation4 [shape = 's32[2]{0}', space=sflag, size = 0x8, scoped, tag = 'scoped memory for tpu_custom_call.1']
    %23 = vsyncpa [#allocation4], 0
    loop: start=0, step=1, limit=4
    $region2: #{tpu_custom_call.1} parent=1 // loop_pre_header
      _
    $region3: #{tpu_custom_call.1} parent=1 // loop_header
      %s25 = sphi 0, %s29
      %p26 = scmp.ge.s32.totalorder %s25, 4
      %s32 = sphi 0, %s44
      %s33 = sphi 0, %s40
      %s34 = sphi 0, %s32
      %s35 = sphi 0, %s33
      %s36 = sphi 0, %s34
      %s37 = sphi 0, %s35
      %s47 = sphi 0, %s49
      %s50 = sphi 0, %s47
      %s51 = sphi 0, %s50
      %s67 = sphi 0, %s51
      %s73 = sphi 0, %s75
      %s76 = sphi 0, %s73
      %s77 = sphi 0, %s76
      %s93 = sphi 0, %s77
      %s99 = sphi 0, %s101
      %s102 = sphi 0, %s99
      %s103 = sphi 0, %s102
      %s119 = sphi 0, %s103
      %s123 = sphi 0, %s123
      %s125 = sphi 0, %s123
      %s126 = sphi 0, %s125
      %s140 = sphi 0, %s126
      %s144 = sphi 0, %s144
      %s146 = sphi 0, %s144
      %s147 = sphi 0, %s146
      %s161 = sphi 0, %s147
      %s165 = sphi 0, %s165
      %s167 = sphi 0, %s165
      %s168 = sphi 0, %s167
      %s182 = sphi 0, %s168
      %s188 = sphi 0, %s190
      %s191 = sphi 0, %s188
      %s192 = sphi 0, %s191
      %s208 = sphi 0, %s192
      %s214 = sphi 0, %s216
      %s217 = sphi 0, %s214
      %s218 = sphi 0, %s217
      %s234 = sphi 0, %s218
      %s240 = sphi 0, %s242
      %s243 = sphi 0, %s240
      %s244 = sphi 0, %s243
      %s260 = sphi 0, %s244
      %s266 = sphi 0, %s268
      %s269 = sphi 0, %s266
      %s270 = sphi 0, %s269
      %s286 = sphi 0, %s270
      %s292 = sphi 0, %s294
      %s295 = sphi 0, %s292
      %s296 = sphi 0, %s295
      %s312 = sphi 0, %s296
      %s318 = sphi 0, %s320
      %s321 = sphi 0, %s318
      %s322 = sphi 0, %s321
      %s338 = sphi 0, %s322
      %s344 = sphi 0, %s346
      %s347 = sphi 0, %s344
      %s348 = sphi 0, %s347
      %s364 = sphi 0, %s348
      %s370 = sphi 0, %s372
      %s373 = sphi 0, %s370
      %s374 = sphi 0, %s373
      %s390 = sphi 0, %s374
      %s396 = sphi 0, %s398
      %s399 = sphi 0, %s396
      %s400 = sphi 0, %s399
      %s416 = sphi 0, %s400
      %s422 = sphi 0, %s424
      %s425 = sphi 0, %s422
      %s426 = sphi 0, %s425
      %s442 = sphi 0, %s426
      %s448 = sphi 0, %s450
      %s451 = sphi 0, %s448
      %s452 = sphi 0, %s451
      %s468 = sphi 0, %s452
      %s474 = sphi 0, %s476
      %s477 = sphi 0, %s474
      %s478 = sphi 0, %s477
      %s494 = sphi 0, %s478
      %s500 = sphi 0, %s502
      %s503 = sphi 0, %s500
      %s504 = sphi 0, %s503
      %s520 = sphi 0, %s504
    $region4: #{tpu_custom_call.1} parent=1 // loop_header_branch
      %28 = sbr.rel (%p26) target = $region8
    $region5: #{tpu_custom_call.1} parent=1 // loop_body
      %s30 = ssub.s32 %s25, 1
      %s31 = ssub.s32 %s25, 2
      %s38 = sadd.s32 1, %s33
      %p39 = scmp.ge.s32.totalorder %s38, 2
      %s40 = scalar_select %p39, 0, %s38
      %s41 = sadd.s32 1, %s32
      %s42 = scalar_select %p39, %s41, %s32
      %p43 = scmp.ge.s32.totalorder %s42, 1
      %s44 = scalar_select %p43, 0, %s42
      %s45 = ssub.s32 %s32, %s44
      %p46 = scmp.eq.s32.totalorder %s45, 0
      %s48 = sadd.s32 %s47, 1
      %s49 = scalar_select %p46, %s47, %s48
      %p52 = pneg %p46
      %p53 = scmp.eq.s32.totalorder %s25, 1
      %p54 = por %p52, %p53
      %p55 = scmp.ne.s32.totalorder %s47, %s50
      %p56 = scmp.eq.s32.totalorder %s25, 0
      %p57 = por %p55, %p56
      %p58 = scmp.ne.s32.totalorder %s47, %s50
      %p59 = scmp.eq.s32.totalorder %s30, 1
      %p60 = por %p58, %p59
      %p61 = scmp.ne.s32.totalorder %s50, %s51
      %p62 = scmp.eq.s32.totalorder %s30, 0
      %p63 = por %p61, %p62
      %p64 = scmp.ne.s32.totalorder %s50, %s51
      %p65 = scmp.eq.s32.totalorder %s31, 1
      %p66 = por %p64, %p65
      %p68 = scmp.ne.s32.totalorder %s51, %s67
      %p69 = scmp.eq.s32.totalorder %s31, 0
      %p70 = por %p68, %p69
      %s71 = ssub.s32 %s32, %s44
      %p72 = scmp.eq.s32.totalorder %s71, 0
      %s74 = sadd.s32 %s73, 1
      %s75 = scalar_select %p72, %s73, %s74
      %p78 = pneg %p72
      %p79 = scmp.eq.s32.totalorder %s25, 1
      %p80 = por %p78, %p79
      %p81 = scmp.ne.s32.totalorder %s73, %s76
      %p82 = scmp.eq.s32.totalorder %s25, 0
      %p83 = por %p81, %p82
      %p84 = scmp.ne.s32.totalorder %s73, %s76
      %p85 = scmp.eq.s32.totalorder %s30, 1
      %p86 = por %p84, %p85
      %p87 = scmp.ne.s32.totalorder %s76, %s77
      %p88 = scmp.eq.s32.totalorder %s30, 0
      %p89 = por %p87, %p88
      %p90 = scmp.ne.s32.totalorder %s76, %s77
      %p91 = scmp.eq.s32.totalorder %s31, 1
      %p92 = por %p90, %p91
      %p94 = scmp.ne.s32.totalorder %s77, %s93
      %p95 = scmp.eq.s32.totalorder %s31, 0
      %p96 = por %p94, %p95
      %s97 = ssub.s32 %s32, %s44
      %p98 = scmp.eq.s32.totalorder %s97, 0
      %s100 = sadd.s32 %s99, 1
      %s101 = scalar_select %p98, %s99, %s100
      %p104 = pneg %p98
      %p105 = scmp.eq.s32.totalorder %s25, 1
      %p106 = por %p104, %p105
      %p107 = scmp.ne.s32.totalorder %s99, %s102
      %p108 = scmp.eq.s32.totalorder %s25, 0
      %p109 = por %p107, %p108
      %p110 = scmp.ne.s32.totalorder %s99, %s102
      %p111 = scmp.eq.s32.totalorder %s30, 1
      %p112 = por %p110, %p111
      %p113 = scmp.ne.s32.totalorder %s102, %s103
      %p114 = scmp.eq.s32.totalorder %s30, 0
      %p115 = por %p113, %p114
      %p116 = scmp.ne.s32.totalorder %s102, %s103
      %p117 = scmp.eq.s32.totalorder %s31, 1
      %p118 = por %p116, %p117
      %p120 = scmp.ne.s32.totalorder %s103, %s119
      %p121 = scmp.eq.s32.totalorder %s31, 0
      %p122 = por %p120, %p121
      %s124 = sadd.s32 %s123, 1
      %p127 = scmp.eq.s32.totalorder %s25, 1
      %p128 = scmp.ne.s32.totalorder %s123, %s125
      %p129 = scmp.eq.s32.totalorder %s25, 0
      %p130 = por %p128, %p129
      %p131 = scmp.ne.s32.totalorder %s123, %s125
      %p132 = scmp.eq.s32.totalorder %s30, 1
      %p133 = por %p131, %p132
      %p134 = scmp.ne.s32.totalorder %s125, %s126
      %p135 = scmp.eq.s32.totalorder %s30, 0
      %p136 = por %p134, %p135
      %p137 = scmp.ne.s32.totalorder %s125, %s126
      %p138 = scmp.eq.s32.totalorder %s31, 1
      %p139 = por %p137, %p138
      %p141 = scmp.ne.s32.totalorder %s126, %s140
      %p142 = scmp.eq.s32.totalorder %s31, 0
      %p143 = por %p141, %p142
      %s145 = sadd.s32 %s144, 1
      %p148 = scmp.eq.s32.totalorder %s25, 1
      %p149 = scmp.ne.s32.totalorder %s144, %s146
      %p150 = scmp.eq.s32.totalorder %s25, 0
      %p151 = por %p149, %p150
      %p152 = scmp.ne.s32.totalorder %s144, %s146
      %p153 = scmp.eq.s32.totalorder %s30, 1
      %p154 = por %p152, %p153
      %p155 = scmp.ne.s32.totalorder %s146, %s147
      %p156 = scmp.eq.s32.totalorder %s30, 0
      %p157 = por %p155, %p156
      %p158 = scmp.ne.s32.totalorder %s146, %s147
      %p159 = scmp.eq.s32.totalorder %s31, 1
      %p160 = por %p158, %p159
      %p162 = scmp.ne.s32.totalorder %s147, %s161
      %p163 = scmp.eq.s32.totalorder %s31, 0
      %p164 = por %p162, %p163
      %s166 = sadd.s32 %s165, 1
      %p169 = scmp.eq.s32.totalorder %s25, 1
      %p170 = scmp.ne.s32.totalorder %s165, %s167
      %p171 = scmp.eq.s32.totalorder %s25, 0
      %p172 = por %p170, %p171
      %p173 = scmp.ne.s32.totalorder %s165, %s167
      %p174 = scmp.eq.s32.totalorder %s30, 1
      %p175 = por %p173, %p174
      %p176 = scmp.ne.s32.totalorder %s167, %s168
      %p177 = scmp.eq.s32.totalorder %s30, 0
      %p178 = por %p176, %p177
      %p179 = scmp.ne.s32.totalorder %s167, %s168
      %p180 = scmp.eq.s32.totalorder %s31, 1
      %p181 = por %p179, %p180
      %p183 = scmp.ne.s32.totalorder %s168, %s182
      %p184 = scmp.eq.s32.totalorder %s31, 0
      %p185 = por %p183, %p184
      %s186 = ssub.s32 %s33, %s40
      %p187 = scmp.eq.s32.totalorder %s186, 0
      %s189 = sadd.s32 %s188, 1
      %s190 = scalar_select %p187, %s188, %s189
      %p193 = pneg %p187
      %p194 = scmp.eq.s32.totalorder %s25, 1
      %p195 = por %p193, %p194
      %p196 = scmp.ne.s32.totalorder %s188, %s191
      %p197 = scmp.eq.s32.totalorder %s25, 0
      %p198 = por %p196, %p197
      %p199 = scmp.ne.s32.totalorder %s188, %s191
      %p200 = scmp.eq.s32.totalorder %s30, 1
      %p201 = por %p199, %p200
      %p202 = scmp.ne.s32.totalorder %s191, %s192
      %p203 = scmp.eq.s32.totalorder %s30, 0
      %p204 = por %p202, %p203
      %p205 = scmp.ne.s32.totalorder %s191, %s192
      %p206 = scmp.eq.s32.totalorder %s31, 1
      %p207 = por %p205, %p206
      %p209 = scmp.ne.s32.totalorder %s192, %s208
      %p210 = scmp.eq.s32.totalorder %s31, 0
      %p211 = por %p209, %p210
      %s212 = ssub.s32 %s33, %s40
      %p213 = scmp.eq.s32.totalorder %s212, 0
      %s215 = sadd.s32 %s214, 1
      %s216 = scalar_select %p213, %s214, %s215
      %p219 = pneg %p213
      %p220 = scmp.eq.s32.totalorder %s25, 1
      %p221 = por %p219, %p220
      %p222 = scmp.ne.s32.totalorder %s214, %s217
      %p223 = scmp.eq.s32.totalorder %s25, 0
      %p224 = por %p222, %p223
      %p225 = scmp.ne.s32.totalorder %s214, %s217
      %p226 = scmp.eq.s32.totalorder %s30, 1
      %p227 = por %p225, %p226
      %p228 = scmp.ne.s32.totalorder %s217, %s218
      %p229 = scmp.eq.s32.totalorder %s30, 0
      %p230 = por %p228, %p229
      %p231 = scmp.ne.s32.totalorder %s217, %s218
      %p232 = scmp.eq.s32.totalorder %s31, 1
      %p233 = por %p231, %p232
      %p235 = scmp.ne.s32.totalorder %s218, %s234
      %p236 = scmp.eq.s32.totalorder %s31, 0
      %p237 = por %p235, %p236
      %s238 = ssub.s32 %s33, %s40
      %p239 = scmp.eq.s32.totalorder %s238, 0
      %s241 = sadd.s32 %s240, 1
      %s242 = scalar_select %p239, %s240, %s241
      %p245 = pneg %p239
      %p246 = scmp.eq.s32.totalorder %s25, 1
      %p247 = por %p245, %p246
      %p248 = scmp.ne.s32.totalorder %s240, %s243
      %p249 = scmp.eq.s32.totalorder %s25, 0
      %p250 = por %p248, %p249
      %p251 = scmp.ne.s32.totalorder %s240, %s243
      %p252 = scmp.eq.s32.totalorder %s30, 1
      %p253 = por %p251, %p252
      %p254 = scmp.ne.s32.totalorder %s243, %s244
      %p255 = scmp.eq.s32.totalorder %s30, 0
      %p256 = por %p254, %p255
      %p257 = scmp.ne.s32.totalorder %s243, %s244
      %p258 = scmp.eq.s32.totalorder %s31, 1
      %p259 = por %p257, %p258
      %p261 = scmp.ne.s32.totalorder %s244, %s260
      %p262 = scmp.eq.s32.totalorder %s31, 0
      %p263 = por %p261, %p262
      %s264 = ssub.s32 %s33, %s40
      %p265 = scmp.eq.s32.totalorder %s264, 0
      %s267 = sadd.s32 %s266, 1
      %s268 = scalar_select %p265, %s266, %s267
      %p271 = pneg %p265
      %p272 = scmp.eq.s32.totalorder %s25, 1
      %p273 = por %p271, %p272
      %p274 = scmp.ne.s32.totalorder %s266, %s269
      %p275 = scmp.eq.s32.totalorder %s25, 0
      %p276 = por %p274, %p275
      %p277 = scmp.ne.s32.totalorder %s266, %s269
      %p278 = scmp.eq.s32.totalorder %s30, 1
      %p279 = por %p277, %p278
      %p280 = scmp.ne.s32.totalorder %s269, %s270
      %p281 = scmp.eq.s32.totalorder %s30, 0
      %p282 = por %p280, %p281
      %p283 = scmp.ne.s32.totalorder %s269, %s270
      %p284 = scmp.eq.s32.totalorder %s31, 1
      %p285 = por %p283, %p284
      %p287 = scmp.ne.s32.totalorder %s270, %s286
      %p288 = scmp.eq.s32.totalorder %s31, 0
      %p289 = por %p287, %p288
      %s290 = ssub.s32 %s33, %s40
      %p291 = scmp.eq.s32.totalorder %s290, 0
      %s293 = sadd.s32 %s292, 1
      %s294 = scalar_select %p291, %s292, %s293
      %p297 = pneg %p291
      %p298 = scmp.eq.s32.totalorder %s25, 1
      %p299 = por %p297, %p298
      %p300 = scmp.ne.s32.totalorder %s292, %s295
      %p301 = scmp.eq.s32.totalorder %s25, 0
      %p302 = por %p300, %p301
      %p303 = scmp.ne.s32.totalorder %s292, %s295
      %p304 = scmp.eq.s32.totalorder %s30, 1
      %p305 = por %p303, %p304
      %p306 = scmp.ne.s32.totalorder %s295, %s296
      %p307 = scmp.eq.s32.totalorder %s30, 0
      %p308 = por %p306, %p307
      %p309 = scmp.ne.s32.totalorder %s295, %s296
      %p310 = scmp.eq.s32.totalorder %s31, 1
      %p311 = por %p309, %p310
      %p313 = scmp.ne.s32.totalorder %s296, %s312
      %p314 = scmp.eq.s32.totalorder %s31, 0
      %p315 = por %p313, %p314
      %s316 = ssub.s32 %s33, %s40
      %p317 = scmp.eq.s32.totalorder %s316, 0
      %s319 = sadd.s32 %s318, 1
      %s320 = scalar_select %p317, %s318, %s319
      %p323 = pneg %p317
      %p324 = scmp.eq.s32.totalorder %s25, 1
      %p325 = por %p323, %p324
      %p326 = scmp.ne.s32.totalorder %s318, %s321
      %p327 = scmp.eq.s32.totalorder %s25, 0
      %p328 = por %p326, %p327
      %p329 = scmp.ne.s32.totalorder %s318, %s321
      %p330 = scmp.eq.s32.totalorder %s30, 1
      %p331 = por %p329, %p330
      %p332 = scmp.ne.s32.totalorder %s321, %s322
      %p333 = scmp.eq.s32.totalorder %s30, 0
      %p334 = por %p332, %p333
      %p335 = scmp.ne.s32.totalorder %s321, %s322
      %p336 = scmp.eq.s32.totalorder %s31, 1
      %p337 = por %p335, %p336
      %p339 = scmp.ne.s32.totalorder %s322, %s338
      %p340 = scmp.eq.s32.totalorder %s31, 0
      %p341 = por %p339, %p340
      %s342 = ssub.s32 %s33, %s40
      %p343 = scmp.eq.s32.totalorder %s342, 0
      %s345 = sadd.s32 %s344, 1
      %s346 = scalar_select %p343, %s344, %s345
      %p349 = pneg %p343
      %p350 = scmp.eq.s32.totalorder %s25, 1
      %p351 = por %p349, %p350
      %p352 = scmp.ne.s32.totalorder %s344, %s347
      %p353 = scmp.eq.s32.totalorder %s25, 0
      %p354 = por %p352, %p353
      %p355 = scmp.ne.s32.totalorder %s344, %s347
      %p356 = scmp.eq.s32.totalorder %s30, 1
      %p357 = por %p355, %p356
      %p358 = scmp.ne.s32.totalorder %s347, %s348
      %p359 = scmp.eq.s32.totalorder %s30, 0
      %p360 = por %p358, %p359
      %p361 = scmp.ne.s32.totalorder %s347, %s348
      %p362 = scmp.eq.s32.totalorder %s31, 1
      %p363 = por %p361, %p362
      %p365 = scmp.ne.s32.totalorder %s348, %s364
      %p366 = scmp.eq.s32.totalorder %s31, 0
      %p367 = por %p365, %p366
      %s368 = ssub.s32 %s33, %s40
      %p369 = scmp.eq.s32.totalorder %s368, 0
      %s371 = sadd.s32 %s370, 1
      %s372 = scalar_select %p369, %s370, %s371
      %p375 = pneg %p369
      %p376 = scmp.eq.s32.totalorder %s25, 1
      %p377 = por %p375, %p376
      %p378 = scmp.ne.s32.totalorder %s370, %s373
      %p379 = scmp.eq.s32.totalorder %s25, 0
      %p380 = por %p378, %p379
      %p381 = scmp.ne.s32.totalorder %s370, %s373
      %p382 = scmp.eq.s32.totalorder %s30, 1
      %p383 = por %p381, %p382
      %p384 = scmp.ne.s32.totalorder %s373, %s374
      %p385 = scmp.eq.s32.totalorder %s30, 0
      %p386 = por %p384, %p385
      %p387 = scmp.ne.s32.totalorder %s373, %s374
      %p388 = scmp.eq.s32.totalorder %s31, 1
      %p389 = por %p387, %p388
      %p391 = scmp.ne.s32.totalorder %s374, %s390
      %p392 = scmp.eq.s32.totalorder %s31, 0
      %p393 = por %p391, %p392
      %s394 = ssub.s32 %s33, %s40
      %p395 = scmp.eq.s32.totalorder %s394, 0
      %s397 = sadd.s32 %s396, 1
      %s398 = scalar_select %p395, %s396, %s397
      %p401 = pneg %p395
      %p402 = scmp.eq.s32.totalorder %s25, 1
      %p403 = por %p401, %p402
      %p404 = scmp.ne.s32.totalorder %s396, %s399
      %p405 = scmp.eq.s32.totalorder %s25, 0
      %p406 = por %p404, %p405
      %p407 = scmp.ne.s32.totalorder %s396, %s399
      %p408 = scmp.eq.s32.totalorder %s30, 1
      %p409 = por %p407, %p408
      %p410 = scmp.ne.s32.totalorder %s399, %s400
      %p411 = scmp.eq.s32.totalorder %s30, 0
      %p412 = por %p410, %p411
      %p413 = scmp.ne.s32.totalorder %s399, %s400
      %p414 = scmp.eq.s32.totalorder %s31, 1
      %p415 = por %p413, %p414
      %p417 = scmp.ne.s32.totalorder %s400, %s416
      %p418 = scmp.eq.s32.totalorder %s31, 0
      %p419 = por %p417, %p418
      %s420 = ssub.s32 %s33, %s40
      %p421 = scmp.eq.s32.totalorder %s420, 0
      %s423 = sadd.s32 %s422, 1
      %s424 = scalar_select %p421, %s422, %s423
      %p427 = pneg %p421
      %p428 = scmp.eq.s32.totalorder %s25, 1
      %p429 = por %p427, %p428
      %p430 = scmp.ne.s32.totalorder %s422, %s425
      %p431 = scmp.eq.s32.totalorder %s25, 0
      %p432 = por %p430, %p431
      %p433 = scmp.ne.s32.totalorder %s422, %s425
      %p434 = scmp.eq.s32.totalorder %s30, 1
      %p435 = por %p433, %p434
      %p436 = scmp.ne.s32.totalorder %s425, %s426
      %p437 = scmp.eq.s32.totalorder %s30, 0
      %p438 = por %p436, %p437
      %p439 = scmp.ne.s32.totalorder %s425, %s426
      %p440 = scmp.eq.s32.totalorder %s31, 1
      %p441 = por %p439, %p440
      %p443 = scmp.ne.s32.totalorder %s426, %s442
      %p444 = scmp.eq.s32.totalorder %s31, 0
      %p445 = por %p443, %p444
      %s446 = ssub.s32 %s33, %s40
      %p447 = scmp.eq.s32.totalorder %s446, 0
      %s449 = sadd.s32 %s448, 1
      %s450 = scalar_select %p447, %s448, %s449
      %p453 = pneg %p447
      %p454 = scmp.eq.s32.totalorder %s25, 1
      %p455 = por %p453, %p454
      %p456 = scmp.ne.s32.totalorder %s448, %s451
      %p457 = scmp.eq.s32.totalorder %s25, 0
      %p458 = por %p456, %p457
      %p459 = scmp.ne.s32.totalorder %s448, %s451
      %p460 = scmp.eq.s32.totalorder %s30, 1
      %p461 = por %p459, %p460
      %p462 = scmp.ne.s32.totalorder %s451, %s452
      %p463 = scmp.eq.s32.totalorder %s30, 0
      %p464 = por %p462, %p463
      %p465 = scmp.ne.s32.totalorder %s451, %s452
      %p466 = scmp.eq.s32.totalorder %s31, 1
      %p467 = por %p465, %p466
      %p469 = scmp.ne.s32.totalorder %s452, %s468
      %p470 = scmp.eq.s32.totalorder %s31, 0
      %p471 = por %p469, %p470
      %s472 = ssub.s32 %s33, %s40
      %p473 = scmp.eq.s32.totalorder %s472, 0
      %s475 = sadd.s32 %s474, 1
      %s476 = scalar_select %p473, %s474, %s475
      %p479 = pneg %p473
      %p480 = scmp.eq.s32.totalorder %s25, 1
      %p481 = por %p479, %p480
      %p482 = scmp.ne.s32.totalorder %s474, %s477
      %p483 = scmp.eq.s32.totalorder %s25, 0
      %p484 = por %p482, %p483
      %p485 = scmp.ne.s32.totalorder %s474, %s477
      %p486 = scmp.eq.s32.totalorder %s30, 1
      %p487 = por %p485, %p486
      %p488 = scmp.ne.s32.totalorder %s477, %s478
      %p489 = scmp.eq.s32.totalorder %s30, 0
      %p490 = por %p488, %p489
      %p491 = scmp.ne.s32.totalorder %s477, %s478
      %p492 = scmp.eq.s32.totalorder %s31, 1
      %p493 = por %p491, %p492
      %p495 = scmp.ne.s32.totalorder %s478, %s494
      %p496 = scmp.eq.s32.totalorder %s31, 0
      %p497 = por %p495, %p496
      %s498 = ssub.s32 %s32, %s44
      %p499 = scmp.eq.s32.totalorder %s498, 0
      %s501 = sadd.s32 %s500, 1
      %s502 = scalar_select %p499, %s500, %s501
      %p505 = pneg %p499
      %p506 = scmp.eq.s32.totalorder %s25, 1
      %p507 = por %p505, %p506
      %p508 = scmp.ne.s32.totalorder %s500, %s503
      %p509 = scmp.eq.s32.totalorder %s25, 0
      %p510 = por %p508, %p509
      %p511 = scmp.ne.s32.totalorder %s500, %s503
      %p512 = scmp.eq.s32.totalorder %s30, 1
      %p513 = por %p511, %p512
      %p514 = scmp.ne.s32.totalorder %s503, %s504
      %p515 = scmp.eq.s32.totalorder %s30, 0
      %p516 = por %p514, %p515
      %p517 = scmp.ne.s32.totalorder %s503, %s504
      %p518 = scmp.eq.s32.totalorder %s31, 1
      %p519 = por %p517, %p518
      %p521 = scmp.ne.s32.totalorder %s504, %s520
      %p522 = scmp.eq.s32.totalorder %s31, 0
      %p523 = por %p521, %p522
      %p524 = scmp.le.s32.totalorder 1, %s25
      %p525 = scmp.lt.s32.totalorder %s25, 3
      %p526 = pnand %p524, %p525
      %p527 = pneg %p526
      // Predicated region
      $region9: #{tpu_custom_call.1} parent=5 // pred_check
        _
      $region10: #{tpu_custom_call.1} parent=5 // pred_check_branch
        %529 = sbr.rel (%p526) target = $region12
      $region11: #{tpu_custom_call.1} parent=5 // pred_region
        %s530 = ssub.s32 %s25, 1
        // Predicated region
        $region13: #{tpu_custom_call.1} parent=11 // pred_check
          %p531 = pneg %p63
        $region14: #{tpu_custom_call.1} parent=11 // pred_check_branch
          %533 = sbr.rel (%p531) target = $region16
        $region15: #{tpu_custom_call.1} parent=11 // pred_region
          %s534 = smul.u32 2, %s34
          %p535 = scmp.lt.s32.totalorder %s534, 1
          %s536 = scalar_select %p535, %s534, 1
          %s537 = smul.addr %s536, 4
          %s538 = scalar_lea.vmem %s0, %s537
          %s539 = smul.u32 2, %s34
        $region16: #{tpu_custom_call.1} parent=11 // pred_fallthru
          _
        // Predicated region
        $region17: #{tpu_custom_call.1} parent=11 // pred_check
          %p540 = pneg %p89
        $region18: #{tpu_custom_call.1} parent=11 // pred_check_branch
          %542 = sbr.rel (%p540) target = $region20
        $region19: #{tpu_custom_call.1} parent=11 // pred_region
          %s543 = smul.u32 2, %s34
          %p544 = scmp.lt.s32.totalorder %s543, 1
          %s545 = scalar_select %p544, %s543, 1
          %s546 = smul.addr %s545, 8
          %s547 = scalar_lea.vmem %s1, %s546
          %s548 = smul.u32 2, %s34
        $region20: #{tpu_custom_call.1} parent=11 // pred_fallthru
          _
        // Predicated region
        $region21: #{tpu_custom_call.1} parent=11 // pred_check
          %p549 = pneg %p115
        $region22: #{tpu_custom_call.1} parent=11 // pred_check_branch
          %551 = sbr.rel (%p549) target = $region24
        $region23: #{tpu_custom_call.1} parent=11 // pred_region
          %s552 = smul.u32 2, %s34
          %p553 = scmp.lt.s32.totalorder %s552, 1
          %s554 = scalar_select %p553, %s552, 1
          %s555 = scalar_lea.vmem %s2, %s554
          %s556 = smul.u32 2, %s34
        $region24: #{tpu_custom_call.1} parent=11 // pred_fallthru
          _
        // Predicated region
        $region25: #{tpu_custom_call.1} parent=11 // pred_check
          %p557 = pneg %p136
        $region26: #{tpu_custom_call.1} parent=11 // pred_check_branch
          %559 = sbr.rel (%p557) target = $region28
        $region27: #{tpu_custom_call.1} parent=11 // pred_region
          _
        $region28: #{tpu_custom_call.1} parent=11 // pred_fallthru
          _
        // Predicated region
        $region29: #{tpu_custom_call.1} parent=11 // pred_check
          %p560 = pneg %p157
        $region30: #{tpu_custom_call.1} parent=11 // pred_check_branch
          %562 = sbr.rel (%p560) target = $region32
        $region31: #{tpu_custom_call.1} parent=11 // pred_region
          _
        $region32: #{tpu_custom_call.1} parent=11 // pred_fallthru
          _
        // Predicated region
        $region33: #{tpu_custom_call.1} parent=11 // pred_check
          %p563 = pneg %p178
        $region34: #{tpu_custom_call.1} parent=11 // pred_check_branch
          %565 = sbr.rel (%p563) target = $region36
        $region35: #{tpu_custom_call.1} parent=11 // pred_region
          _
        $region36: #{tpu_custom_call.1} parent=11 // pred_fallthru
          _
      $region12: #{tpu_custom_call.1} parent=5 // pred_fallthru
        _
      %p566 = scmp.lt.s32.totalorder %s25, 2
      // Predicated region
      $region37: #{tpu_custom_call.1} parent=5 // pred_check
        %p567 = pneg %p566
      $region38: #{tpu_custom_call.1} parent=5 // pred_check_branch
        %569 = sbr.rel (%p567) target = $region40
      $region39: #{tpu_custom_call.1} parent=5 // pred_region
        // Predicated region
        $region41: #{tpu_custom_call.1} parent=39 // pred_check
          %p570 = pneg %p198
        $region42: #{tpu_custom_call.1} parent=39 // pred_check_branch
          %572 = sbr.rel (%p570) target = $region44
        $region43: #{tpu_custom_call.1} parent=39 // pred_region
          %p573 = scmp.lt.s32.totalorder %s33, 1
          %s574 = scalar_select %p573, %s33, 1
          %s575 = smul.addr %s574, 4
          %s576 = smul.addr %s575, 4
          %s577 = scalar_lea.vmem %s6, %s576
        $region44: #{tpu_custom_call.1} parent=39 // pred_fallthru
          _
        // Predicated region
        $region45: #{tpu_custom_call.1} parent=39 // pred_check
          %p578 = pneg %p224
        $region46: #{tpu_custom_call.1} parent=39 // pred_check_branch
          %580 = sbr.rel (%p578) target = $region48
        $region47: #{tpu_custom_call.1} parent=39 // pred_region
          %p581 = scmp.lt.s32.totalorder %s33, 1
          %s582 = scalar_select %p581, %s33, 1
          %s583 = scalar_lea.vmem %s7, %s582
        $region48: #{tpu_custom_call.1} parent=39 // pred_fallthru
          _
        // Predicated region
        $region49: #{tpu_custom_call.1} parent=39 // pred_check
          %p584 = pneg %p250
        $region50: #{tpu_custom_call.1} parent=39 // pred_check_branch
          %586 = sbr.rel (%p584) target = $region52
        $region51: #{tpu_custom_call.1} parent=39 // pred_region
          %p587 = scmp.lt.s32.totalorder %s33, 1
          %s588 = scalar_select %p587, %s33, 1
          %s589 = smul.addr %s588, 4
          %s590 = smul.addr %s589, 4
          %s591 = scalar_lea.vmem %s8, %s590
        $region52: #{tpu_custom_call.1} parent=39 // pred_fallthru
          _
        // Predicated region
        $region53: #{tpu_custom_call.1} parent=39 // pred_check
          %p592 = pneg %p276
        $region54: #{tpu_custom_call.1} parent=39 // pred_check_branch
          %594 = sbr.rel (%p592) target = $region56
        $region55: #{tpu_custom_call.1} parent=39 // pred_region
          %p595 = scmp.lt.s32.totalorder %s33, 1
          %s596 = scalar_select %p595, %s33, 1
          %s597 = scalar_lea.vmem %s9, %s596
        $region56: #{tpu_custom_call.1} parent=39 // pred_fallthru
          _
        // Predicated region
        $region57: #{tpu_custom_call.1} parent=39 // pred_check
          %p598 = pneg %p302
        $region58: #{tpu_custom_call.1} parent=39 // pred_check_branch
          %600 = sbr.rel (%p598) target = $region60
        $region59: #{tpu_custom_call.1} parent=39 // pred_region
          %p601 = scmp.lt.s32.totalorder %s33, 1
          %s602 = scalar_select %p601, %s33, 1
          %s603 = scalar_lea.vmem %s10, %s602
        $region60: #{tpu_custom_call.1} parent=39 // pred_fallthru
          _
        // Predicated region
        $region61: #{tpu_custom_call.1} parent=39 // pred_check
          %p604 = pneg %p328
        $region62: #{tpu_custom_call.1} parent=39 // pred_check_branch
          %606 = sbr.rel (%p604) target = $region64
        $region63: #{tpu_custom_call.1} parent=39 // pred_region
          %p607 = scmp.lt.s32.totalorder %s33, 1
          %s608 = scalar_select %p607, %s33, 1
          %s609 = scalar_lea.vmem %s11, %s608
        $region64: #{tpu_custom_call.1} parent=39 // pred_fallthru
          _
        // Predicated region
        $region65: #{tpu_custom_call.1} parent=39 // pred_check
          %p610 = pneg %p354
        $region66: #{tpu_custom_call.1} parent=39 // pred_check_branch
          %612 = sbr.rel (%p610) target = $region68
        $region67: #{tpu_custom_call.1} parent=39 // pred_region
          %p613 = scmp.lt.s32.totalorder %s33, 1
          %s614 = scalar_select %p613, %s33, 1
          %s615 = smul.addr %s614, 64
          %s616 = smul.addr %s615, 4
          %s617 = scalar_lea.vmem %s12, %s616
        $region68: #{tpu_custom_call.1} parent=39 // pred_fallthru
          _
        // Predicated region
        $region69: #{tpu_custom_call.1} parent=39 // pred_check
          %p618 = pneg %p380
        $region70: #{tpu_custom_call.1} parent=39 // pred_check_branch
          %620 = sbr.rel (%p618) target = $region72
        $region71: #{tpu_custom_call.1} parent=39 // pred_region
          %p621 = scmp.lt.s32.totalorder %s33, 1
          %s622 = scalar_select %p621, %s33, 1
          %s623 = smul.addr %s622, 16
          %s624 = scalar_lea.vmem %s13, %s623
        $region72: #{tpu_custom_call.1} parent=39 // pred_fallthru
          _
        // Predicated region
        $region73: #{tpu_custom_call.1} parent=39 // pred_check
          %p625 = pneg %p406
        $region74: #{tpu_custom_call.1} parent=39 // pred_check_branch
          %627 = sbr.rel (%p625) target = $region76
        $region75: #{tpu_custom_call.1} parent=39 // pred_region
          %p628 = scmp.lt.s32.totalorder %s33, 1
          %s629 = scalar_select %p628, %s33, 1
          %s630 = smul.addr %s629, 256
          %s631 = smul.addr %s630, 4
          %s632 = scalar_lea.vmem %s14, %s631
        $region76: #{tpu_custom_call.1} parent=39 // pred_fallthru
          _
        // Predicated region
        $region77: #{tpu_custom_call.1} parent=39 // pred_check
          %p633 = pneg %p432
        $region78: #{tpu_custom_call.1} parent=39 // pred_check_branch
          %635 = sbr.rel (%p633) target = $region80
        $region79: #{tpu_custom_call.1} parent=39 // pred_region
          %p636 = scmp.lt.s32.totalorder %s33, 1
          %s637 = scalar_select %p636, %s33, 1
          %s638 = scalar_lea.vmem %s15, %s637
        $region80: #{tpu_custom_call.1} parent=39 // pred_fallthru
          _
        // Predicated region
        $region81: #{tpu_custom_call.1} parent=39 // pred_check
          %p639 = pneg %p458
        $region82: #{tpu_custom_call.1} parent=39 // pred_check_branch
          %641 = sbr.rel (%p639) target = $region84
        $region83: #{tpu_custom_call.1} parent=39 // pred_region
          %p642 = scmp.lt.s32.totalorder %s33, 1
          %s643 = scalar_select %p642, %s33, 1
          %s644 = scalar_lea.vmem %s16, %s643
        $region84: #{tpu_custom_call.1} parent=39 // pred_fallthru
          _
        // Predicated region
        $region85: #{tpu_custom_call.1} parent=39 // pred_check
          %p645 = pneg %p484
        $region86: #{tpu_custom_call.1} parent=39 // pred_check_branch
          %647 = sbr.rel (%p645) target = $region88
        $region87: #{tpu_custom_call.1} parent=39 // pred_region
          %p648 = scmp.lt.s32.totalorder %s33, 1
          %s649 = scalar_select %p648, %s33, 1
          %s650 = scalar_lea.vmem %s17, %s649
        $region88: #{tpu_custom_call.1} parent=39 // pred_fallthru
          _
      $region40: #{tpu_custom_call.1} parent=5 // pred_fallthru
        _
      %p651 = scmp.le.s32.totalorder 1, %s25
      %p652 = scmp.lt.s32.totalorder %s25, 3
      %p653 = pnand %p651, %p652
      %p654 = pneg %p653
      // Predicated region
      $region89: #{tpu_custom_call.1} parent=5 // pred_check
        _
      $region90: #{tpu_custom_call.1} parent=5 // pred_check_branch
        %656 = sbr.rel (%p653) target = $region92
      $region91: #{tpu_custom_call.1} parent=5 // pred_region
        %s657 = ssub.s32 %s25, 1
        %s658 = smul.u32 2, %s34
        %p659 = scmp.lt.s32.totalorder %s658, 1
        %s660 = scalar_select %p659, %s658, 1
        %s661 = smul.addr %s660, 4
        %s662 = scalar_lea.vmem %s0, %s661
        %p663 = pneg %p63
        %p664 = pneg %p60
        %s665 = smul.u32 2, %s34
        %p666 = scmp.lt.s32.totalorder %s665, 1
        %s667 = scalar_select %p666, %s665, 1
        %s668 = smul.addr %s667, 8
        %s669 = scalar_lea.vmem %s1, %s668
        %p670 = pneg %p89
        %p671 = pneg %p86
        %s672 = smul.u32 2, %s34
        %p673 = scmp.lt.s32.totalorder %s672, 1
        %s674 = scalar_select %p673, %s672, 1
        %s675 = scalar_lea.vmem %s2, %s674
        %p676 = pneg %p115
        %p677 = pneg %p112
        %p678 = pneg %p136
        %p679 = pneg %p133
        %p680 = pneg %p157
        %p681 = pneg %p154
        %p682 = pneg %p178
        %p683 = pneg %p175
        %p684 = scmp.lt.s32.totalorder %s35, 1
        %s685 = scalar_select %p684, %s35, 1
        %s686 = smul.addr %s685, 4
        %s687 = smul.addr %s686, 4
        %s688 = scalar_lea.vmem %s6, %s687
        %p689 = pneg %p204
        %p690 = pneg %p201
        %p691 = scmp.lt.s32.totalorder %s35, 1
        %s692 = scalar_select %p691, %s35, 1
        %s693 = scalar_lea.vmem %s7, %s692
        %p694 = pneg %p230
        %p695 = pneg %p227
        %p696 = scmp.lt.s32.totalorder %s35, 1
        %s697 = scalar_select %p696, %s35, 1
        %s698 = smul.addr %s697, 4
        %s699 = smul.addr %s698, 4
        %s700 = scalar_lea.vmem %s8, %s699
        %p701 = pneg %p256
        %p702 = pneg %p253
        %p703 = scmp.lt.s32.totalorder %s35, 1
        %s704 = scalar_select %p703, %s35, 1
        %s705 = scalar_lea.vmem %s9, %s704
        %p706 = pneg %p282
        %p707 = pneg %p279
        %p708 = scmp.lt.s32.totalorder %s35, 1
        %s709 = scalar_select %p708, %s35, 1
        %s710 = scalar_lea.vmem %s10, %s709
        %p711 = pneg %p308
        %p712 = pneg %p305
        %p713 = scmp.lt.s32.totalorder %s35, 1
        %s714 = scalar_select %p713, %s35, 1
        %s715 = scalar_lea.vmem %s11, %s714
        %p716 = pneg %p334
        %p717 = pneg %p331
        %p718 = scmp.lt.s32.totalorder %s35, 1
        %s719 = scalar_select %p718, %s35, 1
        %s720 = smul.addr %s719, 64
        %s721 = smul.addr %s720, 4
        %s722 = scalar_lea.vmem %s12, %s721
        %p723 = pneg %p360
        %p724 = pneg %p357
        %p725 = scmp.lt.s32.totalorder %s35, 1
        %s726 = scalar_select %p725, %s35, 1
        %s727 = smul.addr %s726, 16
        %s728 = scalar_lea.vmem %s13, %s727
        %p729 = pneg %p386
        %p730 = pneg %p383
        %p731 = scmp.lt.s32.totalorder %s35, 1
        %s732 = scalar_select %p731, %s35, 1
        %s733 = smul.addr %s732, 256
        %s734 = smul.addr %s733, 4
        %s735 = scalar_lea.vmem %s14, %s734
        %p736 = pneg %p412
        %p737 = pneg %p409
        %p738 = scmp.lt.s32.totalorder %s35, 1
        %s739 = scalar_select %p738, %s35, 1
        %s740 = scalar_lea.vmem %s15, %s739
        %p741 = pneg %p438
        %p742 = pneg %p435
        %p743 = scmp.lt.s32.totalorder %s35, 1
        %s744 = scalar_select %p743, %s35, 1
        %s745 = scalar_lea.vmem %s16, %s744
        %p746 = pneg %p464
        %p747 = pneg %p461
        %p748 = scmp.lt.s32.totalorder %s35, 1
        %s749 = scalar_select %p748, %s35, 1
        %s750 = scalar_lea.vmem %s17, %s749
        %p751 = pneg %p490
        %p752 = pneg %p487
        %p753 = pneg %p516
        %p754 = pneg %p513
        %s755 = smul.u32 2, %s34
        %p756 = scmp.lt.s32.totalorder %s755, 1
        %s757 = scalar_select %p756, %s755, 1
        %s758 = smul.addr %s757, 4
        %s759 = scalar_lea.vmem %s0, %s758
        %s760 = smul.u32 2, %s34
        %s761 = smul.u32 2, %s34
        %p762 = scmp.lt.s32.totalorder %s761, 1
        %s763 = scalar_select %p762, %s761, 1
        %s764 = smul.addr %s763, 8
        %s765 = scalar_lea.vmem %s1, %s764
        %s766 = smul.u32 2, %s34
        %s767 = smul.u32 2, %s34
        %p768 = scmp.lt.s32.totalorder %s767, 1
        %s769 = scalar_select %p768, %s767, 1
        %s770 = scalar_lea.vmem %s2, %s769
        %s771 = smul.u32 2, %s34
        %p772 = scmp.lt.s32.totalorder %s35, 1
        %s773 = scalar_select %p772, %s35, 1
        %s774 = smul.addr %s773, 4
        %s775 = smul.addr %s774, 4
        %s776 = scalar_lea.vmem %s6, %s775
        %p777 = scmp.lt.s32.totalorder %s35, 1
        %s778 = scalar_select %p777, %s35, 1
        %s779 = scalar_lea.vmem %s7, %s778
        %p780 = scmp.lt.s32.totalorder %s35, 1
        %s781 = scalar_select %p780, %s35, 1
        %s782 = smul.addr %s781, 4
        %s783 = smul.addr %s782, 4
        %s784 = scalar_lea.vmem %s8, %s783
        %p785 = scmp.lt.s32.totalorder %s35, 1
        %s786 = scalar_select %p785, %s35, 1
        %s787 = scalar_lea.vmem %s9, %s786
        %p788 = scmp.lt.s32.totalorder %s35, 1
        %s789 = scalar_select %p788, %s35, 1
        %s790 = scalar_lea.vmem %s10, %s789
        %p791 = scmp.lt.s32.totalorder %s35, 1
        %s792 = scalar_select %p791, %s35, 1
        %s793 = scalar_lea.vmem %s11, %s792
        %p794 = scmp.lt.s32.totalorder %s35, 1
        %s795 = scalar_select %p794, %s35, 1
        %s796 = smul.addr %s795, 64
        %s797 = smul.addr %s796, 4
        %s798 = scalar_lea.vmem %s12, %s797
        %p799 = scmp.lt.s32.totalorder %s35, 1
        %s800 = scalar_select %p799, %s35, 1
        %s801 = smul.addr %s800, 16
        %s802 = scalar_lea.vmem %s13, %s801
        %p803 = scmp.lt.s32.totalorder %s35, 1
        %s804 = scalar_select %p803, %s35, 1
        %s805 = smul.addr %s804, 256
        %s806 = smul.addr %s805, 4
        %s807 = scalar_lea.vmem %s14, %s806
        %p808 = scmp.lt.s32.totalorder %s35, 1
        %s809 = scalar_select %p808, %s35, 1
        %s810 = scalar_lea.vmem %s15, %s809
        %p811 = scmp.lt.s32.totalorder %s35, 1
        %s812 = scalar_select %p811, %s35, 1
        %s813 = scalar_lea.vmem %s16, %s812
        %p814 = scmp.lt.s32.totalorder %s35, 1
        %s815 = scalar_select %p814, %s35, 1
        %s816 = scalar_lea.vmem %s17, %s815
        %p818 = scmp.eq.s32.totalorder %s35, 0
        // Predicated region
        $region93: #{tpu_custom_call.1} parent=91 // pred_check
          %p819 = pneg %p818
        $region94: #{tpu_custom_call.1} parent=91 // pred_check_branch
          %821 = sbr.rel (%p819) target = $region96
        $region95: #{tpu_custom_call.1} parent=91 // pred_region
          %v822 = vld [vmem:[%s759] sm:$0xf]
          %v823 = vld [vmem:[%s759 + $0x4] sm:$0xf]
          %v824 = vld [vmem:[%s3] sm:$0xf]
          %v825 = vld [vmem:[%s3 + $0x4] sm:$0xf]
          %v826 = vld [vmem:[%s3 + $0x8] sm:$0xf]
          %v827 = vld [vmem:[%s3 + $0xc] sm:$0xf]
          %v828 = vld [vmem:[%s3 + $0x10] sm:$0xf]
          %v829 = vld [vmem:[%s3 + $0x14] sm:$0xf]
          %v830 = vld [vmem:[%s3 + $0x18] sm:$0xf]
          %v831 = vld [vmem:[%s3 + $0x1c] sm:$0xf]
          %v832 = vld [vmem:[%s3 + $0x20] sm:$0xf]
          %v833 = vld [vmem:[%s3 + $0x24] sm:$0xf]
          %v834 = vld [vmem:[%s3 + $0x28] sm:$0xf]
          %v835 = vld [vmem:[%s3 + $0x2c] sm:$0xf]
          %v836 = vld [vmem:[%s3 + $0x30] sm:$0xf]
          %v837 = vld [vmem:[%s3 + $0x34] sm:$0xf]
          %v838 = vld [vmem:[%s3 + $0x38] sm:$0xf]
          %v839 = vld [vmem:[%s3 + $0x3c] sm:$0xf]
          %v840 = vld [vmem:[%s4] sm:$0x1]
          %v842 = vlaneseq
          %v843 = vshrl.u32 %v842, 7
          %v844 = vsub.s32 0, %v843
          %v845 = vrot.slane %v840, %v844
          %v849 = vunpack.c.l.b16 %v822
          %v850 = vunpack.c.l.b16 %v823
          %v851 = vpack.c.b16 %v850, %v849
          %v869 = vunpack.c.l.b16 %v824
          %v870 = vunpack.c.l.b16 %v825
          %v871 = vunpack.c.l.b16 %v826
          %v872 = vunpack.c.l.b16 %v827
          %v873 = vunpack.c.l.b16 %v828
          %v874 = vunpack.c.l.b16 %v829
          %v875 = vunpack.c.l.b16 %v830
          %v876 = vunpack.c.l.b16 %v831
          %v877 = vunpack.c.l.b16 %v832
          %v878 = vunpack.c.l.b16 %v833
          %v879 = vunpack.c.l.b16 %v834
          %v880 = vunpack.c.l.b16 %v835
          %v881 = vunpack.c.l.b16 %v836
          %v882 = vunpack.c.l.b16 %v837
          %v883 = vunpack.c.l.b16 %v838
          %v884 = vunpack.c.l.b16 %v839
          %v885 = vpack.c.b16 %v870, %v869
          %v886 = vpack.c.b16 %v872, %v871
          %v887 = vpack.c.b16 %v874, %v873
          %v888 = vpack.c.b16 %v876, %v875
          %v889 = vpack.c.b16 %v878, %v877
          %v890 = vpack.c.b16 %v880, %v879
          %v891 = vpack.c.b16 %v882, %v881
          %v892 = vpack.c.b16 %v884, %v883
          %901 = vmatprep.subr.bf16.mxu0 0
          %902 = vmatpush1.bf16.msra.mxu0 %v885
          %903 = vmatprep.subr.bf16.mxu0 0
          %904 = vmatpush1.bf16.msra.mxu0 %v886
          %905 = vmatprep.subr.bf16.mxu0 0
          %906 = vmatpush1.bf16.msra.mxu0 %v887
          %907 = vmatprep.subr.bf16.mxu0 0
          %908 = vmatpush1.bf16.msra.mxu0 %v888
          %909 = vmatprep.subr.bf16.mxu0 0
          %910 = vmatpush1.bf16.msra.mxu0 %v889
          %911 = vmatprep.subr.bf16.mxu0 0
          %912 = vmatpush1.bf16.msra.mxu0 %v890
          %913 = vmatprep.subr.bf16.mxu0 0
          %914 = vmatpush1.bf16.msra.mxu0 %v891
          %915 = vmatprep.subr.bf16.mxu0 0
          %916 = vmatpush1.bf16.msra.mxu0 %v892
          %917 = vmatprep.subr.bf16.mxu0 0
          %918 = vmatpush1.bf16.msra.mxu0 0
          %919 = vmatprep.subr.bf16.mxu0 0
          %920 = vmatpush1.bf16.msra.mxu0 0
          %921 = vmatprep.subr.bf16.mxu0 0
          %922 = vmatpush1.bf16.msra.mxu0 0
          %923 = vmatprep.subr.bf16.mxu0 0
          %924 = vmatpush1.bf16.msra.mxu0 0
          %925 = vmatprep.subr.bf16.mxu0 0
          %926 = vmatpush1.bf16.msra.mxu0 0
          %927 = vmatprep.subr.bf16.mxu0 0
          %928 = vmatpush1.bf16.msra.mxu0 0
          %929 = vmatprep.subr.bf16.mxu0 0
          %930 = vmatpush1.bf16.msra.mxu0 0
          %931 = vmatprep.subr.bf16.mxu0 0
          %932 = vmatpush1.bf16.msra.mxu0 0
          %933 = vmatprep.mubr.bf16.mxu0 0
          %934 = vmatmul.mubr.bf16.gmra.mrb[0].mxu0 %v851
          %v935 = vpop.f32.mrb[0].mxu0
          %v936 = vadd.f32 %v845, %v935
          %v937 = vpop.f32.mrb[0].mxu0
          %v938 = vpop.f32.mrb[0].mxu0
          %v939 = vadd.f32 %v845, %v938
          %v940 = vpop.f32.mrb[0].mxu0
          %941 = vdwg.mxu0
          %v942 = vld [vmem:[%s765] sm:$0xff]
          %v943 = vld [vmem:[%s765 + $0x8] sm:$0xff]
          %v944 = vlaneseq
          %v945 = vand.u32 %v944, 127
          %946 = vset.pattern.permute.xlu0 0
          %947 = vperm.xlu0 %946, %v942
          %v948 = vpop.permute.xlu0 %947
          %949 = vset.pattern.permute.xlu0 0
          %950 = vperm.xlu0 %949, %v943
          %v951 = vpop.permute.xlu0 %950
          %vm952 = vcmp.eq.s32.totalorder %v948, %v945
          %vm953 = vcmp.eq.s32.totalorder %v951, %v945
          %v954 = vsel %vm952, 1, 0
          %v955 = vsel %vm953, 1, 0
          %v956 = vcvt.s32.f32 %v954
          %v957 = vcvt.s32.f32 %v955
          %v958 = vld [vmem:[%s5] sm:$0xff]
          %v959 = vld [vmem:[%s5 + $0x8] sm:$0xff]
          %vm960 = vcmask 130048
          %v962 = vsel %vm960, %v956, 0
          %v965 = vsel %vm960, %v957, 0
          %967 = vmatprep.subr.mxu0 0.0
          %968 = vmatpush1.msra.mxu0 %v958
          %969 = vmatprep.subr.mxu0 0.0
          %970 = vmatpush1.msra.mxu0 %v959
          %971 = vmatprep.subr.mxu0 0.0
          %972 = vmatpush1.msra.mxu0 0.0
          %973 = vmatprep.subr.mxu0 0.0
          %974 = vmatpush1.msra.mxu0 0.0
          %975 = vmatprep.subr.mxu0 0.0
          %976 = vmatpush1.msra.mxu0 0.0
          %977 = vmatprep.subr.mxu0 0.0
          %978 = vmatpush1.msra.mxu0 0.0
          %979 = vmatprep.subr.mxu0 0.0
          %980 = vmatpush1.msra.mxu0 0.0
          %981 = vmatprep.subr.mxu0 0.0
          %982 = vmatpush1.msra.mxu0 0.0
          %983 = vmatprep.subr.mxu0 0.0
          %984 = vmatpush1.msra.mxu0 0.0
          %985 = vmatprep.subr.mxu0 0.0
          %986 = vmatpush1.msra.mxu0 0.0
          %987 = vmatprep.subr.mxu0 0.0
          %988 = vmatpush1.msra.mxu0 0.0
          %989 = vmatprep.subr.mxu0 0.0
          %990 = vmatpush1.msra.mxu0 0.0
          %991 = vmatprep.subr.mxu0 0.0
          %992 = vmatpush1.msra.mxu0 0.0
          %993 = vmatprep.subr.mxu0 0.0
          %994 = vmatpush1.msra.mxu0 0.0
          %995 = vmatprep.subr.mxu0 0.0
          %996 = vmatpush1.msra.mxu0 0.0
          %997 = vmatprep.subr.mxu0 0.0
          %998 = vmatpush1.msra.mxu0 0.0
          %999 = vmatprep.subr.mxu0 0.0
          %1000 = vmatpush1.msra.mxu0 0.0
          %1001 = vmatprep.subr.mxu0 0.0
          %1002 = vmatpush1.msra.mxu0 0.0
          %1003 = vmatprep.subr.mxu0 0.0
          %1004 = vmatpush1.msra.mxu0 0.0
          %1005 = vmatprep.subr.mxu0 0.0
          %1006 = vmatpush1.msra.mxu0 0.0
          %1007 = vmatprep.subr.mxu0 0.0
          %1008 = vmatpush1.msra.mxu0 0.0
          %1009 = vmatprep.subr.mxu0 0.0
          %1010 = vmatpush1.msra.mxu0 0.0
          %1011 = vmatprep.subr.mxu0 0.0
          %1012 = vmatpush1.msra.mxu0 0.0
          %1013 = vmatprep.subr.mxu0 0.0
          %1014 = vmatpush1.msra.mxu0 0.0
          %1015 = vmatprep.subr.mxu0 0.0
          %1016 = vmatpush1.msra.mxu0 0.0
          %1017 = vmatprep.subr.mxu0 0.0
          %1018 = vmatpush1.msra.mxu0 0.0
          %1019 = vmatprep.subr.mxu0 0.0
          %1020 = vmatpush1.msra.mxu0 0.0
          %1021 = vmatprep.subr.mxu0 0.0
          %1022 = vmatpush1.msra.mxu0 0.0
          %1023 = vmatprep.subr.mxu0 0.0
          %1024 = vmatpush1.msra.mxu0 0.0
          %1025 = vmatprep.subr.mxu0 0.0
          %1026 = vmatpush1.msra.mxu0 0.0
          %1027 = vmatprep.subr.mxu0 0.0
          %1028 = vmatpush1.msra.mxu0 0.0
          %1029 = vmatprep.subr.mxu0 0.0
          %1030 = vmatpush1.msra.mxu0 0.0
          %1031 = vmatprep.mubr.f32.mxu0 0.0
          %1032 = vmatmul.mubr.f32.gmra.mrb[0].mxu0 %v962
          %v1033 = vpop.f32.mrb[0].mxu0
          %v1034 = vadd.f32 0.0, %v1033
          %v1035 = vpop.f32.mrb[0].mxu0
          %1036 = vmatprep.mubr.f32.mxu0 0.0
          %1037 = vmatmul.mubr.f32.gmra.mrb[0].mxu0 %v965
          %v1038 = vpop.f32.mrb[0].mxu0
          %v1039 = vadd.f32 0.0, %v1038
          %v1040 = vpop.f32.mrb[0].mxu0
          %1041 = vdwg.mxu0
          %v1042 = vadd.f32 %v936, %v1034
          %v1043 = vadd.f32 %v939, %v1039
          %vm1044 = vcmask 261120
          %1045 = vst.msk [vmem:[#allocation2] sm:$0xff] %vm1044, %v1042
          %1046 = vst.msk [vmem:[#allocation2 + $0x8] sm:$0xff] %vm1044, %v1043
        $region96: #{tpu_custom_call.1} parent=91 // pred_fallthru
          _
        %v1047 = vld [vmem:[#allocation2] sm:$0xff]
        %v1048 = vld [vmem:[#allocation2 + $0x8] sm:$0xff]
        %v1049 = vpack.c.bf16 %v1048, %v1047
        %v1050 = vld [vmem:[%s776] sm:$0xf]
        %v1051 = vld [vmem:[%s776 + $0x4] sm:$0xf]
        %v1052 = vld [vmem:[%s776 + $0x8] sm:$0xf]
        %v1053 = vld [vmem:[%s776 + $0xc] sm:$0xf]
        %v1054 = vld [vmem:[%s779] sm:$0x1]
        %v1056 = vlaneseq
        %v1057 = vshrl.u32 %v1056, 7
        %v1058 = vsub.s32 0, %v1057
        %v1059 = vrot.slane %v1054, %v1058
        %v1065 = vunpack.c.l.b16 %v1050
        %v1066 = vunpack.c.l.b16 %v1051
        %v1067 = vunpack.c.l.b16 %v1052
        %v1068 = vunpack.c.l.b16 %v1053
        %v1069 = vpack.c.b16 %v1066, %v1065
        %v1070 = vpack.c.b16 %v1068, %v1067
        %vm1073 = vcmask 261120
        %v1075 = vsel %vm1073, %v1049, 0
        %1077 = vmatprep.subr.bf16.mxu0 0
        %1078 = vmatpush1.bf16.msra.mxu0 %v1069
        %1079 = vmatprep.subr.bf16.mxu0 0
        %1080 = vmatpush1.bf16.msra.mxu0 %v1070
        %1081 = vmatprep.subr.bf16.mxu0 0
        %1082 = vmatpush1.bf16.msra.mxu0 0
        %1083 = vmatprep.subr.bf16.mxu0 0
        %1084 = vmatpush1.bf16.msra.mxu0 0
        %1085 = vmatprep.subr.bf16.mxu0 0
        %1086 = vmatpush1.bf16.msra.mxu0 0
        %1087 = vmatprep.subr.bf16.mxu0 0
        %1088 = vmatpush1.bf16.msra.mxu0 0
        %1089 = vmatprep.subr.bf16.mxu0 0
        %1090 = vmatpush1.bf16.msra.mxu0 0
        %1091 = vmatprep.subr.bf16.mxu0 0
        %1092 = vmatpush1.bf16.msra.mxu0 0
        %1093 = vmatprep.subr.bf16.mxu0 0
        %1094 = vmatpush1.bf16.msra.mxu0 0
        %1095 = vmatprep.subr.bf16.mxu0 0
        %1096 = vmatpush1.bf16.msra.mxu0 0
        %1097 = vmatprep.subr.bf16.mxu0 0
        %1098 = vmatpush1.bf16.msra.mxu0 0
        %1099 = vmatprep.subr.bf16.mxu0 0
        %1100 = vmatpush1.bf16.msra.mxu0 0
        %1101 = vmatprep.subr.bf16.mxu0 0
        %1102 = vmatpush1.bf16.msra.mxu0 0
        %1103 = vmatprep.subr.bf16.mxu0 0
        %1104 = vmatpush1.bf16.msra.mxu0 0
        %1105 = vmatprep.subr.bf16.mxu0 0
        %1106 = vmatpush1.bf16.msra.mxu0 0
        %1107 = vmatprep.subr.bf16.mxu0 0
        %1108 = vmatpush1.bf16.msra.mxu0 0
        %1109 = vmatprep.mubr.bf16.mxu0 0
        %1110 = vmatmul.mubr.bf16.gmra.mrb[0].mxu0 %v1075
        %v1111 = vpop.f32.mrb[0].mxu0
        %v1112 = vadd.f32 %v1059, %v1111
        %v1113 = vpop.f32.mrb[0].mxu0
        %v1114 = vpop.f32.mrb[0].mxu0
        %v1115 = vadd.f32 %v1059, %v1114
        %v1116 = vpop.f32.mrb[0].mxu0
        %1117 = vdwg.mxu0
        %v1118 = vpack.c.bf16 %v1115, %v1112
        %v1120 = vunpack.c.l.b16 %v1118
        %v1121 = vunpack.c.h.b16 %v1118
        %v1122 = vpack.c.b16 %v1120, %v1120
        %v1123 = vpack.c.b16 %v1121, %v1121
        %1124 = vrot.lane.b32.xlu0 %v1122, 96
        %v1125 = vpop.permute.xlu0 %1124
        %vm1126 = vcmask 64512
        %v1128 = vsel %vm1126, %v1122, 0
        %v1131 = vsel %vm1126, %v1125, 0
        %1133 = vmatprep.subr.bf16.mxu0 0
        %1134 = vmatpush1.bf16.xpose.msra.mxu0 %v1131
        %1135 = vmatprep.subr.bf16.mxu0 0
        %1136 = vmatpush1.bf16.xpose.msra.mxu0 0
        %1137 = vmatprep.subr.bf16.mxu0 0
        %1138 = vmatpush1.bf16.xpose.msra.mxu0 0
        %1139 = vmatprep.subr.bf16.mxu0 0
        %1140 = vmatpush1.bf16.xpose.msra.mxu0 0
        %1141 = vmatprep.subr.bf16.mxu0 0
        %1142 = vmatpush1.bf16.xpose.msra.mxu0 0
        %1143 = vmatprep.subr.bf16.mxu0 0
        %1144 = vmatpush1.bf16.xpose.msra.mxu0 0
        %1145 = vmatprep.subr.bf16.mxu0 0
        %1146 = vmatpush1.bf16.xpose.msra.mxu0 0
        %1147 = vmatprep.subr.bf16.mxu0 0
        %1148 = vmatpush1.bf16.xpose.msra.mxu0 0
        %1149 = vmatprep.subr.bf16.mxu0 0
        %1150 = vmatpush1.bf16.xpose.msra.mxu0 0
        %1151 = vmatprep.subr.bf16.mxu0 0
        %1152 = vmatpush1.bf16.xpose.msra.mxu0 0
        %1153 = vmatprep.subr.bf16.mxu0 0
        %1154 = vmatpush1.bf16.xpose.msra.mxu0 0
        %1155 = vmatprep.subr.bf16.mxu0 0
        %1156 = vmatpush1.bf16.xpose.msra.mxu0 0
        %1157 = vmatprep.subr.bf16.mxu0 0
        %1158 = vmatpush1.bf16.xpose.msra.mxu0 0
        %1159 = vmatprep.subr.bf16.mxu0 0
        %1160 = vmatpush1.bf16.xpose.msra.mxu0 0
        %1161 = vmatprep.subr.bf16.mxu0 0
        %1162 = vmatpush1.bf16.xpose.msra.mxu0 0
        %1163 = vmatprep.subr.bf16.mxu0 0
        %1164 = vmatpush1.bf16.xpose.msra.mxu0 0
        %1165 = vmatprep.mubr.bf16.mxu0 0
        %1166 = vmatmul.mubr.bf16.gmra.mrb[0].mxu0 %v1128
        %v1167 = vpop.f32.mrb[0].mxu0
        %v1168 = vadd.f32 0.0, %v1167
        %v1169 = vpop.f32.mrb[0].mxu0
        %v1170 = vpop.f32.mrb[0].mxu0
        %v1171 = vpop.f32.mrb[0].mxu0
        %1172 = vdwg.mxu0
        %1173 = vrot.lane.b32.xlu0 %v1123, 96
        %v1174 = vpop.permute.xlu0 %1173
        %v1176 = vsel %vm1126, %v1123, 0
        %v1179 = vsel %vm1126, %v1174, 0
        %1181 = vmatprep.subr.bf16.mxu0 0
        %1182 = vmatpush1.bf16.xpose.msra.mxu0 %v1179
        %1183 = vmatprep.subr.bf16.mxu0 0
        %1184 = vmatpush1.bf16.xpose.msra.mxu0 0
        %1185 = vmatprep.subr.bf16.mxu0 0
        %1186 = vmatpush1.bf16.xpose.msra.mxu0 0
        %1187 = vmatprep.subr.bf16.mxu0 0
        %1188 = vmatpush1.bf16.xpose.msra.mxu0 0
        %1189 = vmatprep.subr.bf16.mxu0 0
        %1190 = vmatpush1.bf16.xpose.msra.mxu0 0
        %1191 = vmatprep.subr.bf16.mxu0 0
        %1192 = vmatpush1.bf16.xpose.msra.mxu0 0
        %1193 = vmatprep.subr.bf16.mxu0 0
        %1194 = vmatpush1.bf16.xpose.msra.mxu0 0
        %1195 = vmatprep.subr.bf16.mxu0 0
        %1196 = vmatpush1.bf16.xpose.msra.mxu0 0
        %1197 = vmatprep.subr.bf16.mxu0 0
        %1198 = vmatpush1.bf16.xpose.msra.mxu0 0
        %1199 = vmatprep.subr.bf16.mxu0 0
        %1200 = vmatpush1.bf16.xpose.msra.mxu0 0
        %1201 = vmatprep.subr.bf16.mxu0 0
        %1202 = vmatpush1.bf16.xpose.msra.mxu0 0
        %1203 = vmatprep.subr.bf16.mxu0 0
        %1204 = vmatpush1.bf16.xpose.msra.mxu0 0
        %1205 = vmatprep.subr.bf16.mxu0 0
        %1206 = vmatpush1.bf16.xpose.msra.mxu0 0
        %1207 = vmatprep.subr.bf16.mxu0 0
        %1208 = vmatpush1.bf16.xpose.msra.mxu0 0
        %1209 = vmatprep.subr.bf16.mxu0 0
        %1210 = vmatpush1.bf16.xpose.msra.mxu0 0
        %1211 = vmatprep.subr.bf16.mxu0 0
        %1212 = vmatpush1.bf16.xpose.msra.mxu0 0
        %1213 = vmatprep.mubr.bf16.mxu0 0
        %1214 = vmatmul.mubr.bf16.gmra.mrb[0].mxu0 %v1176
        %v1215 = vpop.f32.mrb[0].mxu0
        %v1216 = vadd.f32 0.0, %v1215
        %v1217 = vpop.f32.mrb[0].mxu0
        %v1218 = vpop.f32.mrb[0].mxu0
        %v1219 = vpop.f32.mrb[0].mxu0
        %1220 = vdwg.mxu0
        %v1221 = vmul.f32 %v1168, 0.35355338
        %v1222 = vmul.f32 %v1216, 0.35355338
        %v1223 = vsel %vm1126, %v1221, -inf
        %1224 = vmax.xlane.f32.xlu0 %v1223
        %v1225 = vpop.xlane.xlu0 %1224
        %v1226 = vsel %vm1126, %v1222, -inf
        %1227 = vmax.xlane.f32.xlu0 %v1226
        %v1228 = vpop.xlane.xlu0 %1227
        %v1229 = vsub.f32 %v1221, %v1225
        %v1230 = vsub.f32 %v1222, %v1228
        %v1231 = vmul.f32 %v1229, 1.442695
        %v1232 = vpow.pop %v1231
        %v1233 = vmul.f32 %v1230, 1.442695
        %v1234 = vpow.pop %v1233
        %v1235 = vsel %vm1126, %v1232, 0.0
        %1236 = vadd.xlane.f32.xlu0 %v1235
        %v1237 = vpop.xlane.xlu0 %1236
        %v1238 = vsel %vm1126, %v1234, 0.0
        %1239 = vadd.xlane.f32.xlu0 %v1238
        %v1240 = vpop.xlane.xlu0 %1239
        %v1241 = vrcp.pop %v1237
        %v1242 = vrcp.pop %v1240
        %v1243 = vmul.f32 %v1232, %v1241
        %v1244 = vmul.f32 %v1234, %v1242
        %v1245 = vpack.c.bf16 %v1243, %v1243
        %v1246 = vpack.c.bf16 %v1244, %v1244
        %1247 = vrot.lane.b32.xlu0 %v1122, 64
        %v1248 = vpop.permute.xlu0 %1247
        %v1250 = vsel %vm1126, %v1245, 0
        %vm1252 = vcmask 1043456
        %v1254 = vsel %vm1252, %v1248, 0
        %1256 = vmatprep.subr.bf16.mxu0 0
        %1257 = vmatpush1.bf16.msra.mxu0 %v1254
        %1258 = vmatprep.subr.bf16.mxu0 0
        %1259 = vmatpush1.bf16.msra.mxu0 0
        %1260 = vmatprep.subr.bf16.mxu0 0
        %1261 = vmatpush1.bf16.msra.mxu0 0
        %1262 = vmatprep.subr.bf16.mxu0 0
        %1263 = vmatpush1.bf16.msra.mxu0 0
        %1264 = vmatprep.subr.bf16.mxu0 0
        %1265 = vmatpush1.bf16.msra.mxu0 0
        %1266 = vmatprep.subr.bf16.mxu0 0
        %1267 = vmatpush1.bf16.msra.mxu0 0
        %1268 = vmatprep.subr.bf16.mxu0 0
        %1269 = vmatpush1.bf16.msra.mxu0 0
        %1270 = vmatprep.subr.bf16.mxu0 0
        %1271 = vmatpush1.bf16.msra.mxu0 0
        %1272 = vmatprep.subr.bf16.mxu0 0
        %1273 = vmatpush1.bf16.msra.mxu0 0
        %1274 = vmatprep.subr.bf16.mxu0 0
        %1275 = vmatpush1.bf16.msra.mxu0 0
        %1276 = vmatprep.subr.bf16.mxu0 0
        %1277 = vmatpush1.bf16.msra.mxu0 0
        %1278 = vmatprep.subr.bf16.mxu0 0
        %1279 = vmatpush1.bf16.msra.mxu0 0
        %1280 = vmatprep.subr.bf16.mxu0 0
        %1281 = vmatpush1.bf16.msra.mxu0 0
        %1282 = vmatprep.subr.bf16.mxu0 0
        %1283 = vmatpush1.bf16.msra.mxu0 0
        %1284 = vmatprep.subr.bf16.mxu0 0
        %1285 = vmatpush1.bf16.msra.mxu0 0
        %1286 = vmatprep.subr.bf16.mxu0 0
        %1287 = vmatpush1.bf16.msra.mxu0 0
        %1288 = vmatprep.mubr.bf16.mxu0 0
        %1289 = vmatmul.mubr.bf16.gmra.mrb[0].mxu0 %v1250
        %v1290 = vpop.f32.mrb[0].mxu0
        %v1291 = vadd.f32 0.0, %v1290
        %v1292 = vpop.f32.mrb[0].mxu0
        %v1293 = vpop.f32.mrb[0].mxu0
        %v1294 = vpop.f32.mrb[0].mxu0
        %1295 = vdwg.mxu0
        %1296 = vrot.lane.b32.xlu0 %v1123, 64
        %v1297 = vpop.permute.xlu0 %1296
        %v1299 = vsel %vm1126, %v1246, 0
        %v1302 = vsel %vm1252, %v1297, 0
        %1304 = vmatprep.subr.bf16.mxu0 0
        %1305 = vmatpush1.bf16.msra.mxu0 %v1302
        %1306 = vmatprep.subr.bf16.mxu0 0
        %1307 = vmatpush1.bf16.msra.mxu0 0
        %1308 = vmatprep.subr.bf16.mxu0 0
        %1309 = vmatpush1.bf16.msra.mxu0 0
        %1310 = vmatprep.subr.bf16.mxu0 0
        %1311 = vmatpush1.bf16.msra.mxu0 0
        %1312 = vmatprep.subr.bf16.mxu0 0
        %1313 = vmatpush1.bf16.msra.mxu0 0
        %1314 = vmatprep.subr.bf16.mxu0 0
        %1315 = vmatpush1.bf16.msra.mxu0 0
        %1316 = vmatprep.subr.bf16.mxu0 0
        %1317 = vmatpush1.bf16.msra.mxu0 0
        %1318 = vmatprep.subr.bf16.mxu0 0
        %1319 = vmatpush1.bf16.msra.mxu0 0
        %1320 = vmatprep.subr.bf16.mxu0 0
        %1321 = vmatpush1.bf16.msra.mxu0 0
        %1322 = vmatprep.subr.bf16.mxu0 0
        %1323 = vmatpush1.bf16.msra.mxu0 0
        %1324 = vmatprep.subr.bf16.mxu0 0
        %1325 = vmatpush1.bf16.msra.mxu0 0
        %1326 = vmatprep.subr.bf16.mxu0 0
        %1327 = vmatpush1.bf16.msra.mxu0 0
        %1328 = vmatprep.subr.bf16.mxu0 0
        %1329 = vmatpush1.bf16.msra.mxu0 0
        %1330 = vmatprep.subr.bf16.mxu0 0
        %1331 = vmatpush1.bf16.msra.mxu0 0
        %1332 = vmatprep.subr.bf16.mxu0 0
        %1333 = vmatpush1.bf16.msra.mxu0 0
        %1334 = vmatprep.subr.bf16.mxu0 0
        %1335 = vmatpush1.bf16.msra.mxu0 0
        %1336 = vmatprep.mubr.bf16.mxu0 0
        %1337 = vmatmul.mubr.bf16.gmra.mrb[0].mxu0 %v1299
        %v1338 = vpop.f32.mrb[0].mxu0
        %v1339 = vadd.f32 0.0, %v1338
        %v1340 = vpop.f32.mrb[0].mxu0
        %v1341 = vpop.f32.mrb[0].mxu0
        %v1342 = vpop.f32.mrb[0].mxu0
        %1343 = vdwg.mxu0
        %v1344 = vpack.c.bf16 %v1291, %v1291
        %v1345 = vpack.c.bf16 %v1339, %v1339
        %1346 = vrot.lane.b32.xlu0 %v1122, 120
        %v1347 = vpop.permute.xlu0 %1346
        %1348 = vrot.lane.b32.xlu0 %v1122, 88
        %v1349 = vpop.permute.xlu0 %1348
        %v1351 = vsel %vm1126, %v1347, 0
        %v1354 = vsel %vm1126, %v1349, 0
        %1356 = vmatprep.subr.bf16.mxu0 0
        %1357 = vmatpush1.bf16.xpose.msra.mxu0 %v1354
        %1358 = vmatprep.subr.bf16.mxu0 0
        %1359 = vmatpush1.bf16.xpose.msra.mxu0 0
        %1360 = vmatprep.subr.bf16.mxu0 0
        %1361 = vmatpush1.bf16.xpose.msra.mxu0 0
        %1362 = vmatprep.subr.bf16.mxu0 0
        %1363 = vmatpush1.bf16.xpose.msra.mxu0 0
        %1364 = vmatprep.subr.bf16.mxu0 0
        %1365 = vmatpush1.bf16.xpose.msra.mxu0 0
        %1366 = vmatprep.subr.bf16.mxu0 0
        %1367 = vmatpush1.bf16.xpose.msra.mxu0 0
        %1368 = vmatprep.subr.bf16.mxu0 0
        %1369 = vmatpush1.bf16.xpose.msra.mxu0 0
        %1370 = vmatprep.subr.bf16.mxu0 0
        %1371 = vmatpush1.bf16.xpose.msra.mxu0 0
        %1372 = vmatprep.subr.bf16.mxu0 0
        %1373 = vmatpush1.bf16.xpose.msra.mxu0 0
        %1374 = vmatprep.subr.bf16.mxu0 0
        %1375 = vmatpush1.bf16.xpose.msra.mxu0 0
        %1376 = vmatprep.subr.bf16.mxu0 0
        %1377 = vmatpush1.bf16.xpose.msra.mxu0 0
        %1378 = vmatprep.subr.bf16.mxu0 0
        %1379 = vmatpush1.bf16.xpose.msra.mxu0 0
        %1380 = vmatprep.subr.bf16.mxu0 0
        %1381 = vmatpush1.bf16.xpose.msra.mxu0 0
        %1382 = vmatprep.subr.bf16.mxu0 0
        %1383 = vmatpush1.bf16.xpose.msra.mxu0 0
        %1384 = vmatprep.subr.bf16.mxu0 0
        %1385 = vmatpush1.bf16.xpose.msra.mxu0 0
        %1386 = vmatprep.subr.bf16.mxu0 0
        %1387 = vmatpush1.bf16.xpose.msra.mxu0 0
        %1388 = vmatprep.mubr.bf16.mxu0 0
        %1389 = vmatmul.mubr.bf16.gmra.mrb[0].mxu0 %v1351
        %v1390 = vpop.f32.mrb[0].mxu0
        %v1391 = vadd.f32 0.0, %v1390
        %v1392 = vpop.f32.mrb[0].mxu0
        %v1393 = vpop.f32.mrb[0].mxu0
        %v1394 = vpop.f32.mrb[0].mxu0
        %1395 = vdwg.mxu0
        %1396 = vrot.lane.b32.xlu0 %v1123, 120
        %v1397 = vpop.permute.xlu0 %1396
        %1398 = vrot.lane.b32.xlu0 %v1123, 88
        %v1399 = vpop.permute.xlu0 %1398
        %v1401 = vsel %vm1126, %v1397, 0
        %v1404 = vsel %vm1126, %v1399, 0
        %1406 = vmatprep.subr.bf16.mxu0 0
        %1407 = vmatpush1.bf16.xpose.msra.mxu0 %v1404
        %1408 = vmatprep.subr.bf16.mxu0 0
        %1409 = vmatpush1.bf16.xpose.msra.mxu0 0
        %1410 = vmatprep.subr.bf16.mxu0 0
        %1411 = vmatpush1.bf16.xpose.msra.mxu0 0
        %1412 = vmatprep.subr.bf16.mxu0 0
        %1413 = vmatpush1.bf16.xpose.msra.mxu0 0
        %1414 = vmatprep.subr.bf16.mxu0 0
        %1415 = vmatpush1.bf16.xpose.msra.mxu0 0
        %1416 = vmatprep.subr.bf16.mxu0 0
        %1417 = vmatpush1.bf16.xpose.msra.mxu0 0
        %1418 = vmatprep.subr.bf16.mxu0 0
        %1419 = vmatpush1.bf16.xpose.msra.mxu0 0
        %1420 = vmatprep.subr.bf16.mxu0 0
        %1421 = vmatpush1.bf16.xpose.msra.mxu0 0
        %1422 = vmatprep.subr.bf16.mxu0 0
        %1423 = vmatpush1.bf16.xpose.msra.mxu0 0
        %1424 = vmatprep.subr.bf16.mxu0 0
        %1425 = vmatpush1.bf16.xpose.msra.mxu0 0
        %1426 = vmatprep.subr.bf16.mxu0 0
        %1427 = vmatpush1.bf16.xpose.msra.mxu0 0
        %1428 = vmatprep.subr.bf16.mxu0 0
        %1429 = vmatpush1.bf16.xpose.msra.mxu0 0
        %1430 = vmatprep.subr.bf16.mxu0 0
        %1431 = vmatpush1.bf16.xpose.msra.mxu0 0
        %1432 = vmatprep.subr.bf16.mxu0 0
        %1433 = vmatpush1.bf16.xpose.msra.mxu0 0
        %1434 = vmatprep.subr.bf16.mxu0 0
        %1435 = vmatpush1.bf16.xpose.msra.mxu0 0
        %1436 = vmatprep.subr.bf16.mxu0 0
        %1437 = vmatpush1.bf16.xpose.msra.mxu0 0
        %1438 = vmatprep.mubr.bf16.mxu0 0
        %1439 = vmatmul.mubr.bf16.gmra.mrb[0].mxu0 %v1401
        %v1440 = vpop.f32.mrb[0].mxu0
        %v1441 = vadd.f32 0.0, %v1440
        %v1442 = vpop.f32.mrb[0].mxu0
        %v1443 = vpop.f32.mrb[0].mxu0
        %v1444 = vpop.f32.mrb[0].mxu0
        %1445 = vdwg.mxu0
        %v1446 = vmul.f32 %v1391, 0.35355338
        %v1447 = vmul.f32 %v1441, 0.35355338
        %v1448 = vsel %vm1126, %v1446, -inf
        %1449 = vmax.xlane.f32.xlu0 %v1448
        %v1450 = vpop.xlane.xlu0 %1449
        %v1451 = vsel %vm1126, %v1447, -inf
        %1452 = vmax.xlane.f32.xlu0 %v1451
        %v1453 = vpop.xlane.xlu0 %1452
        %v1454 = vsub.f32 %v1446, %v1450
        %v1455 = vsub.f32 %v1447, %v1453
        %v1456 = vmul.f32 %v1454, 1.442695
        %v1457 = vpow.pop %v1456
        %v1458 = vmul.f32 %v1455, 1.442695
        %v1459 = vpow.pop %v1458
        %v1460 = vsel %vm1126, %v1457, 0.0
        %1461 = vadd.xlane.f32.xlu0 %v1460
        %v1462 = vpop.xlane.xlu0 %1461
        %v1463 = vsel %vm1126, %v1459, 0.0
        %1464 = vadd.xlane.f32.xlu0 %v1463
        %v1465 = vpop.xlane.xlu0 %1464
        %v1466 = vrcp.pop %v1462
        %v1467 = vrcp.pop %v1465
        %v1468 = vmul.f32 %v1457, %v1466
        %v1469 = vmul.f32 %v1459, %v1467
        %v1470 = vpack.c.bf16 %v1468, %v1468
        %v1471 = vpack.c.bf16 %v1469, %v1469
        %1472 = vrot.lane.b32.xlu0 %v1122, 56
        %v1473 = vpop.permute.xlu0 %1472
        %v1475 = vsel %vm1126, %v1470, 0
        %v1478 = vsel %vm1252, %v1473, 0
        %1480 = vmatprep.subr.bf16.mxu0 0
        %1481 = vmatpush1.bf16.msra.mxu0 %v1478
        %1482 = vmatprep.subr.bf16.mxu0 0
        %1483 = vmatpush1.bf16.msra.mxu0 0
        %1484 = vmatprep.subr.bf16.mxu0 0
        %1485 = vmatpush1.bf16.msra.mxu0 0
        %1486 = vmatprep.subr.bf16.mxu0 0
        %1487 = vmatpush1.bf16.msra.mxu0 0
        %1488 = vmatprep.subr.bf16.mxu0 0
        %1489 = vmatpush1.bf16.msra.mxu0 0
        %1490 = vmatprep.subr.bf16.mxu0 0
        %1491 = vmatpush1.bf16.msra.mxu0 0
        %1492 = vmatprep.subr.bf16.mxu0 0
        %1493 = vmatpush1.bf16.msra.mxu0 0
        %1494 = vmatprep.subr.bf16.mxu0 0
        %1495 = vmatpush1.bf16.msra.mxu0 0
        %1496 = vmatprep.subr.bf16.mxu0 0
        %1497 = vmatpush1.bf16.msra.mxu0 0
        %1498 = vmatprep.subr.bf16.mxu0 0
        %1499 = vmatpush1.bf16.msra.mxu0 0
        %1500 = vmatprep.subr.bf16.mxu0 0
        %1501 = vmatpush1.bf16.msra.mxu0 0
        %1502 = vmatprep.subr.bf16.mxu0 0
        %1503 = vmatpush1.bf16.msra.mxu0 0
        %1504 = vmatprep.subr.bf16.mxu0 0
        %1505 = vmatpush1.bf16.msra.mxu0 0
        %1506 = vmatprep.subr.bf16.mxu0 0
        %1507 = vmatpush1.bf16.msra.mxu0 0
        %1508 = vmatprep.subr.bf16.mxu0 0
        %1509 = vmatpush1.bf16.msra.mxu0 0
        %1510 = vmatprep.subr.bf16.mxu0 0
        %1511 = vmatpush1.bf16.msra.mxu0 0
        %1512 = vmatprep.mubr.bf16.mxu0 0
        %1513 = vmatmul.mubr.bf16.gmra.mrb[0].mxu0 %v1475
        %v1514 = vpop.f32.mrb[0].mxu0
        %v1515 = vadd.f32 0.0, %v1514
        %v1516 = vpop.f32.mrb[0].mxu0
        %v1517 = vpop.f32.mrb[0].mxu0
        %v1518 = vpop.f32.mrb[0].mxu0
        %1519 = vdwg.mxu0
        %1520 = vrot.lane.b32.xlu0 %v1123, 56
        %v1521 = vpop.permute.xlu0 %1520
        %v1523 = vsel %vm1126, %v1471, 0
        %v1526 = vsel %vm1252, %v1521, 0
        %1528 = vmatprep.subr.bf16.mxu0 0
        %1529 = vmatpush1.bf16.msra.mxu0 %v1526
        %1530 = vmatprep.subr.bf16.mxu0 0
        %1531 = vmatpush1.bf16.msra.mxu0 0
        %1532 = vmatprep.subr.bf16.mxu0 0
        %1533 = vmatpush1.bf16.msra.mxu0 0
        %1534 = vmatprep.subr.bf16.mxu0 0
        %1535 = vmatpush1.bf16.msra.mxu0 0
        %1536 = vmatprep.subr.bf16.mxu0 0
        %1537 = vmatpush1.bf16.msra.mxu0 0
        %1538 = vmatprep.subr.bf16.mxu0 0
        %1539 = vmatpush1.bf16.msra.mxu0 0
        %1540 = vmatprep.subr.bf16.mxu0 0
        %1541 = vmatpush1.bf16.msra.mxu0 0
        %1542 = vmatprep.subr.bf16.mxu0 0
        %1543 = vmatpush1.bf16.msra.mxu0 0
        %1544 = vmatprep.subr.bf16.mxu0 0
        %1545 = vmatpush1.bf16.msra.mxu0 0
        %1546 = vmatprep.subr.bf16.mxu0 0
        %1547 = vmatpush1.bf16.msra.mxu0 0
        %1548 = vmatprep.subr.bf16.mxu0 0
        %1549 = vmatpush1.bf16.msra.mxu0 0
        %1550 = vmatprep.subr.bf16.mxu0 0
        %1551 = vmatpush1.bf16.msra.mxu0 0
        %1552 = vmatprep.subr.bf16.mxu0 0
        %1553 = vmatpush1.bf16.msra.mxu0 0
        %1554 = vmatprep.subr.bf16.mxu0 0
        %1555 = vmatpush1.bf16.msra.mxu0 0
        %1556 = vmatprep.subr.bf16.mxu0 0
        %1557 = vmatpush1.bf16.msra.mxu0 0
        %1558 = vmatprep.subr.bf16.mxu0 0
        %1559 = vmatpush1.bf16.msra.mxu0 0
        %1560 = vmatprep.mubr.bf16.mxu0 0
        %1561 = vmatmul.mubr.bf16.gmra.mrb[0].mxu0 %v1523
        %v1562 = vpop.f32.mrb[0].mxu0
        %v1563 = vadd.f32 0.0, %v1562
        %v1564 = vpop.f32.mrb[0].mxu0
        %v1565 = vpop.f32.mrb[0].mxu0
        %v1566 = vpop.f32.mrb[0].mxu0
        %1567 = vdwg.mxu0
        %v1568 = vpack.c.bf16 %v1515, %v1515
        %v1569 = vpack.c.bf16 %v1563, %v1563
        %1570 = vrot.lane.b32.xlu0 %v1122, 112
        %v1571 = vpop.permute.xlu0 %1570
        %1572 = vrot.lane.b32.xlu0 %v1122, 80
        %v1573 = vpop.permute.xlu0 %1572
        %v1575 = vsel %vm1126, %v1571, 0
        %v1578 = vsel %vm1126, %v1573, 0
        %1580 = vmatprep.subr.bf16.mxu0 0
        %1581 = vmatpush1.bf16.xpose.msra.mxu0 %v1578
        %1582 = vmatprep.subr.bf16.mxu0 0
        %1583 = vmatpush1.bf16.xpose.msra.mxu0 0
        %1584 = vmatprep.subr.bf16.mxu0 0
        %1585 = vmatpush1.bf16.xpose.msra.mxu0 0
        %1586 = vmatprep.subr.bf16.mxu0 0
        %1587 = vmatpush1.bf16.xpose.msra.mxu0 0
        %1588 = vmatprep.subr.bf16.mxu0 0
        %1589 = vmatpush1.bf16.xpose.msra.mxu0 0
        %1590 = vmatprep.subr.bf16.mxu0 0
        %1591 = vmatpush1.bf16.xpose.msra.mxu0 0
        %1592 = vmatprep.subr.bf16.mxu0 0
        %1593 = vmatpush1.bf16.xpose.msra.mxu0 0
        %1594 = vmatprep.subr.bf16.mxu0 0
        %1595 = vmatpush1.bf16.xpose.msra.mxu0 0
        %1596 = vmatprep.subr.bf16.mxu0 0
        %1597 = vmatpush1.bf16.xpose.msra.mxu0 0
        %1598 = vmatprep.subr.bf16.mxu0 0
        %1599 = vmatpush1.bf16.xpose.msra.mxu0 0
        %1600 = vmatprep.subr.bf16.mxu0 0
        %1601 = vmatpush1.bf16.xpose.msra.mxu0 0
        %1602 = vmatprep.subr.bf16.mxu0 0
        %1603 = vmatpush1.bf16.xpose.msra.mxu0 0
        %1604 = vmatprep.subr.bf16.mxu0 0
        %1605 = vmatpush1.bf16.xpose.msra.mxu0 0
        %1606 = vmatprep.subr.bf16.mxu0 0
        %1607 = vmatpush1.bf16.xpose.msra.mxu0 0
        %1608 = vmatprep.subr.bf16.mxu0 0
        %1609 = vmatpush1.bf16.xpose.msra.mxu0 0
        %1610 = vmatprep.subr.bf16.mxu0 0
        %1611 = vmatpush1.bf16.xpose.msra.mxu0 0
        %1612 = vmatprep.mubr.bf16.mxu0 0
        %1613 = vmatmul.mubr.bf16.gmra.mrb[0].mxu0 %v1575
        %v1614 = vpop.f32.mrb[0].mxu0
        %v1615 = vadd.f32 0.0, %v1614
        %v1616 = vpop.f32.mrb[0].mxu0
        %v1617 = vpop.f32.mrb[0].mxu0
        %v1618 = vpop.f32.mrb[0].mxu0
        %1619 = vdwg.mxu0
        %1620 = vrot.lane.b32.xlu0 %v1123, 112
        %v1621 = vpop.permute.xlu0 %1620
        %1622 = vrot.lane.b32.xlu0 %v1123, 80
        %v1623 = vpop.permute.xlu0 %1622
        %v1625 = vsel %vm1126, %v1621, 0
        %v1628 = vsel %vm1126, %v1623, 0
        %1630 = vmatprep.subr.bf16.mxu0 0
        %1631 = vmatpush1.bf16.xpose.msra.mxu0 %v1628
        %1632 = vmatprep.subr.bf16.mxu0 0
        %1633 = vmatpush1.bf16.xpose.msra.mxu0 0
        %1634 = vmatprep.subr.bf16.mxu0 0
        %1635 = vmatpush1.bf16.xpose.msra.mxu0 0
        %1636 = vmatprep.subr.bf16.mxu0 0
        %1637 = vmatpush1.bf16.xpose.msra.mxu0 0
        %1638 = vmatprep.subr.bf16.mxu0 0
        %1639 = vmatpush1.bf16.xpose.msra.mxu0 0
        %1640 = vmatprep.subr.bf16.mxu0 0
        %1641 = vmatpush1.bf16.xpose.msra.mxu0 0
        %1642 = vmatprep.subr.bf16.mxu0 0
        %1643 = vmatpush1.bf16.xpose.msra.mxu0 0
        %1644 = vmatprep.subr.bf16.mxu0 0
        %1645 = vmatpush1.bf16.xpose.msra.mxu0 0
        %1646 = vmatprep.subr.bf16.mxu0 0
        %1647 = vmatpush1.bf16.xpose.msra.mxu0 0
        %1648 = vmatprep.subr.bf16.mxu0 0
        %1649 = vmatpush1.bf16.xpose.msra.mxu0 0
        %1650 = vmatprep.subr.bf16.mxu0 0
        %1651 = vmatpush1.bf16.xpose.msra.mxu0 0
        %1652 = vmatprep.subr.bf16.mxu0 0
        %1653 = vmatpush1.bf16.xpose.msra.mxu0 0
        %1654 = vmatprep.subr.bf16.mxu0 0
        %1655 = vmatpush1.bf16.xpose.msra.mxu0 0
        %1656 = vmatprep.subr.bf16.mxu0 0
        %1657 = vmatpush1.bf16.xpose.msra.mxu0 0
        %1658 = vmatprep.subr.bf16.mxu0 0
        %1659 = vmatpush1.bf16.xpose.msra.mxu0 0
        %1660 = vmatprep.subr.bf16.mxu0 0
        %1661 = vmatpush1.bf16.xpose.msra.mxu0 0
        %1662 = vmatprep.mubr.bf16.mxu0 0
        %1663 = vmatmul.mubr.bf16.gmra.mrb[0].mxu0 %v1625
        %v1664 = vpop.f32.mrb[0].mxu0
        %v1665 = vadd.f32 0.0, %v1664
        %v1666 = vpop.f32.mrb[0].mxu0
        %v1667 = vpop.f32.mrb[0].mxu0
        %v1668 = vpop.f32.mrb[0].mxu0
        %1669 = vdwg.mxu0
        %v1670 = vmul.f32 %v1615, 0.35355338
        %v1671 = vmul.f32 %v1665, 0.35355338
        %v1672 = vsel %vm1126, %v1670, -inf
        %1673 = vmax.xlane.f32.xlu0 %v1672
        %v1674 = vpop.xlane.xlu0 %1673
        %v1675 = vsel %vm1126, %v1671, -inf
        %1676 = vmax.xlane.f32.xlu0 %v1675
        %v1677 = vpop.xlane.xlu0 %1676
        %v1678 = vsub.f32 %v1670, %v1674
        %v1679 = vsub.f32 %v1671, %v1677
        %v1680 = vmul.f32 %v1678, 1.442695
        %v1681 = vpow.pop %v1680
        %v1682 = vmul.f32 %v1679, 1.442695
        %v1683 = vpow.pop %v1682
        %v1684 = vsel %vm1126, %v1681, 0.0
        %1685 = vadd.xlane.f32.xlu0 %v1684
        %v1686 = vpop.xlane.xlu0 %1685
        %v1687 = vsel %vm1126, %v1683, 0.0
        %1688 = vadd.xlane.f32.xlu0 %v1687
        %v1689 = vpop.xlane.xlu0 %1688
        %v1690 = vrcp.pop %v1686
        %v1691 = vrcp.pop %v1689
        %v1692 = vmul.f32 %v1681, %v1690
        %v1693 = vmul.f32 %v1683, %v1691
        %v1694 = vpack.c.bf16 %v1692, %v1692
        %v1695 = vpack.c.bf16 %v1693, %v1693
        %1696 = vrot.lane.b32.xlu0 %v1122, 48
        %v1697 = vpop.permute.xlu0 %1696
        %v1699 = vsel %vm1126, %v1694, 0
        %v1702 = vsel %vm1252, %v1697, 0
        %1704 = vmatprep.subr.bf16.mxu0 0
        %1705 = vmatpush1.bf16.msra.mxu0 %v1702
        %1706 = vmatprep.subr.bf16.mxu0 0
        %1707 = vmatpush1.bf16.msra.mxu0 0
        %1708 = vmatprep.subr.bf16.mxu0 0
        %1709 = vmatpush1.bf16.msra.mxu0 0
        %1710 = vmatprep.subr.bf16.mxu0 0
        %1711 = vmatpush1.bf16.msra.mxu0 0
        %1712 = vmatprep.subr.bf16.mxu0 0
        %1713 = vmatpush1.bf16.msra.mxu0 0
        %1714 = vmatprep.subr.bf16.mxu0 0
        %1715 = vmatpush1.bf16.msra.mxu0 0
        %1716 = vmatprep.subr.bf16.mxu0 0
        %1717 = vmatpush1.bf16.msra.mxu0 0
        %1718 = vmatprep.subr.bf16.mxu0 0
        %1719 = vmatpush1.bf16.msra.mxu0 0
        %1720 = vmatprep.subr.bf16.mxu0 0
        %1721 = vmatpush1.bf16.msra.mxu0 0
        %1722 = vmatprep.subr.bf16.mxu0 0
        %1723 = vmatpush1.bf16.msra.mxu0 0
        %1724 = vmatprep.subr.bf16.mxu0 0
        %1725 = vmatpush1.bf16.msra.mxu0 0
        %1726 = vmatprep.subr.bf16.mxu0 0
        %1727 = vmatpush1.bf16.msra.mxu0 0
        %1728 = vmatprep.subr.bf16.mxu0 0
        %1729 = vmatpush1.bf16.msra.mxu0 0
        %1730 = vmatprep.subr.bf16.mxu0 0
        %1731 = vmatpush1.bf16.msra.mxu0 0
        %1732 = vmatprep.subr.bf16.mxu0 0
        %1733 = vmatpush1.bf16.msra.mxu0 0
        %1734 = vmatprep.subr.bf16.mxu0 0
        %1735 = vmatpush1.bf16.msra.mxu0 0
        %1736 = vmatprep.mubr.bf16.mxu0 0
        %1737 = vmatmul.mubr.bf16.gmra.mrb[0].mxu0 %v1699
        %v1738 = vpop.f32.mrb[0].mxu0
        %v1739 = vadd.f32 0.0, %v1738
        %v1740 = vpop.f32.mrb[0].mxu0
        %v1741 = vpop.f32.mrb[0].mxu0
        %v1742 = vpop.f32.mrb[0].mxu0
        %1743 = vdwg.mxu0
        %1744 = vrot.lane.b32.xlu0 %v1123, 48
        %v1745 = vpop.permute.xlu0 %1744
        %v1747 = vsel %vm1126, %v1695, 0
        %v1750 = vsel %vm1252, %v1745, 0
        %1752 = vmatprep.subr.bf16.mxu0 0
        %1753 = vmatpush1.bf16.msra.mxu0 %v1750
        %1754 = vmatprep.subr.bf16.mxu0 0
        %1755 = vmatpush1.bf16.msra.mxu0 0
        %1756 = vmatprep.subr.bf16.mxu0 0
        %1757 = vmatpush1.bf16.msra.mxu0 0
        %1758 = vmatprep.subr.bf16.mxu0 0
        %1759 = vmatpush1.bf16.msra.mxu0 0
        %1760 = vmatprep.subr.bf16.mxu0 0
        %1761 = vmatpush1.bf16.msra.mxu0 0
        %1762 = vmatprep.subr.bf16.mxu0 0
        %1763 = vmatpush1.bf16.msra.mxu0 0
        %1764 = vmatprep.subr.bf16.mxu0 0
        %1765 = vmatpush1.bf16.msra.mxu0 0
        %1766 = vmatprep.subr.bf16.mxu0 0
        %1767 = vmatpush1.bf16.msra.mxu0 0
        %1768 = vmatprep.subr.bf16.mxu0 0
        %1769 = vmatpush1.bf16.msra.mxu0 0
        %1770 = vmatprep.subr.bf16.mxu0 0
        %1771 = vmatpush1.bf16.msra.mxu0 0
        %1772 = vmatprep.subr.bf16.mxu0 0
        %1773 = vmatpush1.bf16.msra.mxu0 0
        %1774 = vmatprep.subr.bf16.mxu0 0
        %1775 = vmatpush1.bf16.msra.mxu0 0
        %1776 = vmatprep.subr.bf16.mxu0 0
        %1777 = vmatpush1.bf16.msra.mxu0 0
        %1778 = vmatprep.subr.bf16.mxu0 0
        %1779 = vmatpush1.bf16.msra.mxu0 0
        %1780 = vmatprep.subr.bf16.mxu0 0
        %1781 = vmatpush1.bf16.msra.mxu0 0
        %1782 = vmatprep.subr.bf16.mxu0 0
        %1783 = vmatpush1.bf16.msra.mxu0 0
        %1784 = vmatprep.mubr.bf16.mxu0 0
        %1785 = vmatmul.mubr.bf16.gmra.mrb[0].mxu0 %v1747
        %v1786 = vpop.f32.mrb[0].mxu0
        %v1787 = vadd.f32 0.0, %v1786
        %v1788 = vpop.f32.mrb[0].mxu0
        %v1789 = vpop.f32.mrb[0].mxu0
        %v1790 = vpop.f32.mrb[0].mxu0
        %1791 = vdwg.mxu0
        %v1792 = vpack.c.bf16 %v1739, %v1739
        %v1793 = vpack.c.bf16 %v1787, %v1787
        %1794 = vrot.lane.b32.xlu0 %v1122, 104
        %v1795 = vpop.permute.xlu0 %1794
        %1796 = vrot.lane.b32.xlu0 %v1122, 72
        %v1797 = vpop.permute.xlu0 %1796
        %v1799 = vsel %vm1126, %v1795, 0
        %v1802 = vsel %vm1126, %v1797, 0
        %1804 = vmatprep.subr.bf16.mxu0 0
        %1805 = vmatpush1.bf16.xpose.msra.mxu0 %v1802
        %1806 = vmatprep.subr.bf16.mxu0 0
        %1807 = vmatpush1.bf16.xpose.msra.mxu0 0
        %1808 = vmatprep.subr.bf16.mxu0 0
        %1809 = vmatpush1.bf16.xpose.msra.mxu0 0
        %1810 = vmatprep.subr.bf16.mxu0 0
        %1811 = vmatpush1.bf16.xpose.msra.mxu0 0
        %1812 = vmatprep.subr.bf16.mxu0 0
        %1813 = vmatpush1.bf16.xpose.msra.mxu0 0
        %1814 = vmatprep.subr.bf16.mxu0 0
        %1815 = vmatpush1.bf16.xpose.msra.mxu0 0
        %1816 = vmatprep.subr.bf16.mxu0 0
        %1817 = vmatpush1.bf16.xpose.msra.mxu0 0
        %1818 = vmatprep.subr.bf16.mxu0 0
        %1819 = vmatpush1.bf16.xpose.msra.mxu0 0
        %1820 = vmatprep.subr.bf16.mxu0 0
        %1821 = vmatpush1.bf16.xpose.msra.mxu0 0
        %1822 = vmatprep.subr.bf16.mxu0 0
        %1823 = vmatpush1.bf16.xpose.msra.mxu0 0
        %1824 = vmatprep.subr.bf16.mxu0 0
        %1825 = vmatpush1.bf16.xpose.msra.mxu0 0
        %1826 = vmatprep.subr.bf16.mxu0 0
        %1827 = vmatpush1.bf16.xpose.msra.mxu0 0
        %1828 = vmatprep.subr.bf16.mxu0 0
        %1829 = vmatpush1.bf16.xpose.msra.mxu0 0
        %1830 = vmatprep.subr.bf16.mxu0 0
        %1831 = vmatpush1.bf16.xpose.msra.mxu0 0
        %1832 = vmatprep.subr.bf16.mxu0 0
        %1833 = vmatpush1.bf16.xpose.msra.mxu0 0
        %1834 = vmatprep.subr.bf16.mxu0 0
        %1835 = vmatpush1.bf16.xpose.msra.mxu0 0
        %1836 = vmatprep.mubr.bf16.mxu0 0
        %1837 = vmatmul.mubr.bf16.gmra.mrb[0].mxu0 %v1799
        %v1838 = vpop.f32.mrb[0].mxu0
        %v1839 = vadd.f32 0.0, %v1838
        %v1840 = vpop.f32.mrb[0].mxu0
        %v1841 = vpop.f32.mrb[0].mxu0
        %v1842 = vpop.f32.mrb[0].mxu0
        %1843 = vdwg.mxu0
        %1844 = vrot.lane.b32.xlu0 %v1123, 104
        %v1845 = vpop.permute.xlu0 %1844
        %1846 = vrot.lane.b32.xlu0 %v1123, 72
        %v1847 = vpop.permute.xlu0 %1846
        %v1849 = vsel %vm1126, %v1845, 0
        %v1852 = vsel %vm1126, %v1847, 0
        %1854 = vmatprep.subr.bf16.mxu0 0
        %1855 = vmatpush1.bf16.xpose.msra.mxu0 %v1852
        %1856 = vmatprep.subr.bf16.mxu0 0
        %1857 = vmatpush1.bf16.xpose.msra.mxu0 0
        %1858 = vmatprep.subr.bf16.mxu0 0
        %1859 = vmatpush1.bf16.xpose.msra.mxu0 0
        %1860 = vmatprep.subr.bf16.mxu0 0
        %1861 = vmatpush1.bf16.xpose.msra.mxu0 0
        %1862 = vmatprep.subr.bf16.mxu0 0
        %1863 = vmatpush1.bf16.xpose.msra.mxu0 0
        %1864 = vmatprep.subr.bf16.mxu0 0
        %1865 = vmatpush1.bf16.xpose.msra.mxu0 0
        %1866 = vmatprep.subr.bf16.mxu0 0
        %1867 = vmatpush1.bf16.xpose.msra.mxu0 0
        %1868 = vmatprep.subr.bf16.mxu0 0
        %1869 = vmatpush1.bf16.xpose.msra.mxu0 0
        %1870 = vmatprep.subr.bf16.mxu0 0
        %1871 = vmatpush1.bf16.xpose.msra.mxu0 0
        %1872 = vmatprep.subr.bf16.mxu0 0
        %1873 = vmatpush1.bf16.xpose.msra.mxu0 0
        %1874 = vmatprep.subr.bf16.mxu0 0
        %1875 = vmatpush1.bf16.xpose.msra.mxu0 0
        %1876 = vmatprep.subr.bf16.mxu0 0
        %1877 = vmatpush1.bf16.xpose.msra.mxu0 0
        %1878 = vmatprep.subr.bf16.mxu0 0
        %1879 = vmatpush1.bf16.xpose.msra.mxu0 0
        %1880 = vmatprep.subr.bf16.mxu0 0
        %1881 = vmatpush1.bf16.xpose.msra.mxu0 0
        %1882 = vmatprep.subr.bf16.mxu0 0
        %1883 = vmatpush1.bf16.xpose.msra.mxu0 0
        %1884 = vmatprep.subr.bf16.mxu0 0
        %1885 = vmatpush1.bf16.xpose.msra.mxu0 0
        %1886 = vmatprep.mubr.bf16.mxu0 0
        %1887 = vmatmul.mubr.bf16.gmra.mrb[0].mxu0 %v1849
        %v1888 = vpop.f32.mrb[0].mxu0
        %v1889 = vadd.f32 0.0, %v1888
        %v1890 = vpop.f32.mrb[0].mxu0
        %v1891 = vpop.f32.mrb[0].mxu0
        %v1892 = vpop.f32.mrb[0].mxu0
        %1893 = vdwg.mxu0
        %v1894 = vmul.f32 %v1839, 0.35355338
        %v1895 = vmul.f32 %v1889, 0.35355338
        %v1896 = vsel %vm1126, %v1894, -inf
        %1897 = vmax.xlane.f32.xlu0 %v1896
        %v1898 = vpop.xlane.xlu0 %1897
        %v1899 = vsel %vm1126, %v1895, -inf
        %1900 = vmax.xlane.f32.xlu0 %v1899
        %v1901 = vpop.xlane.xlu0 %1900
        %v1902 = vsub.f32 %v1894, %v1898
        %v1903 = vsub.f32 %v1895, %v1901
        %v1904 = vmul.f32 %v1902, 1.442695
        %v1905 = vpow.pop %v1904
        %v1906 = vmul.f32 %v1903, 1.442695
        %v1907 = vpow.pop %v1906
        %v1908 = vsel %vm1126, %v1905, 0.0
        %1909 = vadd.xlane.f32.xlu0 %v1908
        %v1910 = vpop.xlane.xlu0 %1909
        %v1911 = vsel %vm1126, %v1907, 0.0
        %1912 = vadd.xlane.f32.xlu0 %v1911
        %v1913 = vpop.xlane.xlu0 %1912
        %v1914 = vrcp.pop %v1910
        %v1915 = vrcp.pop %v1913
        %v1916 = vmul.f32 %v1905, %v1914
        %v1917 = vmul.f32 %v1907, %v1915
        %v1918 = vpack.c.bf16 %v1916, %v1916
        %v1919 = vpack.c.bf16 %v1917, %v1917
        %1920 = vrot.lane.b32.xlu0 %v1122, 40
        %v1921 = vpop.permute.xlu0 %1920
        %v1923 = vsel %vm1126, %v1918, 0
        %v1926 = vsel %vm1252, %v1921, 0
        %1928 = vmatprep.subr.bf16.mxu0 0
        %1929 = vmatpush1.bf16.msra.mxu0 %v1926
        %1930 = vmatprep.subr.bf16.mxu0 0
        %1931 = vmatpush1.bf16.msra.mxu0 0
        %1932 = vmatprep.subr.bf16.mxu0 0
        %1933 = vmatpush1.bf16.msra.mxu0 0
        %1934 = vmatprep.subr.bf16.mxu0 0
        %1935 = vmatpush1.bf16.msra.mxu0 0
        %1936 = vmatprep.subr.bf16.mxu0 0
        %1937 = vmatpush1.bf16.msra.mxu0 0
        %1938 = vmatprep.subr.bf16.mxu0 0
        %1939 = vmatpush1.bf16.msra.mxu0 0
        %1940 = vmatprep.subr.bf16.mxu0 0
        %1941 = vmatpush1.bf16.msra.mxu0 0
        %1942 = vmatprep.subr.bf16.mxu0 0
        %1943 = vmatpush1.bf16.msra.mxu0 0
        %1944 = vmatprep.subr.bf16.mxu0 0
        %1945 = vmatpush1.bf16.msra.mxu0 0
        %1946 = vmatprep.subr.bf16.mxu0 0
        %1947 = vmatpush1.bf16.msra.mxu0 0
        %1948 = vmatprep.subr.bf16.mxu0 0
        %1949 = vmatpush1.bf16.msra.mxu0 0
        %1950 = vmatprep.subr.bf16.mxu0 0
        %1951 = vmatpush1.bf16.msra.mxu0 0
        %1952 = vmatprep.subr.bf16.mxu0 0
        %1953 = vmatpush1.bf16.msra.mxu0 0
        %1954 = vmatprep.subr.bf16.mxu0 0
        %1955 = vmatpush1.bf16.msra.mxu0 0
        %1956 = vmatprep.subr.bf16.mxu0 0
        %1957 = vmatpush1.bf16.msra.mxu0 0
        %1958 = vmatprep.subr.bf16.mxu0 0
        %1959 = vmatpush1.bf16.msra.mxu0 0
        %1960 = vmatprep.mubr.bf16.mxu0 0
        %1961 = vmatmul.mubr.bf16.gmra.mrb[0].mxu0 %v1923
        %v1962 = vpop.f32.mrb[0].mxu0
        %v1963 = vadd.f32 0.0, %v1962
        %v1964 = vpop.f32.mrb[0].mxu0
        %v1965 = vpop.f32.mrb[0].mxu0
        %v1966 = vpop.f32.mrb[0].mxu0
        %1967 = vdwg.mxu0
        %1968 = vrot.lane.b32.xlu0 %v1123, 40
        %v1969 = vpop.permute.xlu0 %1968
        %v1971 = vsel %vm1126, %v1919, 0
        %v1974 = vsel %vm1252, %v1969, 0
        %1976 = vmatprep.subr.bf16.mxu0 0
        %1977 = vmatpush1.bf16.msra.mxu0 %v1974
        %1978 = vmatprep.subr.bf16.mxu0 0
        %1979 = vmatpush1.bf16.msra.mxu0 0
        %1980 = vmatprep.subr.bf16.mxu0 0
        %1981 = vmatpush1.bf16.msra.mxu0 0
        %1982 = vmatprep.subr.bf16.mxu0 0
        %1983 = vmatpush1.bf16.msra.mxu0 0
        %1984 = vmatprep.subr.bf16.mxu0 0
        %1985 = vmatpush1.bf16.msra.mxu0 0
        %1986 = vmatprep.subr.bf16.mxu0 0
        %1987 = vmatpush1.bf16.msra.mxu0 0
        %1988 = vmatprep.subr.bf16.mxu0 0
        %1989 = vmatpush1.bf16.msra.mxu0 0
        %1990 = vmatprep.subr.bf16.mxu0 0
        %1991 = vmatpush1.bf16.msra.mxu0 0
        %1992 = vmatprep.subr.bf16.mxu0 0
        %1993 = vmatpush1.bf16.msra.mxu0 0
        %1994 = vmatprep.subr.bf16.mxu0 0
        %1995 = vmatpush1.bf16.msra.mxu0 0
        %1996 = vmatprep.subr.bf16.mxu0 0
        %1997 = vmatpush1.bf16.msra.mxu0 0
        %1998 = vmatprep.subr.bf16.mxu0 0
        %1999 = vmatpush1.bf16.msra.mxu0 0
        %2000 = vmatprep.subr.bf16.mxu0 0
        %2001 = vmatpush1.bf16.msra.mxu0 0
        %2002 = vmatprep.subr.bf16.mxu0 0
        %2003 = vmatpush1.bf16.msra.mxu0 0
        %2004 = vmatprep.subr.bf16.mxu0 0
        %2005 = vmatpush1.bf16.msra.mxu0 0
        %2006 = vmatprep.subr.bf16.mxu0 0
        %2007 = vmatpush1.bf16.msra.mxu0 0
        %2008 = vmatprep.mubr.bf16.mxu0 0
        %2009 = vmatmul.mubr.bf16.gmra.mrb[0].mxu0 %v1971
        %v2010 = vpop.f32.mrb[0].mxu0
        %v2011 = vadd.f32 0.0, %v2010
        %v2012 = vpop.f32.mrb[0].mxu0
        %v2013 = vpop.f32.mrb[0].mxu0
        %v2014 = vpop.f32.mrb[0].mxu0
        %2015 = vdwg.mxu0
        %v2016 = vpack.c.bf16 %v1963, %v1963
        %v2017 = vpack.c.bf16 %v2011, %v2011
        %2020 = vrot.lane.b32.xlu0 %v1568, 8
        %v2021 = vpop.permute.xlu0 %2020
        %2022 = vrot.lane.b32.xlu0 %v1569, 8
        %v2023 = vpop.permute.xlu0 %2022
        %2026 = vrot.lane.b32.xlu0 %v1792, 16
        %v2027 = vpop.permute.xlu0 %2026
        %2028 = vrot.lane.b32.xlu0 %v1793, 16
        %v2029 = vpop.permute.xlu0 %2028
        %2032 = vrot.lane.b32.xlu0 %v2016, 24
        %v2033 = vpop.permute.xlu0 %2032
        %2034 = vrot.lane.b32.xlu0 %v2017, 24
        %v2035 = vpop.permute.xlu0 %2034
        %v2038 = vsel %vm1126, %v1344, %v2021
        %v2041 = vsel %vm1126, %v1345, %v2023
        %vm2042 = vcmask 130048
        %v2044 = vsel %vm2042, %v2038, %v2027
        %v2046 = vsel %vm2042, %v2041, %v2029
        %vm2047 = vcmask 195584
        %v2049 = vsel %vm2047, %v2044, %v2033
        %v2051 = vsel %vm2047, %v2046, %v2035
        %v2052 = vld [vmem:[%s784] sm:$0xf]
        %v2053 = vld [vmem:[%s784 + $0x4] sm:$0xf]
        %v2054 = vld [vmem:[%s784 + $0x8] sm:$0xf]
        %v2055 = vld [vmem:[%s784 + $0xc] sm:$0xf]
        %v2056 = vld [vmem:[%s787] sm:$0x1]
        %v2058 = vlaneseq
        %v2059 = vshrl.u32 %v2058, 7
        %v2060 = vsub.s32 0, %v2059
        %v2061 = vrot.slane %v2056, %v2060
        %v2065 = vunpack.c.l.b16 %v2049
        %v2066 = vunpack.c.l.b16 %v2051
        %v2067 = vpack.c.b16 %v2066, %v2065
        %v2072 = vunpack.c.l.b16 %v2052
        %v2073 = vunpack.c.l.b16 %v2053
        %v2074 = vunpack.c.l.b16 %v2054
        %v2075 = vunpack.c.l.b16 %v2055
        %v2076 = vpack.c.b16 %v2073, %v2072
        %v2077 = vpack.c.b16 %v2075, %v2074
        %v2081 = vsel %vm1073, %v2067, 0
        %2083 = vmatprep.subr.bf16.mxu0 0
        %2084 = vmatpush1.bf16.msra.mxu0 %v2076
        %2085 = vmatprep.subr.bf16.mxu0 0
        %2086 = vmatpush1.bf16.msra.mxu0 %v2077
        %2087 = vmatprep.subr.bf16.mxu0 0
        %2088 = vmatpush1.bf16.msra.mxu0 0
        %2089 = vmatprep.subr.bf16.mxu0 0
        %2090 = vmatpush1.bf16.msra.mxu0 0
        %2091 = vmatprep.subr.bf16.mxu0 0
        %2092 = vmatpush1.bf16.msra.mxu0 0
        %2093 = vmatprep.subr.bf16.mxu0 0
        %2094 = vmatpush1.bf16.msra.mxu0 0
        %2095 = vmatprep.subr.bf16.mxu0 0
        %2096 = vmatpush1.bf16.msra.mxu0 0
        %2097 = vmatprep.subr.bf16.mxu0 0
        %2098 = vmatpush1.bf16.msra.mxu0 0
        %2099 = vmatprep.subr.bf16.mxu0 0
        %2100 = vmatpush1.bf16.msra.mxu0 0
        %2101 = vmatprep.subr.bf16.mxu0 0
        %2102 = vmatpush1.bf16.msra.mxu0 0
        %2103 = vmatprep.subr.bf16.mxu0 0
        %2104 = vmatpush1.bf16.msra.mxu0 0
        %2105 = vmatprep.subr.bf16.mxu0 0
        %2106 = vmatpush1.bf16.msra.mxu0 0
        %2107 = vmatprep.subr.bf16.mxu0 0
        %2108 = vmatpush1.bf16.msra.mxu0 0
        %2109 = vmatprep.subr.bf16.mxu0 0
        %2110 = vmatpush1.bf16.msra.mxu0 0
        %2111 = vmatprep.subr.bf16.mxu0 0
        %2112 = vmatpush1.bf16.msra.mxu0 0
        %2113 = vmatprep.subr.bf16.mxu0 0
        %2114 = vmatpush1.bf16.msra.mxu0 0
        %2115 = vmatprep.mubr.bf16.mxu0 0
        %2116 = vmatmul.mubr.bf16.gmra.mrb[0].mxu0 %v2081
        %v2117 = vpop.f32.mrb[0].mxu0
        %v2118 = vadd.f32 %v2061, %v2117
        %v2119 = vpop.f32.mrb[0].mxu0
        %v2120 = vpop.f32.mrb[0].mxu0
        %v2121 = vadd.f32 %v2061, %v2120
        %v2122 = vpop.f32.mrb[0].mxu0
        %2123 = vdwg.mxu0
        %v2124 = vadd.f32 %v1047, %v2118
        %v2125 = vadd.f32 %v1048, %v2121
        %v2126 = vld [vmem:[%s790] sm:$0x1]
        %v2127 = vld [vmem:[%s793] sm:$0x1]
        %v2128 = vsel %vm1073, %v2124, 0.0
        %2129 = vadd.xlane.f32.xlu0 %v2128
        %v2130 = vpop.xlane.xlu0 %2129
        %v2131 = vsel %vm1073, %v2125, 0.0
        %2132 = vadd.xlane.f32.xlu0 %v2131
        %v2133 = vpop.xlane.xlu0 %2132
        %v2134 = vrcp.pop 32.0
        %v2135 = vmul.f32 %v2130, %v2134
        %v2136 = vmul.f32 %v2133, %v2134
        %v2137 = vsub.f32 %v2124, %v2135
        %v2138 = vsub.f32 %v2125, %v2136
        %v2139 = vmul.f32 %v2137, %v2137
        %v2140 = vmul.f32 %v2138, %v2138
        %v2141 = vsel %vm1073, %v2139, 0.0
        %2142 = vadd.xlane.f32.xlu0 %v2141
        %v2143 = vpop.xlane.xlu0 %2142
        %v2144 = vsel %vm1073, %v2140, 0.0
        %2145 = vadd.xlane.f32.xlu0 %v2144
        %v2146 = vpop.xlane.xlu0 %2145
        %v2147 = vmul.f32 %v2143, %v2134
        %v2148 = vmul.f32 %v2146, %v2134
        %v2149 = vadd.f32 %v2147, 1e-05
        %v2150 = vadd.f32 %v2148, 1e-05
        %v2151 = vrsqrt.pop %v2149
        %v2152 = vrsqrt.pop %v2150
        %v2153 = vmul.f32 %v2137, %v2151
        %v2154 = vmul.f32 %v2138, %v2152
        %v2156 = vlaneseq
        %v2157 = vshrl.u32 %v2156, 7
        %v2158 = vsub.s32 0, %v2157
        %v2159 = vrot.slane %v2126, %v2158
        %v2161 = vmul.f32 %v2153, %v2159
        %v2162 = vmul.f32 %v2154, %v2159
        %v2164 = vlaneseq
        %v2165 = vshrl.u32 %v2164, 7
        %v2166 = vsub.s32 0, %v2165
        %v2167 = vrot.slane %v2127, %v2166
        %v2169 = vadd.f32 %v2161, %v2167
        %v2170 = vadd.f32 %v2162, %v2167
        %2171 = vst.msk [vmem:[#allocation2] sm:$0xff] %vm1073, %v2169
        %2172 = vst.msk [vmem:[#allocation2 + $0x8] sm:$0xff] %vm1073, %v2170
        %v2173 = vld [vmem:[#allocation2] sm:$0xff]
        %v2174 = vld [vmem:[#allocation2 + $0x8] sm:$0xff]
        %v2175 = vpack.c.bf16 %v2174, %v2173
        %v2176 = vld [vmem:[%s798] sm:$0xff]
        %v2177 = vld [vmem:[%s798 + $0x8] sm:$0xff]
        %v2178 = vld [vmem:[%s798 + $0x10] sm:$0xff]
        %v2179 = vld [vmem:[%s798 + $0x18] sm:$0xff]
        %v2180 = vld [vmem:[%s798 + $0x20] sm:$0xff]
        %v2181 = vld [vmem:[%s798 + $0x28] sm:$0xff]
        %v2182 = vld [vmem:[%s798 + $0x30] sm:$0xff]
        %v2183 = vld [vmem:[%s798 + $0x38] sm:$0xff]
        %v2184 = vld [vmem:[%s798 + $0x40] sm:$0xff]
        %v2185 = vld [vmem:[%s798 + $0x48] sm:$0xff]
        %v2186 = vld [vmem:[%s798 + $0x50] sm:$0xff]
        %v2187 = vld [vmem:[%s798 + $0x58] sm:$0xff]
        %v2188 = vld [vmem:[%s798 + $0x60] sm:$0xff]
        %v2189 = vld [vmem:[%s798 + $0x68] sm:$0xff]
        %v2190 = vld [vmem:[%s798 + $0x70] sm:$0xff]
        %v2191 = vld [vmem:[%s798 + $0x78] sm:$0xff]
        %v2192 = vld [vmem:[%s798 + $0x80] sm:$0xff]
        %v2193 = vld [vmem:[%s798 + $0x88] sm:$0xff]
        %v2194 = vld [vmem:[%s798 + $0x90] sm:$0xff]
        %v2195 = vld [vmem:[%s798 + $0x98] sm:$0xff]
        %v2196 = vld [vmem:[%s798 + $0xa0] sm:$0xff]
        %v2197 = vld [vmem:[%s798 + $0xa8] sm:$0xff]
        %v2198 = vld [vmem:[%s798 + $0xb0] sm:$0xff]
        %v2199 = vld [vmem:[%s798 + $0xb8] sm:$0xff]
        %v2200 = vld [vmem:[%s798 + $0xc0] sm:$0xff]
        %v2201 = vld [vmem:[%s798 + $0xc8] sm:$0xff]
        %v2202 = vld [vmem:[%s798 + $0xd0] sm:$0xff]
        %v2203 = vld [vmem:[%s798 + $0xd8] sm:$0xff]
        %v2204 = vld [vmem:[%s798 + $0xe0] sm:$0xff]
        %v2205 = vld [vmem:[%s798 + $0xe8] sm:$0xff]
        %v2206 = vld [vmem:[%s798 + $0xf0] sm:$0xff]
        %v2207 = vld [vmem:[%s798 + $0xf8] sm:$0xff]
        %v2208 = vld [vmem:[%s802] sm:$0xff]
        %v2209 = vld [vmem:[%s802 + $0x8] sm:$0xff]
        %v2212 = vlaneseq
        %v2213 = vshrl.u32 %v2212, 7
        %v2214 = vsub.s32 0, %v2213
        %v2215 = vrot.slane %v2208, %v2214
        %v2216 = vlaneseq
        %v2217 = vshrl.u32 %v2216, 7
        %v2218 = vsub.s32 1, %v2217
        %v2219 = vrot.slane %v2208, %v2218
        %v2220 = vlaneseq
        %v2221 = vshrl.u32 %v2220, 7
        %v2222 = vsub.s32 2, %v2221
        %v2223 = vrot.slane %v2208, %v2222
        %v2224 = vlaneseq
        %v2225 = vshrl.u32 %v2224, 7
        %v2226 = vsub.s32 3, %v2225
        %v2227 = vrot.slane %v2208, %v2226
        %v2228 = vlaneseq
        %v2229 = vshrl.u32 %v2228, 7
        %v2230 = vsub.s32 4, %v2229
        %v2231 = vrot.slane %v2208, %v2230
        %v2232 = vlaneseq
        %v2233 = vshrl.u32 %v2232, 7
        %v2234 = vsub.s32 5, %v2233
        %v2235 = vrot.slane %v2208, %v2234
        %v2236 = vlaneseq
        %v2237 = vshrl.u32 %v2236, 7
        %v2238 = vsub.s32 6, %v2237
        %v2239 = vrot.slane %v2208, %v2238
        %v2240 = vlaneseq
        %v2241 = vshrl.u32 %v2240, 7
        %v2242 = vsub.s32 7, %v2241
        %v2243 = vrot.slane %v2208, %v2242
        %v2244 = vlaneseq
        %v2245 = vshrl.u32 %v2244, 7
        %v2246 = vsub.s32 0, %v2245
        %v2247 = vrot.slane %v2209, %v2246
        %v2248 = vlaneseq
        %v2249 = vshrl.u32 %v2248, 7
        %v2250 = vsub.s32 1, %v2249
        %v2251 = vrot.slane %v2209, %v2250
        %v2252 = vlaneseq
        %v2253 = vshrl.u32 %v2252, 7
        %v2254 = vsub.s32 2, %v2253
        %v2255 = vrot.slane %v2209, %v2254
        %v2256 = vlaneseq
        %v2257 = vshrl.u32 %v2256, 7
        %v2258 = vsub.s32 3, %v2257
        %v2259 = vrot.slane %v2209, %v2258
        %v2260 = vlaneseq
        %v2261 = vshrl.u32 %v2260, 7
        %v2262 = vsub.s32 4, %v2261
        %v2263 = vrot.slane %v2209, %v2262
        %v2264 = vlaneseq
        %v2265 = vshrl.u32 %v2264, 7
        %v2266 = vsub.s32 5, %v2265
        %v2267 = vrot.slane %v2209, %v2266
        %v2268 = vlaneseq
        %v2269 = vshrl.u32 %v2268, 7
        %v2270 = vsub.s32 6, %v2269
        %v2271 = vrot.slane %v2209, %v2270
        %v2272 = vlaneseq
        %v2273 = vshrl.u32 %v2272, 7
        %v2274 = vsub.s32 7, %v2273
        %v2275 = vrot.slane %v2209, %v2274
        %v2324 = vunpack.c.l.b16 %v2176
        %v2325 = vunpack.c.h.b16 %v2176
        %v2326 = vunpack.c.l.b16 %v2177
        %v2327 = vunpack.c.h.b16 %v2177
        %v2328 = vunpack.c.l.b16 %v2178
        %v2329 = vunpack.c.h.b16 %v2178
        %v2330 = vunpack.c.l.b16 %v2179
        %v2331 = vunpack.c.h.b16 %v2179
        %v2332 = vunpack.c.l.b16 %v2180
        %v2333 = vunpack.c.h.b16 %v2180
        %v2334 = vunpack.c.l.b16 %v2181
        %v2335 = vunpack.c.h.b16 %v2181
        %v2336 = vunpack.c.l.b16 %v2182
        %v2337 = vunpack.c.h.b16 %v2182
        %v2338 = vunpack.c.l.b16 %v2183
        %v2339 = vunpack.c.h.b16 %v2183
        %v2340 = vunpack.c.l.b16 %v2184
        %v2341 = vunpack.c.h.b16 %v2184
        %v2342 = vunpack.c.l.b16 %v2185
        %v2343 = vunpack.c.h.b16 %v2185
        %v2344 = vunpack.c.l.b16 %v2186
        %v2345 = vunpack.c.h.b16 %v2186
        %v2346 = vunpack.c.l.b16 %v2187
        %v2347 = vunpack.c.h.b16 %v2187
        %v2348 = vunpack.c.l.b16 %v2188
        %v2349 = vunpack.c.h.b16 %v2188
        %v2350 = vunpack.c.l.b16 %v2189
        %v2351 = vunpack.c.h.b16 %v2189
        %v2352 = vunpack.c.l.b16 %v2190
        %v2353 = vunpack.c.h.b16 %v2190
        %v2354 = vunpack.c.l.b16 %v2191
        %v2355 = vunpack.c.h.b16 %v2191
        %v2356 = vunpack.c.l.b16 %v2192
        %v2357 = vunpack.c.h.b16 %v2192
        %v2358 = vunpack.c.l.b16 %v2193
        %v2359 = vunpack.c.h.b16 %v2193
        %v2360 = vunpack.c.l.b16 %v2194
        %v2361 = vunpack.c.h.b16 %v2194
        %v2362 = vunpack.c.l.b16 %v2195
        %v2363 = vunpack.c.h.b16 %v2195
        %v2364 = vunpack.c.l.b16 %v2196
        %v2365 = vunpack.c.h.b16 %v2196
        %v2366 = vunpack.c.l.b16 %v2197
        %v2367 = vunpack.c.h.b16 %v2197
        %v2368 = vunpack.c.l.b16 %v2198
        %v2369 = vunpack.c.h.b16 %v2198
        %v2370 = vunpack.c.l.b16 %v2199
        %v2371 = vunpack.c.h.b16 %v2199
        %v2372 = vunpack.c.l.b16 %v2200
        %v2373 = vunpack.c.h.b16 %v2200
        %v2374 = vunpack.c.l.b16 %v2201
        %v2375 = vunpack.c.h.b16 %v2201
        %v2376 = vunpack.c.l.b16 %v2202
        %v2377 = vunpack.c.h.b16 %v2202
        %v2378 = vunpack.c.l.b16 %v2203
        %v2379 = vunpack.c.h.b16 %v2203
        %v2380 = vunpack.c.l.b16 %v2204
        %v2381 = vunpack.c.h.b16 %v2204
        %v2382 = vunpack.c.l.b16 %v2205
        %v2383 = vunpack.c.h.b16 %v2205
        %v2384 = vunpack.c.l.b16 %v2206
        %v2385 = vunpack.c.h.b16 %v2206
        %v2386 = vunpack.c.l.b16 %v2207
        %v2387 = vunpack.c.h.b16 %v2207
        %v2388 = vpack.c.b16 %v2340, %v2324
        %v2389 = vpack.c.b16 %v2341, %v2325
        %v2390 = vpack.c.b16 %v2342, %v2326
        %v2391 = vpack.c.b16 %v2343, %v2327
        %v2392 = vpack.c.b16 %v2344, %v2328
        %v2393 = vpack.c.b16 %v2345, %v2329
        %v2394 = vpack.c.b16 %v2346, %v2330
        %v2395 = vpack.c.b16 %v2347, %v2331
        %v2396 = vpack.c.b16 %v2348, %v2332
        %v2397 = vpack.c.b16 %v2349, %v2333
        %v2398 = vpack.c.b16 %v2350, %v2334
        %v2399 = vpack.c.b16 %v2351, %v2335
        %v2400 = vpack.c.b16 %v2352, %v2336
        %v2401 = vpack.c.b16 %v2353, %v2337
        %v2402 = vpack.c.b16 %v2354, %v2338
        %v2403 = vpack.c.b16 %v2355, %v2339
        %v2404 = vpack.c.b16 %v2372, %v2356
        %v2405 = vpack.c.b16 %v2373, %v2357
        %v2406 = vpack.c.b16 %v2374, %v2358
        %v2407 = vpack.c.b16 %v2375, %v2359
        %v2408 = vpack.c.b16 %v2376, %v2360
        %v2409 = vpack.c.b16 %v2377, %v2361
        %v2410 = vpack.c.b16 %v2378, %v2362
        %v2411 = vpack.c.b16 %v2379, %v2363
        %v2412 = vpack.c.b16 %v2380, %v2364
        %v2413 = vpack.c.b16 %v2381, %v2365
        %v2414 = vpack.c.b16 %v2382, %v2366
        %v2415 = vpack.c.b16 %v2383, %v2367
        %v2416 = vpack.c.b16 %v2384, %v2368
        %v2417 = vpack.c.b16 %v2385, %v2369
        %v2418 = vpack.c.b16 %v2386, %v2370
        %v2419 = vpack.c.b16 %v2387, %v2371
        %v2453 = vsel %vm1073, %v2175, 0
        %2455 = vmatprep.subr.bf16.mxu0 %v2389
        %2456 = vmatpush1.bf16.msra.mxu0 %v2388
        %2457 = vmatprep.subr.bf16.mxu0 %v2405
        %2458 = vmatpush1.bf16.msra.mxu0 %v2404
        %2459 = vmatprep.subr.bf16.mxu0 0
        %2460 = vmatpush1.bf16.msra.mxu0 0
        %2461 = vmatprep.subr.bf16.mxu0 0
        %2462 = vmatpush1.bf16.msra.mxu0 0
        %2463 = vmatprep.subr.bf16.mxu0 0
        %2464 = vmatpush1.bf16.msra.mxu0 0
        %2465 = vmatprep.subr.bf16.mxu0 0
        %2466 = vmatpush1.bf16.msra.mxu0 0
        %2467 = vmatprep.subr.bf16.mxu0 0
        %2468 = vmatpush1.bf16.msra.mxu0 0
        %2469 = vmatprep.subr.bf16.mxu0 0
        %2470 = vmatpush1.bf16.msra.mxu0 0
        %2471 = vmatprep.subr.bf16.mxu0 0
        %2472 = vmatpush1.bf16.msra.mxu0 0
        %2473 = vmatprep.subr.bf16.mxu0 0
        %2474 = vmatpush1.bf16.msra.mxu0 0
        %2475 = vmatprep.subr.bf16.mxu0 0
        %2476 = vmatpush1.bf16.msra.mxu0 0
        %2477 = vmatprep.subr.bf16.mxu0 0
        %2478 = vmatpush1.bf16.msra.mxu0 0
        %2479 = vmatprep.subr.bf16.mxu0 0
        %2480 = vmatpush1.bf16.msra.mxu0 0
        %2481 = vmatprep.subr.bf16.mxu0 0
        %2482 = vmatpush1.bf16.msra.mxu0 0
        %2483 = vmatprep.subr.bf16.mxu0 0
        %2484 = vmatpush1.bf16.msra.mxu0 0
        %2485 = vmatprep.subr.bf16.mxu0 0
        %2486 = vmatpush1.bf16.msra.mxu0 0
        %2487 = vmatprep.mubr.bf16.mxu0 0
        %2488 = vmatmul.mubr.bf16.gmra.mrb[0].mxu0 %v2453
        %v2489 = vpop.f32.mrb[0].mxu0
        %v2490 = vadd.f32 %v2215, %v2489
        %v2491 = vpop.f32.mrb[0].mxu0
        %v2492 = vadd.f32 %v2219, %v2491
        %v2493 = vpop.f32.mrb[0].mxu0
        %v2494 = vadd.f32 %v2215, %v2493
        %v2495 = vpop.f32.mrb[0].mxu0
        %v2496 = vadd.f32 %v2219, %v2495
        %2497 = vdwg.mxu0
        %2498 = vmatprep.subr.bf16.mxu0 %v2391
        %2499 = vmatpush1.bf16.msra.mxu0 %v2390
        %2500 = vmatprep.subr.bf16.mxu0 %v2407
        %2501 = vmatpush1.bf16.msra.mxu0 %v2406
        %2502 = vmatprep.subr.bf16.mxu0 0
        %2503 = vmatpush1.bf16.msra.mxu0 0
        %2504 = vmatprep.subr.bf16.mxu0 0
        %2505 = vmatpush1.bf16.msra.mxu0 0
        %2506 = vmatprep.subr.bf16.mxu0 0
        %2507 = vmatpush1.bf16.msra.mxu0 0
        %2508 = vmatprep.subr.bf16.mxu0 0
        %2509 = vmatpush1.bf16.msra.mxu0 0
        %2510 = vmatprep.subr.bf16.mxu0 0
        %2511 = vmatpush1.bf16.msra.mxu0 0
        %2512 = vmatprep.subr.bf16.mxu0 0
        %2513 = vmatpush1.bf16.msra.mxu0 0
        %2514 = vmatprep.subr.bf16.mxu0 0
        %2515 = vmatpush1.bf16.msra.mxu0 0
        %2516 = vmatprep.subr.bf16.mxu0 0
        %2517 = vmatpush1.bf16.msra.mxu0 0
        %2518 = vmatprep.subr.bf16.mxu0 0
        %2519 = vmatpush1.bf16.msra.mxu0 0
        %2520 = vmatprep.subr.bf16.mxu0 0
        %2521 = vmatpush1.bf16.msra.mxu0 0
        %2522 = vmatprep.subr.bf16.mxu0 0
        %2523 = vmatpush1.bf16.msra.mxu0 0
        %2524 = vmatprep.subr.bf16.mxu0 0
        %2525 = vmatpush1.bf16.msra.mxu0 0
        %2526 = vmatprep.subr.bf16.mxu0 0
        %2527 = vmatpush1.bf16.msra.mxu0 0
        %2528 = vmatprep.subr.bf16.mxu0 0
        %2529 = vmatpush1.bf16.msra.mxu0 0
        %2530 = vmatprep.mubr.bf16.mxu0 0
        %2531 = vmatmul.mubr.bf16.gmra.mrb[0].mxu0 %v2453
        %v2532 = vpop.f32.mrb[0].mxu0
        %v2533 = vadd.f32 %v2223, %v2532
        %v2534 = vpop.f32.mrb[0].mxu0
        %v2535 = vadd.f32 %v2227, %v2534
        %v2536 = vpop.f32.mrb[0].mxu0
        %v2537 = vadd.f32 %v2223, %v2536
        %v2538 = vpop.f32.mrb[0].mxu0
        %v2539 = vadd.f32 %v2227, %v2538
        %2540 = vdwg.mxu0
        %2541 = vmatprep.subr.bf16.mxu0 %v2393
        %2542 = vmatpush1.bf16.msra.mxu0 %v2392
        %2543 = vmatprep.subr.bf16.mxu0 %v2409
        %2544 = vmatpush1.bf16.msra.mxu0 %v2408
        %2545 = vmatprep.subr.bf16.mxu0 0
        %2546 = vmatpush1.bf16.msra.mxu0 0
        %2547 = vmatprep.subr.bf16.mxu0 0
        %2548 = vmatpush1.bf16.msra.mxu0 0
        %2549 = vmatprep.subr.bf16.mxu0 0
        %2550 = vmatpush1.bf16.msra.mxu0 0
        %2551 = vmatprep.subr.bf16.mxu0 0
        %2552 = vmatpush1.bf16.msra.mxu0 0
        %2553 = vmatprep.subr.bf16.mxu0 0
        %2554 = vmatpush1.bf16.msra.mxu0 0
        %2555 = vmatprep.subr.bf16.mxu0 0
        %2556 = vmatpush1.bf16.msra.mxu0 0
        %2557 = vmatprep.subr.bf16.mxu0 0
        %2558 = vmatpush1.bf16.msra.mxu0 0
        %2559 = vmatprep.subr.bf16.mxu0 0
        %2560 = vmatpush1.bf16.msra.mxu0 0
        %2561 = vmatprep.subr.bf16.mxu0 0
        %2562 = vmatpush1.bf16.msra.mxu0 0
        %2563 = vmatprep.subr.bf16.mxu0 0
        %2564 = vmatpush1.bf16.msra.mxu0 0
        %2565 = vmatprep.subr.bf16.mxu0 0
        %2566 = vmatpush1.bf16.msra.mxu0 0
        %2567 = vmatprep.subr.bf16.mxu0 0
        %2568 = vmatpush1.bf16.msra.mxu0 0
        %2569 = vmatprep.subr.bf16.mxu0 0
        %2570 = vmatpush1.bf16.msra.mxu0 0
        %2571 = vmatprep.subr.bf16.mxu0 0
        %2572 = vmatpush1.bf16.msra.mxu0 0
        %2573 = vmatprep.mubr.bf16.mxu0 0
        %2574 = vmatmul.mubr.bf16.gmra.mrb[0].mxu0 %v2453
        %v2575 = vpop.f32.mrb[0].mxu0
        %v2576 = vadd.f32 %v2231, %v2575
        %v2577 = vpop.f32.mrb[0].mxu0
        %v2578 = vadd.f32 %v2235, %v2577
        %v2579 = vpop.f32.mrb[0].mxu0
        %v2580 = vadd.f32 %v2231, %v2579
        %v2581 = vpop.f32.mrb[0].mxu0
        %v2582 = vadd.f32 %v2235, %v2581
        %2583 = vdwg.mxu0
        %2584 = vmatprep.subr.bf16.mxu0 %v2395
        %2585 = vmatpush1.bf16.msra.mxu0 %v2394
        %2586 = vmatprep.subr.bf16.mxu0 %v2411
        %2587 = vmatpush1.bf16.msra.mxu0 %v2410
        %2588 = vmatprep.subr.bf16.mxu0 0
        %2589 = vmatpush1.bf16.msra.mxu0 0
        %2590 = vmatprep.subr.bf16.mxu0 0
        %2591 = vmatpush1.bf16.msra.mxu0 0
        %2592 = vmatprep.subr.bf16.mxu0 0
        %2593 = vmatpush1.bf16.msra.mxu0 0
        %2594 = vmatprep.subr.bf16.mxu0 0
        %2595 = vmatpush1.bf16.msra.mxu0 0
        %2596 = vmatprep.subr.bf16.mxu0 0
        %2597 = vmatpush1.bf16.msra.mxu0 0
        %2598 = vmatprep.subr.bf16.mxu0 0
        %2599 = vmatpush1.bf16.msra.mxu0 0
        %2600 = vmatprep.subr.bf16.mxu0 0
        %2601 = vmatpush1.bf16.msra.mxu0 0
        %2602 = vmatprep.subr.bf16.mxu0 0
        %2603 = vmatpush1.bf16.msra.mxu0 0
        %2604 = vmatprep.subr.bf16.mxu0 0
        %2605 = vmatpush1.bf16.msra.mxu0 0
        %2606 = vmatprep.subr.bf16.mxu0 0
        %2607 = vmatpush1.bf16.msra.mxu0 0
        %2608 = vmatprep.subr.bf16.mxu0 0
        %2609 = vmatpush1.bf16.msra.mxu0 0
        %2610 = vmatprep.subr.bf16.mxu0 0
        %2611 = vmatpush1.bf16.msra.mxu0 0
        %2612 = vmatprep.subr.bf16.mxu0 0
        %2613 = vmatpush1.bf16.msra.mxu0 0
        %2614 = vmatprep.subr.bf16.mxu0 0
        %2615 = vmatpush1.bf16.msra.mxu0 0
        %2616 = vmatprep.mubr.bf16.mxu0 0
        %2617 = vmatmul.mubr.bf16.gmra.mrb[0].mxu0 %v2453
        %v2618 = vpop.f32.mrb[0].mxu0
        %v2619 = vadd.f32 %v2239, %v2618
        %v2620 = vpop.f32.mrb[0].mxu0
        %v2621 = vadd.f32 %v2243, %v2620
        %v2622 = vpop.f32.mrb[0].mxu0
        %v2623 = vadd.f32 %v2239, %v2622
        %v2624 = vpop.f32.mrb[0].mxu0
        %v2625 = vadd.f32 %v2243, %v2624
        %2626 = vdwg.mxu0
        %2627 = vmatprep.subr.bf16.mxu0 %v2397
        %2628 = vmatpush1.bf16.msra.mxu0 %v2396
        %2629 = vmatprep.subr.bf16.mxu0 %v2413
        %2630 = vmatpush1.bf16.msra.mxu0 %v2412
        %2631 = vmatprep.subr.bf16.mxu0 0
        %2632 = vmatpush1.bf16.msra.mxu0 0
        %2633 = vmatprep.subr.bf16.mxu0 0
        %2634 = vmatpush1.bf16.msra.mxu0 0
        %2635 = vmatprep.subr.bf16.mxu0 0
        %2636 = vmatpush1.bf16.msra.mxu0 0
        %2637 = vmatprep.subr.bf16.mxu0 0
        %2638 = vmatpush1.bf16.msra.mxu0 0
        %2639 = vmatprep.subr.bf16.mxu0 0
        %2640 = vmatpush1.bf16.msra.mxu0 0
        %2641 = vmatprep.subr.bf16.mxu0 0
        %2642 = vmatpush1.bf16.msra.mxu0 0
        %2643 = vmatprep.subr.bf16.mxu0 0
        %2644 = vmatpush1.bf16.msra.mxu0 0
        %2645 = vmatprep.subr.bf16.mxu0 0
        %2646 = vmatpush1.bf16.msra.mxu0 0
        %2647 = vmatprep.subr.bf16.mxu0 0
        %2648 = vmatpush1.bf16.msra.mxu0 0
        %2649 = vmatprep.subr.bf16.mxu0 0
        %2650 = vmatpush1.bf16.msra.mxu0 0
        %2651 = vmatprep.subr.bf16.mxu0 0
        %2652 = vmatpush1.bf16.msra.mxu0 0
        %2653 = vmatprep.subr.bf16.mxu0 0
        %2654 = vmatpush1.bf16.msra.mxu0 0
        %2655 = vmatprep.subr.bf16.mxu0 0
        %2656 = vmatpush1.bf16.msra.mxu0 0
        %2657 = vmatprep.subr.bf16.mxu0 0
        %2658 = vmatpush1.bf16.msra.mxu0 0
        %2659 = vmatprep.mubr.bf16.mxu0 0
        %2660 = vmatmul.mubr.bf16.gmra.mrb[0].mxu0 %v2453
        %v2661 = vpop.f32.mrb[0].mxu0
        %v2662 = vadd.f32 %v2247, %v2661
        %v2663 = vpop.f32.mrb[0].mxu0
        %v2664 = vadd.f32 %v2251, %v2663
        %v2665 = vpop.f32.mrb[0].mxu0
        %v2666 = vadd.f32 %v2247, %v2665
        %v2667 = vpop.f32.mrb[0].mxu0
        %v2668 = vadd.f32 %v2251, %v2667
        %2669 = vdwg.mxu0
        %2670 = vmatprep.subr.bf16.mxu0 %v2399
        %2671 = vmatpush1.bf16.msra.mxu0 %v2398
        %2672 = vmatprep.subr.bf16.mxu0 %v2415
        %2673 = vmatpush1.bf16.msra.mxu0 %v2414
        %2674 = vmatprep.subr.bf16.mxu0 0
        %2675 = vmatpush1.bf16.msra.mxu0 0
        %2676 = vmatprep.subr.bf16.mxu0 0
        %2677 = vmatpush1.bf16.msra.mxu0 0
        %2678 = vmatprep.subr.bf16.mxu0 0
        %2679 = vmatpush1.bf16.msra.mxu0 0
        %2680 = vmatprep.subr.bf16.mxu0 0
        %2681 = vmatpush1.bf16.msra.mxu0 0
        %2682 = vmatprep.subr.bf16.mxu0 0
        %2683 = vmatpush1.bf16.msra.mxu0 0
        %2684 = vmatprep.subr.bf16.mxu0 0
        %2685 = vmatpush1.bf16.msra.mxu0 0
        %2686 = vmatprep.subr.bf16.mxu0 0
        %2687 = vmatpush1.bf16.msra.mxu0 0
        %2688 = vmatprep.subr.bf16.mxu0 0
        %2689 = vmatpush1.bf16.msra.mxu0 0
        %2690 = vmatprep.subr.bf16.mxu0 0
        %2691 = vmatpush1.bf16.msra.mxu0 0
        %2692 = vmatprep.subr.bf16.mxu0 0
        %2693 = vmatpush1.bf16.msra.mxu0 0
        %2694 = vmatprep.subr.bf16.mxu0 0
        %2695 = vmatpush1.bf16.msra.mxu0 0
        %2696 = vmatprep.subr.bf16.mxu0 0
        %2697 = vmatpush1.bf16.msra.mxu0 0
        %2698 = vmatprep.subr.bf16.mxu0 0
        %2699 = vmatpush1.bf16.msra.mxu0 0
        %2700 = vmatprep.subr.bf16.mxu0 0
        %2701 = vmatpush1.bf16.msra.mxu0 0
        %2702 = vmatprep.mubr.bf16.mxu0 0
        %2703 = vmatmul.mubr.bf16.gmra.mrb[0].mxu0 %v2453
        %v2704 = vpop.f32.mrb[0].mxu0
        %v2705 = vadd.f32 %v2255, %v2704
        %v2706 = vpop.f32.mrb[0].mxu0
        %v2707 = vadd.f32 %v2259, %v2706
        %v2708 = vpop.f32.mrb[0].mxu0
        %v2709 = vadd.f32 %v2255, %v2708
        %v2710 = vpop.f32.mrb[0].mxu0
        %v2711 = vadd.f32 %v2259, %v2710
        %2712 = vdwg.mxu0
        %2713 = vmatprep.subr.bf16.mxu0 %v2401
        %2714 = vmatpush1.bf16.msra.mxu0 %v2400
        %2715 = vmatprep.subr.bf16.mxu0 %v2417
        %2716 = vmatpush1.bf16.msra.mxu0 %v2416
        %2717 = vmatprep.subr.bf16.mxu0 0
        %2718 = vmatpush1.bf16.msra.mxu0 0
        %2719 = vmatprep.subr.bf16.mxu0 0
        %2720 = vmatpush1.bf16.msra.mxu0 0
        %2721 = vmatprep.subr.bf16.mxu0 0
        %2722 = vmatpush1.bf16.msra.mxu0 0
        %2723 = vmatprep.subr.bf16.mxu0 0
        %2724 = vmatpush1.bf16.msra.mxu0 0
        %2725 = vmatprep.subr.bf16.mxu0 0
        %2726 = vmatpush1.bf16.msra.mxu0 0
        %2727 = vmatprep.subr.bf16.mxu0 0
        %2728 = vmatpush1.bf16.msra.mxu0 0
        %2729 = vmatprep.subr.bf16.mxu0 0
        %2730 = vmatpush1.bf16.msra.mxu0 0
        %2731 = vmatprep.subr.bf16.mxu0 0
        %2732 = vmatpush1.bf16.msra.mxu0 0
        %2733 = vmatprep.subr.bf16.mxu0 0
        %2734 = vmatpush1.bf16.msra.mxu0 0
        %2735 = vmatprep.subr.bf16.mxu0 0
        %2736 = vmatpush1.bf16.msra.mxu0 0
        %2737 = vmatprep.subr.bf16.mxu0 0
        %2738 = vmatpush1.bf16.msra.mxu0 0
        %2739 = vmatprep.subr.bf16.mxu0 0
        %2740 = vmatpush1.bf16.msra.mxu0 0
        %2741 = vmatprep.subr.bf16.mxu0 0
        %2742 = vmatpush1.bf16.msra.mxu0 0
        %2743 = vmatprep.subr.bf16.mxu0 0
        %2744 = vmatpush1.bf16.msra.mxu0 0
        %2745 = vmatprep.mubr.bf16.mxu0 0
        %2746 = vmatmul.mubr.bf16.gmra.mrb[0].mxu0 %v2453
        %v2747 = vpop.f32.mrb[0].mxu0
        %v2748 = vadd.f32 %v2263, %v2747
        %v2749 = vpop.f32.mrb[0].mxu0
        %v2750 = vadd.f32 %v2267, %v2749
        %v2751 = vpop.f32.mrb[0].mxu0
        %v2752 = vadd.f32 %v2263, %v2751
        %v2753 = vpop.f32.mrb[0].mxu0
        %v2754 = vadd.f32 %v2267, %v2753
        %2755 = vdwg.mxu0
        %2756 = vmatprep.subr.bf16.mxu0 %v2403
        %2757 = vmatpush1.bf16.msra.mxu0 %v2402
        %2758 = vmatprep.subr.bf16.mxu0 %v2419
        %2759 = vmatpush1.bf16.msra.mxu0 %v2418
        %2760 = vmatprep.subr.bf16.mxu0 0
        %2761 = vmatpush1.bf16.msra.mxu0 0
        %2762 = vmatprep.subr.bf16.mxu0 0
        %2763 = vmatpush1.bf16.msra.mxu0 0
        %2764 = vmatprep.subr.bf16.mxu0 0
        %2765 = vmatpush1.bf16.msra.mxu0 0
        %2766 = vmatprep.subr.bf16.mxu0 0
        %2767 = vmatpush1.bf16.msra.mxu0 0
        %2768 = vmatprep.subr.bf16.mxu0 0
        %2769 = vmatpush1.bf16.msra.mxu0 0
        %2770 = vmatprep.subr.bf16.mxu0 0
        %2771 = vmatpush1.bf16.msra.mxu0 0
        %2772 = vmatprep.subr.bf16.mxu0 0
        %2773 = vmatpush1.bf16.msra.mxu0 0
        %2774 = vmatprep.subr.bf16.mxu0 0
        %2775 = vmatpush1.bf16.msra.mxu0 0
        %2776 = vmatprep.subr.bf16.mxu0 0
        %2777 = vmatpush1.bf16.msra.mxu0 0
        %2778 = vmatprep.subr.bf16.mxu0 0
        %2779 = vmatpush1.bf16.msra.mxu0 0
        %2780 = vmatprep.subr.bf16.mxu0 0
        %2781 = vmatpush1.bf16.msra.mxu0 0
        %2782 = vmatprep.subr.bf16.mxu0 0
        %2783 = vmatpush1.bf16.msra.mxu0 0
        %2784 = vmatprep.subr.bf16.mxu0 0
        %2785 = vmatpush1.bf16.msra.mxu0 0
        %2786 = vmatprep.subr.bf16.mxu0 0
        %2787 = vmatpush1.bf16.msra.mxu0 0
        %2788 = vmatprep.mubr.bf16.mxu0 0
        %2789 = vmatmul.mubr.bf16.gmra.mrb[0].mxu0 %v2453
        %v2790 = vpop.f32.mrb[0].mxu0
        %v2791 = vadd.f32 %v2271, %v2790
        %v2792 = vpop.f32.mrb[0].mxu0
        %v2793 = vadd.f32 %v2275, %v2792
        %v2794 = vpop.f32.mrb[0].mxu0
        %v2795 = vadd.f32 %v2271, %v2794
        %v2796 = vpop.f32.mrb[0].mxu0
        %v2797 = vadd.f32 %v2275, %v2796
        %2798 = vdwg.mxu0
        %v2799 = vmax.f32 %v2490, 0.0
        %v2800 = vmax.f32 %v2492, 0.0
        %v2801 = vmax.f32 %v2533, 0.0
        %v2802 = vmax.f32 %v2535, 0.0
        %v2803 = vmax.f32 %v2576, 0.0
        %v2804 = vmax.f32 %v2578, 0.0
        %v2805 = vmax.f32 %v2619, 0.0
        %v2806 = vmax.f32 %v2621, 0.0
        %v2807 = vmax.f32 %v2662, 0.0
        %v2808 = vmax.f32 %v2664, 0.0
        %v2809 = vmax.f32 %v2705, 0.0
        %v2810 = vmax.f32 %v2707, 0.0
        %v2811 = vmax.f32 %v2748, 0.0
        %v2812 = vmax.f32 %v2750, 0.0
        %v2813 = vmax.f32 %v2791, 0.0
        %v2814 = vmax.f32 %v2793, 0.0
        %v2815 = vmax.f32 %v2494, 0.0
        %v2816 = vmax.f32 %v2496, 0.0
        %v2817 = vmax.f32 %v2537, 0.0
        %v2818 = vmax.f32 %v2539, 0.0
        %v2819 = vmax.f32 %v2580, 0.0
        %v2820 = vmax.f32 %v2582, 0.0
        %v2821 = vmax.f32 %v2623, 0.0
        %v2822 = vmax.f32 %v2625, 0.0
        %v2823 = vmax.f32 %v2666, 0.0
        %v2824 = vmax.f32 %v2668, 0.0
        %v2825 = vmax.f32 %v2709, 0.0
        %v2826 = vmax.f32 %v2711, 0.0
        %v2827 = vmax.f32 %v2752, 0.0
        %v2828 = vmax.f32 %v2754, 0.0
        %v2829 = vmax.f32 %v2795, 0.0
        %v2830 = vmax.f32 %v2797, 0.0
        %v2831 = vpack.c.bf16 %v2815, %v2799
        %v2832 = vpack.c.bf16 %v2816, %v2800
        %v2833 = vpack.c.bf16 %v2817, %v2801
        %v2834 = vpack.c.bf16 %v2818, %v2802
        %v2835 = vpack.c.bf16 %v2819, %v2803
        %v2836 = vpack.c.bf16 %v2820, %v2804
        %v2837 = vpack.c.bf16 %v2821, %v2805
        %v2838 = vpack.c.bf16 %v2822, %v2806
        %v2839 = vpack.c.bf16 %v2823, %v2807
        %v2840 = vpack.c.bf16 %v2824, %v2808
        %v2841 = vpack.c.bf16 %v2825, %v2809
        %v2842 = vpack.c.bf16 %v2826, %v2810
        %v2843 = vpack.c.bf16 %v2827, %v2811
        %v2844 = vpack.c.bf16 %v2828, %v2812
        %v2845 = vpack.c.bf16 %v2829, %v2813
        %v2846 = vpack.c.bf16 %v2830, %v2814
        %v2847 = vld [vmem:[%s807] sm:$0xf]
        %v2848 = vld [vmem:[%s807 + $0x4] sm:$0xf]
        %v2849 = vld [vmem:[%s807 + $0x8] sm:$0xf]
        %v2850 = vld [vmem:[%s807 + $0xc] sm:$0xf]
        %v2851 = vld [vmem:[%s807 + $0x10] sm:$0xf]
        %v2852 = vld [vmem:[%s807 + $0x14] sm:$0xf]
        %v2853 = vld [vmem:[%s807 + $0x18] sm:$0xf]
        %v2854 = vld [vmem:[%s807 + $0x1c] sm:$0xf]
        %v2855 = vld [vmem:[%s807 + $0x20] sm:$0xf]
        %v2856 = vld [vmem:[%s807 + $0x24] sm:$0xf]
        %v2857 = vld [vmem:[%s807 + $0x28] sm:$0xf]
        %v2858 = vld [vmem:[%s807 + $0x2c] sm:$0xf]
        %v2859 = vld [vmem:[%s807 + $0x30] sm:$0xf]
        %v2860 = vld [vmem:[%s807 + $0x34] sm:$0xf]
        %v2861 = vld [vmem:[%s807 + $0x38] sm:$0xf]
        %v2862 = vld [vmem:[%s807 + $0x3c] sm:$0xf]
        %v2863 = vld [vmem:[%s807 + $0x40] sm:$0xf]
        %v2864 = vld [vmem:[%s807 + $0x44] sm:$0xf]
        %v2865 = vld [vmem:[%s807 + $0x48] sm:$0xf]
        %v2866 = vld [vmem:[%s807 + $0x4c] sm:$0xf]
        %v2867 = vld [vmem:[%s807 + $0x50] sm:$0xf]
        %v2868 = vld [vmem:[%s807 + $0x54] sm:$0xf]
        %v2869 = vld [vmem:[%s807 + $0x58] sm:$0xf]
        %v2870 = vld [vmem:[%s807 + $0x5c] sm:$0xf]
        %v2871 = vld [vmem:[%s807 + $0x60] sm:$0xf]
        %v2872 = vld [vmem:[%s807 + $0x64] sm:$0xf]
        %v2873 = vld [vmem:[%s807 + $0x68] sm:$0xf]
        %v2874 = vld [vmem:[%s807 + $0x6c] sm:$0xf]
        %v2875 = vld [vmem:[%s807 + $0x70] sm:$0xf]
        %v2876 = vld [vmem:[%s807 + $0x74] sm:$0xf]
        %v2877 = vld [vmem:[%s807 + $0x78] sm:$0xf]
        %v2878 = vld [vmem:[%s807 + $0x7c] sm:$0xf]
        %v2879 = vld [vmem:[%s807 + $0x80] sm:$0xf]
        %v2880 = vld [vmem:[%s807 + $0x84] sm:$0xf]
        %v2881 = vld [vmem:[%s807 + $0x88] sm:$0xf]
        %v2882 = vld [vmem:[%s807 + $0x8c] sm:$0xf]
        %v2883 = vld [vmem:[%s807 + $0x90] sm:$0xf]
        %v2884 = vld [vmem:[%s807 + $0x94] sm:$0xf]
        %v2885 = vld [vmem:[%s807 + $0x98] sm:$0xf]
        %v2886 = vld [vmem:[%s807 + $0x9c] sm:$0xf]
        %v2887 = vld [vmem:[%s807 + $0xa0] sm:$0xf]
        %v2888 = vld [vmem:[%s807 + $0xa4] sm:$0xf]
        %v2889 = vld [vmem:[%s807 + $0xa8] sm:$0xf]
        %v2890 = vld [vmem:[%s807 + $0xac] sm:$0xf]
        %v2891 = vld [vmem:[%s807 + $0xb0] sm:$0xf]
        %v2892 = vld [vmem:[%s807 + $0xb4] sm:$0xf]
        %v2893 = vld [vmem:[%s807 + $0xb8] sm:$0xf]
        %v2894 = vld [vmem:[%s807 + $0xbc] sm:$0xf]
        %v2895 = vld [vmem:[%s807 + $0xc0] sm:$0xf]
        %v2896 = vld [vmem:[%s807 + $0xc4] sm:$0xf]
        %v2897 = vld [vmem:[%s807 + $0xc8] sm:$0xf]
        %v2898 = vld [vmem:[%s807 + $0xcc] sm:$0xf]
        %v2899 = vld [vmem:[%s807 + $0xd0] sm:$0xf]
        %v2900 = vld [vmem:[%s807 + $0xd4] sm:$0xf]
        %v2901 = vld [vmem:[%s807 + $0xd8] sm:$0xf]
        %v2902 = vld [vmem:[%s807 + $0xdc] sm:$0xf]
        %v2903 = vld [vmem:[%s807 + $0xe0] sm:$0xf]
        %v2904 = vld [vmem:[%s807 + $0xe4] sm:$0xf]
        %v2905 = vld [vmem:[%s807 + $0xe8] sm:$0xf]
        %v2906 = vld [vmem:[%s807 + $0xec] sm:$0xf]
        %v2907 = vld [vmem:[%s807 + $0xf0] sm:$0xf]
        %v2908 = vld [vmem:[%s807 + $0xf4] sm:$0xf]
        %v2909 = vld [vmem:[%s807 + $0xf8] sm:$0xf]
        %v2910 = vld [vmem:[%s807 + $0xfc] sm:$0xf]
        %v2911 = vld [vmem:[%s807 + $0x100] sm:$0xf]
        %v2912 = vld [vmem:[%s807 + $0x104] sm:$0xf]
        %v2913 = vld [vmem:[%s807 + $0x108] sm:$0xf]
        %v2914 = vld [vmem:[%s807 + $0x10c] sm:$0xf]
        %v2915 = vld [vmem:[%s807 + $0x110] sm:$0xf]
        %v2916 = vld [vmem:[%s807 + $0x114] sm:$0xf]
        %v2917 = vld [vmem:[%s807 + $0x118] sm:$0xf]
        %v2918 = vld [vmem:[%s807 + $0x11c] sm:$0xf]
        %v2919 = vld [vmem:[%s807 + $0x120] sm:$0xf]
        %v2920 = vld [vmem:[%s807 + $0x124] sm:$0xf]
        %v2921 = vld [vmem:[%s807 + $0x128] sm:$0xf]
        %v2922 = vld [vmem:[%s807 + $0x12c] sm:$0xf]
        %v2923 = vld [vmem:[%s807 + $0x130] sm:$0xf]
        %v2924 = vld [vmem:[%s807 + $0x134] sm:$0xf]
        %v2925 = vld [vmem:[%s807 + $0x138] sm:$0xf]
        %v2926 = vld [vmem:[%s807 + $0x13c] sm:$0xf]
        %v2927 = vld [vmem:[%s807 + $0x140] sm:$0xf]
        %v2928 = vld [vmem:[%s807 + $0x144] sm:$0xf]
        %v2929 = vld [vmem:[%s807 + $0x148] sm:$0xf]
        %v2930 = vld [vmem:[%s807 + $0x14c] sm:$0xf]
        %v2931 = vld [vmem:[%s807 + $0x150] sm:$0xf]
        %v2932 = vld [vmem:[%s807 + $0x154] sm:$0xf]
        %v2933 = vld [vmem:[%s807 + $0x158] sm:$0xf]
        %v2934 = vld [vmem:[%s807 + $0x15c] sm:$0xf]
        %v2935 = vld [vmem:[%s807 + $0x160] sm:$0xf]
        %v2936 = vld [vmem:[%s807 + $0x164] sm:$0xf]
        %v2937 = vld [vmem:[%s807 + $0x168] sm:$0xf]
        %v2938 = vld [vmem:[%s807 + $0x16c] sm:$0xf]
        %v2939 = vld [vmem:[%s807 + $0x170] sm:$0xf]
        %v2940 = vld [vmem:[%s807 + $0x174] sm:$0xf]
        %v2941 = vld [vmem:[%s807 + $0x178] sm:$0xf]
        %v2942 = vld [vmem:[%s807 + $0x17c] sm:$0xf]
        %v2943 = vld [vmem:[%s807 + $0x180] sm:$0xf]
        %v2944 = vld [vmem:[%s807 + $0x184] sm:$0xf]
        %v2945 = vld [vmem:[%s807 + $0x188] sm:$0xf]
        %v2946 = vld [vmem:[%s807 + $0x18c] sm:$0xf]
        %v2947 = vld [vmem:[%s807 + $0x190] sm:$0xf]
        %v2948 = vld [vmem:[%s807 + $0x194] sm:$0xf]
        %v2949 = vld [vmem:[%s807 + $0x198] sm:$0xf]
        %v2950 = vld [vmem:[%s807 + $0x19c] sm:$0xf]
        %v2951 = vld [vmem:[%s807 + $0x1a0] sm:$0xf]
        %v2952 = vld [vmem:[%s807 + $0x1a4] sm:$0xf]
        %v2953 = vld [vmem:[%s807 + $0x1a8] sm:$0xf]
        %v2954 = vld [vmem:[%s807 + $0x1ac] sm:$0xf]
        %v2955 = vld [vmem:[%s807 + $0x1b0] sm:$0xf]
        %v2956 = vld [vmem:[%s807 + $0x1b4] sm:$0xf]
        %v2957 = vld [vmem:[%s807 + $0x1b8] sm:$0xf]
        %v2958 = vld [vmem:[%s807 + $0x1bc] sm:$0xf]
        %v2959 = vld [vmem:[%s807 + $0x1c0] sm:$0xf]
        %v2960 = vld [vmem:[%s807 + $0x1c4] sm:$0xf]
        %v2961 = vld [vmem:[%s807 + $0x1c8] sm:$0xf]
        %v2962 = vld [vmem:[%s807 + $0x1cc] sm:$0xf]
        %v2963 = vld [vmem:[%s807 + $0x1d0] sm:$0xf]
        %v2964 = vld [vmem:[%s807 + $0x1d4] sm:$0xf]
        %v2965 = vld [vmem:[%s807 + $0x1d8] sm:$0xf]
        %v2966 = vld [vmem:[%s807 + $0x1dc] sm:$0xf]
        %v2967 = vld [vmem:[%s807 + $0x1e0] sm:$0xf]
        %v2968 = vld [vmem:[%s807 + $0x1e4] sm:$0xf]
        %v2969 = vld [vmem:[%s807 + $0x1e8] sm:$0xf]
        %v2970 = vld [vmem:[%s807 + $0x1ec] sm:$0xf]
        %v2971 = vld [vmem:[%s807 + $0x1f0] sm:$0xf]
        %v2972 = vld [vmem:[%s807 + $0x1f4] sm:$0xf]
        %v2973 = vld [vmem:[%s807 + $0x1f8] sm:$0xf]
        %v2974 = vld [vmem:[%s807 + $0x1fc] sm:$0xf]
        %v2975 = vld [vmem:[%s807 + $0x200] sm:$0xf]
        %v2976 = vld [vmem:[%s807 + $0x204] sm:$0xf]
        %v2977 = vld [vmem:[%s807 + $0x208] sm:$0xf]
        %v2978 = vld [vmem:[%s807 + $0x20c] sm:$0xf]
        %v2979 = vld [vmem:[%s807 + $0x210] sm:$0xf]
        %v2980 = vld [vmem:[%s807 + $0x214] sm:$0xf]
        %v2981 = vld [vmem:[%s807 + $0x218] sm:$0xf]
        %v2982 = vld [vmem:[%s807 + $0x21c] sm:$0xf]
        %v2983 = vld [vmem:[%s807 + $0x220] sm:$0xf]
        %v2984 = vld [vmem:[%s807 + $0x224] sm:$0xf]
        %v2985 = vld [vmem:[%s807 + $0x228] sm:$0xf]
        %v2986 = vld [vmem:[%s807 + $0x22c] sm:$0xf]
        %v2987 = vld [vmem:[%s807 + $0x230] sm:$0xf]
        %v2988 = vld [vmem:[%s807 + $0x234] sm:$0xf]
        %v2989 = vld [vmem:[%s807 + $0x238] sm:$0xf]
        %v2990 = vld [vmem:[%s807 + $0x23c] sm:$0xf]
        %v2991 = vld [vmem:[%s807 + $0x240] sm:$0xf]
        %v2992 = vld [vmem:[%s807 + $0x244] sm:$0xf]
        %v2993 = vld [vmem:[%s807 + $0x248] sm:$0xf]
        %v2994 = vld [vmem:[%s807 + $0x24c] sm:$0xf]
        %v2995 = vld [vmem:[%s807 + $0x250] sm:$0xf]
        %v2996 = vld [vmem:[%s807 + $0x254] sm:$0xf]
        %v2997 = vld [vmem:[%s807 + $0x258] sm:$0xf]
        %v2998 = vld [vmem:[%s807 + $0x25c] sm:$0xf]
        %v2999 = vld [vmem:[%s807 + $0x260] sm:$0xf]
        %v3000 = vld [vmem:[%s807 + $0x264] sm:$0xf]
        %v3001 = vld [vmem:[%s807 + $0x268] sm:$0xf]
        %v3002 = vld [vmem:[%s807 + $0x26c] sm:$0xf]
        %v3003 = vld [vmem:[%s807 + $0x270] sm:$0xf]
        %v3004 = vld [vmem:[%s807 + $0x274] sm:$0xf]
        %v3005 = vld [vmem:[%s807 + $0x278] sm:$0xf]
        %v3006 = vld [vmem:[%s807 + $0x27c] sm:$0xf]
        %v3007 = vld [vmem:[%s807 + $0x280] sm:$0xf]
        %v3008 = vld [vmem:[%s807 + $0x284] sm:$0xf]
        %v3009 = vld [vmem:[%s807 + $0x288] sm:$0xf]
        %v3010 = vld [vmem:[%s807 + $0x28c] sm:$0xf]
        %v3011 = vld [vmem:[%s807 + $0x290] sm:$0xf]
        %v3012 = vld [vmem:[%s807 + $0x294] sm:$0xf]
        %v3013 = vld [vmem:[%s807 + $0x298] sm:$0xf]
        %v3014 = vld [vmem:[%s807 + $0x29c] sm:$0xf]
        %v3015 = vld [vmem:[%s807 + $0x2a0] sm:$0xf]
        %v3016 = vld [vmem:[%s807 + $0x2a4] sm:$0xf]
        %v3017 = vld [vmem:[%s807 + $0x2a8] sm:$0xf]
        %v3018 = vld [vmem:[%s807 + $0x2ac] sm:$0xf]
        %v3019 = vld [vmem:[%s807 + $0x2b0] sm:$0xf]
        %v3020 = vld [vmem:[%s807 + $0x2b4] sm:$0xf]
        %v3021 = vld [vmem:[%s807 + $0x2b8] sm:$0xf]
        %v3022 = vld [vmem:[%s807 + $0x2bc] sm:$0xf]
        %v3023 = vld [vmem:[%s807 + $0x2c0] sm:$0xf]
        %v3024 = vld [vmem:[%s807 + $0x2c4] sm:$0xf]
        %v3025 = vld [vmem:[%s807 + $0x2c8] sm:$0xf]
        %v3026 = vld [vmem:[%s807 + $0x2cc] sm:$0xf]
        %v3027 = vld [vmem:[%s807 + $0x2d0] sm:$0xf]
        %v3028 = vld [vmem:[%s807 + $0x2d4] sm:$0xf]
        %v3029 = vld [vmem:[%s807 + $0x2d8] sm:$0xf]
        %v3030 = vld [vmem:[%s807 + $0x2dc] sm:$0xf]
        %v3031 = vld [vmem:[%s807 + $0x2e0] sm:$0xf]
        %v3032 = vld [vmem:[%s807 + $0x2e4] sm:$0xf]
        %v3033 = vld [vmem:[%s807 + $0x2e8] sm:$0xf]
        %v3034 = vld [vmem:[%s807 + $0x2ec] sm:$0xf]
        %v3035 = vld [vmem:[%s807 + $0x2f0] sm:$0xf]
        %v3036 = vld [vmem:[%s807 + $0x2f4] sm:$0xf]
        %v3037 = vld [vmem:[%s807 + $0x2f8] sm:$0xf]
        %v3038 = vld [vmem:[%s807 + $0x2fc] sm:$0xf]
        %v3039 = vld [vmem:[%s807 + $0x300] sm:$0xf]
        %v3040 = vld [vmem:[%s807 + $0x304] sm:$0xf]
        %v3041 = vld [vmem:[%s807 + $0x308] sm:$0xf]
        %v3042 = vld [vmem:[%s807 + $0x30c] sm:$0xf]
        %v3043 = vld [vmem:[%s807 + $0x310] sm:$0xf]
        %v3044 = vld [vmem:[%s807 + $0x314] sm:$0xf]
        %v3045 = vld [vmem:[%s807 + $0x318] sm:$0xf]
        %v3046 = vld [vmem:[%s807 + $0x31c] sm:$0xf]
        %v3047 = vld [vmem:[%s807 + $0x320] sm:$0xf]
        %v3048 = vld [vmem:[%s807 + $0x324] sm:$0xf]
        %v3049 = vld [vmem:[%s807 + $0x328] sm:$0xf]
        %v3050 = vld [vmem:[%s807 + $0x32c] sm:$0xf]
        %v3051 = vld [vmem:[%s807 + $0x330] sm:$0xf]
        %v3052 = vld [vmem:[%s807 + $0x334] sm:$0xf]
        %v3053 = vld [vmem:[%s807 + $0x338] sm:$0xf]
        %v3054 = vld [vmem:[%s807 + $0x33c] sm:$0xf]
        %v3055 = vld [vmem:[%s807 + $0x340] sm:$0xf]
        %v3056 = vld [vmem:[%s807 + $0x344] sm:$0xf]
        %v3057 = vld [vmem:[%s807 + $0x348] sm:$0xf]
        %v3058 = vld [vmem:[%s807 + $0x34c] sm:$0xf]
        %v3059 = vld [vmem:[%s807 + $0x350] sm:$0xf]
        %v3060 = vld [vmem:[%s807 + $0x354] sm:$0xf]
        %v3061 = vld [vmem:[%s807 + $0x358] sm:$0xf]
        %v3062 = vld [vmem:[%s807 + $0x35c] sm:$0xf]
        %v3063 = vld [vmem:[%s807 + $0x360] sm:$0xf]
        %v3064 = vld [vmem:[%s807 + $0x364] sm:$0xf]
        %v3065 = vld [vmem:[%s807 + $0x368] sm:$0xf]
        %v3066 = vld [vmem:[%s807 + $0x36c] sm:$0xf]
        %v3067 = vld [vmem:[%s807 + $0x370] sm:$0xf]
        %v3068 = vld [vmem:[%s807 + $0x374] sm:$0xf]
        %v3069 = vld [vmem:[%s807 + $0x378] sm:$0xf]
        %v3070 = vld [vmem:[%s807 + $0x37c] sm:$0xf]
        %v3071 = vld [vmem:[%s807 + $0x380] sm:$0xf]
        %v3072 = vld [vmem:[%s807 + $0x384] sm:$0xf]
        %v3073 = vld [vmem:[%s807 + $0x388] sm:$0xf]
        %v3074 = vld [vmem:[%s807 + $0x38c] sm:$0xf]
        %v3075 = vld [vmem:[%s807 + $0x390] sm:$0xf]
        %v3076 = vld [vmem:[%s807 + $0x394] sm:$0xf]
        %v3077 = vld [vmem:[%s807 + $0x398] sm:$0xf]
        %v3078 = vld [vmem:[%s807 + $0x39c] sm:$0xf]
        %v3079 = vld [vmem:[%s807 + $0x3a0] sm:$0xf]
        %v3080 = vld [vmem:[%s807 + $0x3a4] sm:$0xf]
        %v3081 = vld [vmem:[%s807 + $0x3a8] sm:$0xf]
        %v3082 = vld [vmem:[%s807 + $0x3ac] sm:$0xf]
        %v3083 = vld [vmem:[%s807 + $0x3b0] sm:$0xf]
        %v3084 = vld [vmem:[%s807 + $0x3b4] sm:$0xf]
        %v3085 = vld [vmem:[%s807 + $0x3b8] sm:$0xf]
        %v3086 = vld [vmem:[%s807 + $0x3bc] sm:$0xf]
        %v3087 = vld [vmem:[%s807 + $0x3c0] sm:$0xf]
        %v3088 = vld [vmem:[%s807 + $0x3c4] sm:$0xf]
        %v3089 = vld [vmem:[%s807 + $0x3c8] sm:$0xf]
        %v3090 = vld [vmem:[%s807 + $0x3cc] sm:$0xf]
        %v3091 = vld [vmem:[%s807 + $0x3d0] sm:$0xf]
        %v3092 = vld [vmem:[%s807 + $0x3d4] sm:$0xf]
        %v3093 = vld [vmem:[%s807 + $0x3d8] sm:$0xf]
        %v3094 = vld [vmem:[%s807 + $0x3dc] sm:$0xf]
        %v3095 = vld [vmem:[%s807 + $0x3e0] sm:$0xf]
        %v3096 = vld [vmem:[%s807 + $0x3e4] sm:$0xf]
        %v3097 = vld [vmem:[%s807 + $0x3e8] sm:$0xf]
        %v3098 = vld [vmem:[%s807 + $0x3ec] sm:$0xf]
        %v3099 = vld [vmem:[%s807 + $0x3f0] sm:$0xf]
        %v3100 = vld [vmem:[%s807 + $0x3f4] sm:$0xf]
        %v3101 = vld [vmem:[%s807 + $0x3f8] sm:$0xf]
        %v3102 = vld [vmem:[%s807 + $0x3fc] sm:$0xf]
        %v3103 = vld [vmem:[%s810] sm:$0x1]
        %v3105 = vlaneseq
        %v3106 = vshrl.u32 %v3105, 7
        %v3107 = vsub.s32 0, %v3106
        %v3108 = vrot.slane %v3103, %v3107
        %v3366 = vunpack.c.l.b16 %v2847
        %v3367 = vunpack.c.l.b16 %v2848
        %v3368 = vunpack.c.l.b16 %v2849
        %v3369 = vunpack.c.l.b16 %v2850
        %v3370 = vunpack.c.l.b16 %v2851
        %v3371 = vunpack.c.l.b16 %v2852
        %v3372 = vunpack.c.l.b16 %v2853
        %v3373 = vunpack.c.l.b16 %v2854
        %v3374 = vunpack.c.l.b16 %v2855
        %v3375 = vunpack.c.l.b16 %v2856
        %v3376 = vunpack.c.l.b16 %v2857
        %v3377 = vunpack.c.l.b16 %v2858
        %v3378 = vunpack.c.l.b16 %v2859
        %v3379 = vunpack.c.l.b16 %v2860
        %v3380 = vunpack.c.l.b16 %v2861
        %v3381 = vunpack.c.l.b16 %v2862
        %v3382 = vunpack.c.l.b16 %v2863
        %v3383 = vunpack.c.l.b16 %v2864
        %v3384 = vunpack.c.l.b16 %v2865
        %v3385 = vunpack.c.l.b16 %v2866
        %v3386 = vunpack.c.l.b16 %v2867
        %v3387 = vunpack.c.l.b16 %v2868
        %v3388 = vunpack.c.l.b16 %v2869
        %v3389 = vunpack.c.l.b16 %v2870
        %v3390 = vunpack.c.l.b16 %v2871
        %v3391 = vunpack.c.l.b16 %v2872
        %v3392 = vunpack.c.l.b16 %v2873
        %v3393 = vunpack.c.l.b16 %v2874
        %v3394 = vunpack.c.l.b16 %v2875
        %v3395 = vunpack.c.l.b16 %v2876
        %v3396 = vunpack.c.l.b16 %v2877
        %v3397 = vunpack.c.l.b16 %v2878
        %v3398 = vunpack.c.l.b16 %v2879
        %v3399 = vunpack.c.l.b16 %v2880
        %v3400 = vunpack.c.l.b16 %v2881
        %v3401 = vunpack.c.l.b16 %v2882
        %v3402 = vunpack.c.l.b16 %v2883
        %v3403 = vunpack.c.l.b16 %v2884
        %v3404 = vunpack.c.l.b16 %v2885
        %v3405 = vunpack.c.l.b16 %v2886
        %v3406 = vunpack.c.l.b16 %v2887
        %v3407 = vunpack.c.l.b16 %v2888
        %v3408 = vunpack.c.l.b16 %v2889
        %v3409 = vunpack.c.l.b16 %v2890
        %v3410 = vunpack.c.l.b16 %v2891
        %v3411 = vunpack.c.l.b16 %v2892
        %v3412 = vunpack.c.l.b16 %v2893
        %v3413 = vunpack.c.l.b16 %v2894
        %v3414 = vunpack.c.l.b16 %v2895
        %v3415 = vunpack.c.l.b16 %v2896
        %v3416 = vunpack.c.l.b16 %v2897
        %v3417 = vunpack.c.l.b16 %v2898
        %v3418 = vunpack.c.l.b16 %v2899
        %v3419 = vunpack.c.l.b16 %v2900
        %v3420 = vunpack.c.l.b16 %v2901
        %v3421 = vunpack.c.l.b16 %v2902
        %v3422 = vunpack.c.l.b16 %v2903
        %v3423 = vunpack.c.l.b16 %v2904
        %v3424 = vunpack.c.l.b16 %v2905
        %v3425 = vunpack.c.l.b16 %v2906
        %v3426 = vunpack.c.l.b16 %v2907
        %v3427 = vunpack.c.l.b16 %v2908
        %v3428 = vunpack.c.l.b16 %v2909
        %v3429 = vunpack.c.l.b16 %v2910
        %v3430 = vunpack.c.l.b16 %v2911
        %v3431 = vunpack.c.l.b16 %v2912
        %v3432 = vunpack.c.l.b16 %v2913
        %v3433 = vunpack.c.l.b16 %v2914
        %v3434 = vunpack.c.l.b16 %v2915
        %v3435 = vunpack.c.l.b16 %v2916
        %v3436 = vunpack.c.l.b16 %v2917
        %v3437 = vunpack.c.l.b16 %v2918
        %v3438 = vunpack.c.l.b16 %v2919
        %v3439 = vunpack.c.l.b16 %v2920
        %v3440 = vunpack.c.l.b16 %v2921
        %v3441 = vunpack.c.l.b16 %v2922
        %v3442 = vunpack.c.l.b16 %v2923
        %v3443 = vunpack.c.l.b16 %v2924
        %v3444 = vunpack.c.l.b16 %v2925
        %v3445 = vunpack.c.l.b16 %v2926
        %v3446 = vunpack.c.l.b16 %v2927
        %v3447 = vunpack.c.l.b16 %v2928
        %v3448 = vunpack.c.l.b16 %v2929
        %v3449 = vunpack.c.l.b16 %v2930
        %v3450 = vunpack.c.l.b16 %v2931
        %v3451 = vunpack.c.l.b16 %v2932
        %v3452 = vunpack.c.l.b16 %v2933
        %v3453 = vunpack.c.l.b16 %v2934
        %v3454 = vunpack.c.l.b16 %v2935
        %v3455 = vunpack.c.l.b16 %v2936
        %v3456 = vunpack.c.l.b16 %v2937
        %v3457 = vunpack.c.l.b16 %v2938
        %v3458 = vunpack.c.l.b16 %v2939
        %v3459 = vunpack.c.l.b16 %v2940
        %v3460 = vunpack.c.l.b16 %v2941
        %v3461 = vunpack.c.l.b16 %v2942
        %v3462 = vunpack.c.l.b16 %v2943
        %v3463 = vunpack.c.l.b16 %v2944
        %v3464 = vunpack.c.l.b16 %v2945
        %v3465 = vunpack.c.l.b16 %v2946
        %v3466 = vunpack.c.l.b16 %v2947
        %v3467 = vunpack.c.l.b16 %v2948
        %v3468 = vunpack.c.l.b16 %v2949
        %v3469 = vunpack.c.l.b16 %v2950
        %v3470 = vunpack.c.l.b16 %v2951
        %v3471 = vunpack.c.l.b16 %v2952
        %v3472 = vunpack.c.l.b16 %v2953
        %v3473 = vunpack.c.l.b16 %v2954
        %v3474 = vunpack.c.l.b16 %v2955
        %v3475 = vunpack.c.l.b16 %v2956
        %v3476 = vunpack.c.l.b16 %v2957
        %v3477 = vunpack.c.l.b16 %v2958
        %v3478 = vunpack.c.l.b16 %v2959
        %v3479 = vunpack.c.l.b16 %v2960
        %v3480 = vunpack.c.l.b16 %v2961
        %v3481 = vunpack.c.l.b16 %v2962
        %v3482 = vunpack.c.l.b16 %v2963
        %v3483 = vunpack.c.l.b16 %v2964
        %v3484 = vunpack.c.l.b16 %v2965
        %v3485 = vunpack.c.l.b16 %v2966
        %v3486 = vunpack.c.l.b16 %v2967
        %v3487 = vunpack.c.l.b16 %v2968
        %v3488 = vunpack.c.l.b16 %v2969
        %v3489 = vunpack.c.l.b16 %v2970
        %v3490 = vunpack.c.l.b16 %v2971
        %v3491 = vunpack.c.l.b16 %v2972
        %v3492 = vunpack.c.l.b16 %v2973
        %v3493 = vunpack.c.l.b16 %v2974
        %v3494 = vunpack.c.l.b16 %v2975
        %v3495 = vunpack.c.l.b16 %v2976
        %v3496 = vunpack.c.l.b16 %v2977
        %v3497 = vunpack.c.l.b16 %v2978
        %v3498 = vunpack.c.l.b16 %v2979
        %v3499 = vunpack.c.l.b16 %v2980
        %v3500 = vunpack.c.l.b16 %v2981
        %v3501 = vunpack.c.l.b16 %v2982
        %v3502 = vunpack.c.l.b16 %v2983
        %v3503 = vunpack.c.l.b16 %v2984
        %v3504 = vunpack.c.l.b16 %v2985
        %v3505 = vunpack.c.l.b16 %v2986
        %v3506 = vunpack.c.l.b16 %v2987
        %v3507 = vunpack.c.l.b16 %v2988
        %v3508 = vunpack.c.l.b16 %v2989
        %v3509 = vunpack.c.l.b16 %v2990
        %v3510 = vunpack.c.l.b16 %v2991
        %v3511 = vunpack.c.l.b16 %v2992
        %v3512 = vunpack.c.l.b16 %v2993
        %v3513 = vunpack.c.l.b16 %v2994
        %v3514 = vunpack.c.l.b16 %v2995
        %v3515 = vunpack.c.l.b16 %v2996
        %v3516 = vunpack.c.l.b16 %v2997
        %v3517 = vunpack.c.l.b16 %v2998
        %v3518 = vunpack.c.l.b16 %v2999
        %v3519 = vunpack.c.l.b16 %v3000
        %v3520 = vunpack.c.l.b16 %v3001
        %v3521 = vunpack.c.l.b16 %v3002
        %v3522 = vunpack.c.l.b16 %v3003
        %v3523 = vunpack.c.l.b16 %v3004
        %v3524 = vunpack.c.l.b16 %v3005
        %v3525 = vunpack.c.l.b16 %v3006
        %v3526 = vunpack.c.l.b16 %v3007
        %v3527 = vunpack.c.l.b16 %v3008
        %v3528 = vunpack.c.l.b16 %v3009
        %v3529 = vunpack.c.l.b16 %v3010
        %v3530 = vunpack.c.l.b16 %v3011
        %v3531 = vunpack.c.l.b16 %v3012
        %v3532 = vunpack.c.l.b16 %v3013
        %v3533 = vunpack.c.l.b16 %v3014
        %v3534 = vunpack.c.l.b16 %v3015
        %v3535 = vunpack.c.l.b16 %v3016
        %v3536 = vunpack.c.l.b16 %v3017
        %v3537 = vunpack.c.l.b16 %v3018
        %v3538 = vunpack.c.l.b16 %v3019
        %v3539 = vunpack.c.l.b16 %v3020
        %v3540 = vunpack.c.l.b16 %v3021
        %v3541 = vunpack.c.l.b16 %v3022
        %v3542 = vunpack.c.l.b16 %v3023
        %v3543 = vunpack.c.l.b16 %v3024
        %v3544 = vunpack.c.l.b16 %v3025
        %v3545 = vunpack.c.l.b16 %v3026
        %v3546 = vunpack.c.l.b16 %v3027
        %v3547 = vunpack.c.l.b16 %v3028
        %v3548 = vunpack.c.l.b16 %v3029
        %v3549 = vunpack.c.l.b16 %v3030
        %v3550 = vunpack.c.l.b16 %v3031
        %v3551 = vunpack.c.l.b16 %v3032
        %v3552 = vunpack.c.l.b16 %v3033
        %v3553 = vunpack.c.l.b16 %v3034
        %v3554 = vunpack.c.l.b16 %v3035
        %v3555 = vunpack.c.l.b16 %v3036
        %v3556 = vunpack.c.l.b16 %v3037
        %v3557 = vunpack.c.l.b16 %v3038
        %v3558 = vunpack.c.l.b16 %v3039
        %v3559 = vunpack.c.l.b16 %v3040
        %v3560 = vunpack.c.l.b16 %v3041
        %v3561 = vunpack.c.l.b16 %v3042
        %v3562 = vunpack.c.l.b16 %v3043
        %v3563 = vunpack.c.l.b16 %v3044
        %v3564 = vunpack.c.l.b16 %v3045
        %v3565 = vunpack.c.l.b16 %v3046
        %v3566 = vunpack.c.l.b16 %v3047
        %v3567 = vunpack.c.l.b16 %v3048
        %v3568 = vunpack.c.l.b16 %v3049
        %v3569 = vunpack.c.l.b16 %v3050
        %v3570 = vunpack.c.l.b16 %v3051
        %v3571 = vunpack.c.l.b16 %v3052
        %v3572 = vunpack.c.l.b16 %v3053
        %v3573 = vunpack.c.l.b16 %v3054
        %v3574 = vunpack.c.l.b16 %v3055
        %v3575 = vunpack.c.l.b16 %v3056
        %v3576 = vunpack.c.l.b16 %v3057
        %v3577 = vunpack.c.l.b16 %v3058
        %v3578 = vunpack.c.l.b16 %v3059
        %v3579 = vunpack.c.l.b16 %v3060
        %v3580 = vunpack.c.l.b16 %v3061
        %v3581 = vunpack.c.l.b16 %v3062
        %v3582 = vunpack.c.l.b16 %v3063
        %v3583 = vunpack.c.l.b16 %v3064
        %v3584 = vunpack.c.l.b16 %v3065
        %v3585 = vunpack.c.l.b16 %v3066
        %v3586 = vunpack.c.l.b16 %v3067
        %v3587 = vunpack.c.l.b16 %v3068
        %v3588 = vunpack.c.l.b16 %v3069
        %v3589 = vunpack.c.l.b16 %v3070
        %v3590 = vunpack.c.l.b16 %v3071
        %v3591 = vunpack.c.l.b16 %v3072
        %v3592 = vunpack.c.l.b16 %v3073
        %v3593 = vunpack.c.l.b16 %v3074
        %v3594 = vunpack.c.l.b16 %v3075
        %v3595 = vunpack.c.l.b16 %v3076
        %v3596 = vunpack.c.l.b16 %v3077
        %v3597 = vunpack.c.l.b16 %v3078
        %v3598 = vunpack.c.l.b16 %v3079
        %v3599 = vunpack.c.l.b16 %v3080
        %v3600 = vunpack.c.l.b16 %v3081
        %v3601 = vunpack.c.l.b16 %v3082
        %v3602 = vunpack.c.l.b16 %v3083
        %v3603 = vunpack.c.l.b16 %v3084
        %v3604 = vunpack.c.l.b16 %v3085
        %v3605 = vunpack.c.l.b16 %v3086
        %v3606 = vunpack.c.l.b16 %v3087
        %v3607 = vunpack.c.l.b16 %v3088
        %v3608 = vunpack.c.l.b16 %v3089
        %v3609 = vunpack.c.l.b16 %v3090
        %v3610 = vunpack.c.l.b16 %v3091
        %v3611 = vunpack.c.l.b16 %v3092
        %v3612 = vunpack.c.l.b16 %v3093
        %v3613 = vunpack.c.l.b16 %v3094
        %v3614 = vunpack.c.l.b16 %v3095
        %v3615 = vunpack.c.l.b16 %v3096
        %v3616 = vunpack.c.l.b16 %v3097
        %v3617 = vunpack.c.l.b16 %v3098
        %v3618 = vunpack.c.l.b16 %v3099
        %v3619 = vunpack.c.l.b16 %v3100
        %v3620 = vunpack.c.l.b16 %v3101
        %v3621 = vunpack.c.l.b16 %v3102
        %v3622 = vpack.c.b16 %v3367, %v3366
        %v3623 = vpack.c.b16 %v3369, %v3368
        %v3624 = vpack.c.b16 %v3371, %v3370
        %v3625 = vpack.c.b16 %v3373, %v3372
        %v3626 = vpack.c.b16 %v3375, %v3374
        %v3627 = vpack.c.b16 %v3377, %v3376
        %v3628 = vpack.c.b16 %v3379, %v3378
        %v3629 = vpack.c.b16 %v3381, %v3380
        %v3630 = vpack.c.b16 %v3383, %v3382
        %v3631 = vpack.c.b16 %v3385, %v3384
        %v3632 = vpack.c.b16 %v3387, %v3386
        %v3633 = vpack.c.b16 %v3389, %v3388
        %v3634 = vpack.c.b16 %v3391, %v3390
        %v3635 = vpack.c.b16 %v3393, %v3392
        %v3636 = vpack.c.b16 %v3395, %v3394
        %v3637 = vpack.c.b16 %v3397, %v3396
        %v3638 = vpack.c.b16 %v3399, %v3398
        %v3639 = vpack.c.b16 %v3401, %v3400
        %v3640 = vpack.c.b16 %v3403, %v3402
        %v3641 = vpack.c.b16 %v3405, %v3404
        %v3642 = vpack.c.b16 %v3407, %v3406
        %v3643 = vpack.c.b16 %v3409, %v3408
        %v3644 = vpack.c.b16 %v3411, %v3410
        %v3645 = vpack.c.b16 %v3413, %v3412
        %v3646 = vpack.c.b16 %v3415, %v3414
        %v3647 = vpack.c.b16 %v3417, %v3416
        %v3648 = vpack.c.b16 %v3419, %v3418
        %v3649 = vpack.c.b16 %v3421, %v3420
        %v3650 = vpack.c.b16 %v3423, %v3422
        %v3651 = vpack.c.b16 %v3425, %v3424
        %v3652 = vpack.c.b16 %v3427, %v3426
        %v3653 = vpack.c.b16 %v3429, %v3428
        %v3654 = vpack.c.b16 %v3431, %v3430
        %v3655 = vpack.c.b16 %v3433, %v3432
        %v3656 = vpack.c.b16 %v3435, %v3434
        %v3657 = vpack.c.b16 %v3437, %v3436
        %v3658 = vpack.c.b16 %v3439, %v3438
        %v3659 = vpack.c.b16 %v3441, %v3440
        %v3660 = vpack.c.b16 %v3443, %v3442
        %v3661 = vpack.c.b16 %v3445, %v3444
        %v3662 = vpack.c.b16 %v3447, %v3446
        %v3663 = vpack.c.b16 %v3449, %v3448
        %v3664 = vpack.c.b16 %v3451, %v3450
        %v3665 = vpack.c.b16 %v3453, %v3452
        %v3666 = vpack.c.b16 %v3455, %v3454
        %v3667 = vpack.c.b16 %v3457, %v3456
        %v3668 = vpack.c.b16 %v3459, %v3458
        %v3669 = vpack.c.b16 %v3461, %v3460
        %v3670 = vpack.c.b16 %v3463, %v3462
        %v3671 = vpack.c.b16 %v3465, %v3464
        %v3672 = vpack.c.b16 %v3467, %v3466
        %v3673 = vpack.c.b16 %v3469, %v3468
        %v3674 = vpack.c.b16 %v3471, %v3470
        %v3675 = vpack.c.b16 %v3473, %v3472
        %v3676 = vpack.c.b16 %v3475, %v3474
        %v3677 = vpack.c.b16 %v3477, %v3476
        %v3678 = vpack.c.b16 %v3479, %v3478
        %v3679 = vpack.c.b16 %v3481, %v3480
        %v3680 = vpack.c.b16 %v3483, %v3482
        %v3681 = vpack.c.b16 %v3485, %v3484
        %v3682 = vpack.c.b16 %v3487, %v3486
        %v3683 = vpack.c.b16 %v3489, %v3488
        %v3684 = vpack.c.b16 %v3491, %v3490
        %v3685 = vpack.c.b16 %v3493, %v3492
        %v3686 = vpack.c.b16 %v3495, %v3494
        %v3687 = vpack.c.b16 %v3497, %v3496
        %v3688 = vpack.c.b16 %v3499, %v3498
        %v3689 = vpack.c.b16 %v3501, %v3500
        %v3690 = vpack.c.b16 %v3503, %v3502
        %v3691 = vpack.c.b16 %v3505, %v3504
        %v3692 = vpack.c.b16 %v3507, %v3506
        %v3693 = vpack.c.b16 %v3509, %v3508
        %v3694 = vpack.c.b16 %v3511, %v3510
        %v3695 = vpack.c.b16 %v3513, %v3512
        %v3696 = vpack.c.b16 %v3515, %v3514
        %v3697 = vpack.c.b16 %v3517, %v3516
        %v3698 = vpack.c.b16 %v3519, %v3518
        %v3699 = vpack.c.b16 %v3521, %v3520
        %v3700 = vpack.c.b16 %v3523, %v3522
        %v3701 = vpack.c.b16 %v3525, %v3524
        %v3702 = vpack.c.b16 %v3527, %v3526
        %v3703 = vpack.c.b16 %v3529, %v3528
        %v3704 = vpack.c.b16 %v3531, %v3530
        %v3705 = vpack.c.b16 %v3533, %v3532
        %v3706 = vpack.c.b16 %v3535, %v3534
        %v3707 = vpack.c.b16 %v3537, %v3536
        %v3708 = vpack.c.b16 %v3539, %v3538
        %v3709 = vpack.c.b16 %v3541, %v3540
        %v3710 = vpack.c.b16 %v3543, %v3542
        %v3711 = vpack.c.b16 %v3545, %v3544
        %v3712 = vpack.c.b16 %v3547, %v3546
        %v3713 = vpack.c.b16 %v3549, %v3548
        %v3714 = vpack.c.b16 %v3551, %v3550
        %v3715 = vpack.c.b16 %v3553, %v3552
        %v3716 = vpack.c.b16 %v3555, %v3554
        %v3717 = vpack.c.b16 %v3557, %v3556
        %v3718 = vpack.c.b16 %v3559, %v3558
        %v3719 = vpack.c.b16 %v3561, %v3560
        %v3720 = vpack.c.b16 %v3563, %v3562
        %v3721 = vpack.c.b16 %v3565, %v3564
        %v3722 = vpack.c.b16 %v3567, %v3566
        %v3723 = vpack.c.b16 %v3569, %v3568
        %v3724 = vpack.c.b16 %v3571, %v3570
        %v3725 = vpack.c.b16 %v3573, %v3572
        %v3726 = vpack.c.b16 %v3575, %v3574
        %v3727 = vpack.c.b16 %v3577, %v3576
        %v3728 = vpack.c.b16 %v3579, %v3578
        %v3729 = vpack.c.b16 %v3581, %v3580
        %v3730 = vpack.c.b16 %v3583, %v3582
        %v3731 = vpack.c.b16 %v3585, %v3584
        %v3732 = vpack.c.b16 %v3587, %v3586
        %v3733 = vpack.c.b16 %v3589, %v3588
        %v3734 = vpack.c.b16 %v3591, %v3590
        %v3735 = vpack.c.b16 %v3593, %v3592
        %v3736 = vpack.c.b16 %v3595, %v3594
        %v3737 = vpack.c.b16 %v3597, %v3596
        %v3738 = vpack.c.b16 %v3599, %v3598
        %v3739 = vpack.c.b16 %v3601, %v3600
        %v3740 = vpack.c.b16 %v3603, %v3602
        %v3741 = vpack.c.b16 %v3605, %v3604
        %v3742 = vpack.c.b16 %v3607, %v3606
        %v3743 = vpack.c.b16 %v3609, %v3608
        %v3744 = vpack.c.b16 %v3611, %v3610
        %v3745 = vpack.c.b16 %v3613, %v3612
        %v3746 = vpack.c.b16 %v3615, %v3614
        %v3747 = vpack.c.b16 %v3617, %v3616
        %v3748 = vpack.c.b16 %v3619, %v3618
        %v3749 = vpack.c.b16 %v3621, %v3620
        %3878 = vmatprep.subr.bf16.mxu0 0
        %3879 = vmatpush1.bf16.msra.mxu0 %v3622
        %3880 = vmatprep.subr.bf16.mxu0 0
        %3881 = vmatpush1.bf16.msra.mxu0 %v3623
        %3882 = vmatprep.subr.bf16.mxu0 0
        %3883 = vmatpush1.bf16.msra.mxu0 %v3624
        %3884 = vmatprep.subr.bf16.mxu0 0
        %3885 = vmatpush1.bf16.msra.mxu0 %v3625
        %3886 = vmatprep.subr.bf16.mxu0 0
        %3887 = vmatpush1.bf16.msra.mxu0 %v3626
        %3888 = vmatprep.subr.bf16.mxu0 0
        %3889 = vmatpush1.bf16.msra.mxu0 %v3627
        %3890 = vmatprep.subr.bf16.mxu0 0
        %3891 = vmatpush1.bf16.msra.mxu0 %v3628
        %3892 = vmatprep.subr.bf16.mxu0 0
        %3893 = vmatpush1.bf16.msra.mxu0 %v3629
        %3894 = vmatprep.subr.bf16.mxu0 0
        %3895 = vmatpush1.bf16.msra.mxu0 %v3630
        %3896 = vmatprep.subr.bf16.mxu0 0
        %3897 = vmatpush1.bf16.msra.mxu0 %v3631
        %3898 = vmatprep.subr.bf16.mxu0 0
        %3899 = vmatpush1.bf16.msra.mxu0 %v3632
        %3900 = vmatprep.subr.bf16.mxu0 0
        %3901 = vmatpush1.bf16.msra.mxu0 %v3633
        %3902 = vmatprep.subr.bf16.mxu0 0
        %3903 = vmatpush1.bf16.msra.mxu0 %v3634
        %3904 = vmatprep.subr.bf16.mxu0 0
        %3905 = vmatpush1.bf16.msra.mxu0 %v3635
        %3906 = vmatprep.subr.bf16.mxu0 0
        %3907 = vmatpush1.bf16.msra.mxu0 %v3636
        %3908 = vmatprep.subr.bf16.mxu0 0
        %3909 = vmatpush1.bf16.msra.mxu0 %v3637
        %3910 = vmatprep.mubr.bf16.mxu0 %v2832
        %3911 = vmatmul.mubr.bf16.gmra.mrb[0].mxu0 %v2831
        %v3912 = vpop.f32.mrb[0].mxu0
        %v3913 = vadd.f32 %v3108, %v3912
        %v3914 = vpop.f32.mrb[0].mxu0
        %v3915 = vpop.f32.mrb[0].mxu0
        %v3916 = vadd.f32 %v3108, %v3915
        %v3917 = vpop.f32.mrb[0].mxu0
        %3918 = vdwg.mxu0
        %3919 = vmatprep.subr.bf16.mxu0 0
        %3920 = vmatpush1.bf16.msra.mxu0 %v3638
        %3921 = vmatprep.subr.bf16.mxu0 0
        %3922 = vmatpush1.bf16.msra.mxu0 %v3639
        %3923 = vmatprep.subr.bf16.mxu0 0
        %3924 = vmatpush1.bf16.msra.mxu0 %v3640
        %3925 = vmatprep.subr.bf16.mxu0 0
        %3926 = vmatpush1.bf16.msra.mxu0 %v3641
        %3927 = vmatprep.subr.bf16.mxu0 0
        %3928 = vmatpush1.bf16.msra.mxu0 %v3642
        %3929 = vmatprep.subr.bf16.mxu0 0
        %3930 = vmatpush1.bf16.msra.mxu0 %v3643
        %3931 = vmatprep.subr.bf16.mxu0 0
        %3932 = vmatpush1.bf16.msra.mxu0 %v3644
        %3933 = vmatprep.subr.bf16.mxu0 0
        %3934 = vmatpush1.bf16.msra.mxu0 %v3645
        %3935 = vmatprep.subr.bf16.mxu0 0
        %3936 = vmatpush1.bf16.msra.mxu0 %v3646
        %3937 = vmatprep.subr.bf16.mxu0 0
        %3938 = vmatpush1.bf16.msra.mxu0 %v3647
        %3939 = vmatprep.subr.bf16.mxu0 0
        %3940 = vmatpush1.bf16.msra.mxu0 %v3648
        %3941 = vmatprep.subr.bf16.mxu0 0
        %3942 = vmatpush1.bf16.msra.mxu0 %v3649
        %3943 = vmatprep.subr.bf16.mxu0 0
        %3944 = vmatpush1.bf16.msra.mxu0 %v3650
        %3945 = vmatprep.subr.bf16.mxu0 0
        %3946 = vmatpush1.bf16.msra.mxu0 %v3651
        %3947 = vmatprep.subr.bf16.mxu0 0
        %3948 = vmatpush1.bf16.msra.mxu0 %v3652
        %3949 = vmatprep.subr.bf16.mxu0 0
        %3950 = vmatpush1.bf16.msra.mxu0 %v3653
        %3951 = vmatprep.mubr.bf16.mxu0 %v2834
        %3952 = vmatmul.mubr.bf16.gmra.mrb[0].mxu0 %v2833
        %v3953 = vpop.f32.mrb[0].mxu0
        %v3954 = vadd.f32 %v3913, %v3953
        %v3955 = vpop.f32.mrb[0].mxu0
        %v3956 = vpop.f32.mrb[0].mxu0
        %v3957 = vadd.f32 %v3916, %v3956
        %v3958 = vpop.f32.mrb[0].mxu0
        %3959 = vdwg.mxu0
        %3960 = vmatprep.subr.bf16.mxu0 0
        %3961 = vmatpush1.bf16.msra.mxu0 %v3654
        %3962 = vmatprep.subr.bf16.mxu0 0
        %3963 = vmatpush1.bf16.msra.mxu0 %v3655
        %3964 = vmatprep.subr.bf16.mxu0 0
        %3965 = vmatpush1.bf16.msra.mxu0 %v3656
        %3966 = vmatprep.subr.bf16.mxu0 0
        %3967 = vmatpush1.bf16.msra.mxu0 %v3657
        %3968 = vmatprep.subr.bf16.mxu0 0
        %3969 = vmatpush1.bf16.msra.mxu0 %v3658
        %3970 = vmatprep.subr.bf16.mxu0 0
        %3971 = vmatpush1.bf16.msra.mxu0 %v3659
        %3972 = vmatprep.subr.bf16.mxu0 0
        %3973 = vmatpush1.bf16.msra.mxu0 %v3660
        %3974 = vmatprep.subr.bf16.mxu0 0
        %3975 = vmatpush1.bf16.msra.mxu0 %v3661
        %3976 = vmatprep.subr.bf16.mxu0 0
        %3977 = vmatpush1.bf16.msra.mxu0 %v3662
        %3978 = vmatprep.subr.bf16.mxu0 0
        %3979 = vmatpush1.bf16.msra.mxu0 %v3663
        %3980 = vmatprep.subr.bf16.mxu0 0
        %3981 = vmatpush1.bf16.msra.mxu0 %v3664
        %3982 = vmatprep.subr.bf16.mxu0 0
        %3983 = vmatpush1.bf16.msra.mxu0 %v3665
        %3984 = vmatprep.subr.bf16.mxu0 0
        %3985 = vmatpush1.bf16.msra.mxu0 %v3666
        %3986 = vmatprep.subr.bf16.mxu0 0
        %3987 = vmatpush1.bf16.msra.mxu0 %v3667
        %3988 = vmatprep.subr.bf16.mxu0 0
        %3989 = vmatpush1.bf16.msra.mxu0 %v3668
        %3990 = vmatprep.subr.bf16.mxu0 0
        %3991 = vmatpush1.bf16.msra.mxu0 %v3669
        %3992 = vmatprep.mubr.bf16.mxu0 %v2836
        %3993 = vmatmul.mubr.bf16.gmra.mrb[0].mxu0 %v2835
        %v3994 = vpop.f32.mrb[0].mxu0
        %v3995 = vadd.f32 %v3954, %v3994
        %v3996 = vpop.f32.mrb[0].mxu0
        %v3997 = vpop.f32.mrb[0].mxu0
        %v3998 = vadd.f32 %v3957, %v3997
        %v3999 = vpop.f32.mrb[0].mxu0
        %4000 = vdwg.mxu0
        %4001 = vmatprep.subr.bf16.mxu0 0
        %4002 = vmatpush1.bf16.msra.mxu0 %v3670
        %4003 = vmatprep.subr.bf16.mxu0 0
        %4004 = vmatpush1.bf16.msra.mxu0 %v3671
        %4005 = vmatprep.subr.bf16.mxu0 0
        %4006 = vmatpush1.bf16.msra.mxu0 %v3672
        %4007 = vmatprep.subr.bf16.mxu0 0
        %4008 = vmatpush1.bf16.msra.mxu0 %v3673
        %4009 = vmatprep.subr.bf16.mxu0 0
        %4010 = vmatpush1.bf16.msra.mxu0 %v3674
        %4011 = vmatprep.subr.bf16.mxu0 0
        %4012 = vmatpush1.bf16.msra.mxu0 %v3675
        %4013 = vmatprep.subr.bf16.mxu0 0
        %4014 = vmatpush1.bf16.msra.mxu0 %v3676
        %4015 = vmatprep.subr.bf16.mxu0 0
        %4016 = vmatpush1.bf16.msra.mxu0 %v3677
        %4017 = vmatprep.subr.bf16.mxu0 0
        %4018 = vmatpush1.bf16.msra.mxu0 %v3678
        %4019 = vmatprep.subr.bf16.mxu0 0
        %4020 = vmatpush1.bf16.msra.mxu0 %v3679
        %4021 = vmatprep.subr.bf16.mxu0 0
        %4022 = vmatpush1.bf16.msra.mxu0 %v3680
        %4023 = vmatprep.subr.bf16.mxu0 0
        %4024 = vmatpush1.bf16.msra.mxu0 %v3681
        %4025 = vmatprep.subr.bf16.mxu0 0
        %4026 = vmatpush1.bf16.msra.mxu0 %v3682
        %4027 = vmatprep.subr.bf16.mxu0 0
        %4028 = vmatpush1.bf16.msra.mxu0 %v3683
        %4029 = vmatprep.subr.bf16.mxu0 0
        %4030 = vmatpush1.bf16.msra.mxu0 %v3684
        %4031 = vmatprep.subr.bf16.mxu0 0
        %4032 = vmatpush1.bf16.msra.mxu0 %v3685
        %4033 = vmatprep.mubr.bf16.mxu0 %v2838
        %4034 = vmatmul.mubr.bf16.gmra.mrb[0].mxu0 %v2837
        %v4035 = vpop.f32.mrb[0].mxu0
        %v4036 = vadd.f32 %v3995, %v4035
        %v4037 = vpop.f32.mrb[0].mxu0
        %v4038 = vpop.f32.mrb[0].mxu0
        %v4039 = vadd.f32 %v3998, %v4038
        %v4040 = vpop.f32.mrb[0].mxu0
        %4041 = vdwg.mxu0
        %4042 = vmatprep.subr.bf16.mxu0 0
        %4043 = vmatpush1.bf16.msra.mxu0 %v3686
        %4044 = vmatprep.subr.bf16.mxu0 0
        %4045 = vmatpush1.bf16.msra.mxu0 %v3687
        %4046 = vmatprep.subr.bf16.mxu0 0
        %4047 = vmatpush1.bf16.msra.mxu0 %v3688
        %4048 = vmatprep.subr.bf16.mxu0 0
        %4049 = vmatpush1.bf16.msra.mxu0 %v3689
        %4050 = vmatprep.subr.bf16.mxu0 0
        %4051 = vmatpush1.bf16.msra.mxu0 %v3690
        %4052 = vmatprep.subr.bf16.mxu0 0
        %4053 = vmatpush1.bf16.msra.mxu0 %v3691
        %4054 = vmatprep.subr.bf16.mxu0 0
        %4055 = vmatpush1.bf16.msra.mxu0 %v3692
        %4056 = vmatprep.subr.bf16.mxu0 0
        %4057 = vmatpush1.bf16.msra.mxu0 %v3693
        %4058 = vmatprep.subr.bf16.mxu0 0
        %4059 = vmatpush1.bf16.msra.mxu0 %v3694
        %4060 = vmatprep.subr.bf16.mxu0 0
        %4061 = vmatpush1.bf16.msra.mxu0 %v3695
        %4062 = vmatprep.subr.bf16.mxu0 0
        %4063 = vmatpush1.bf16.msra.mxu0 %v3696
        %4064 = vmatprep.subr.bf16.mxu0 0
        %4065 = vmatpush1.bf16.msra.mxu0 %v3697
        %4066 = vmatprep.subr.bf16.mxu0 0
        %4067 = vmatpush1.bf16.msra.mxu0 %v3698
        %4068 = vmatprep.subr.bf16.mxu0 0
        %4069 = vmatpush1.bf16.msra.mxu0 %v3699
        %4070 = vmatprep.subr.bf16.mxu0 0
        %4071 = vmatpush1.bf16.msra.mxu0 %v3700
        %4072 = vmatprep.subr.bf16.mxu0 0
        %4073 = vmatpush1.bf16.msra.mxu0 %v3701
        %4074 = vmatprep.mubr.bf16.mxu0 %v2840
        %4075 = vmatmul.mubr.bf16.gmra.mrb[0].mxu0 %v2839
        %v4076 = vpop.f32.mrb[0].mxu0
        %v4077 = vadd.f32 %v4036, %v4076
        %v4078 = vpop.f32.mrb[0].mxu0
        %v4079 = vpop.f32.mrb[0].mxu0
        %v4080 = vadd.f32 %v4039, %v4079
        %v4081 = vpop.f32.mrb[0].mxu0
        %4082 = vdwg.mxu0
        %4083 = vmatprep.subr.bf16.mxu0 0
        %4084 = vmatpush1.bf16.msra.mxu0 %v3702
        %4085 = vmatprep.subr.bf16.mxu0 0
        %4086 = vmatpush1.bf16.msra.mxu0 %v3703
        %4087 = vmatprep.subr.bf16.mxu0 0
        %4088 = vmatpush1.bf16.msra.mxu0 %v3704
        %4089 = vmatprep.subr.bf16.mxu0 0
        %4090 = vmatpush1.bf16.msra.mxu0 %v3705
        %4091 = vmatprep.subr.bf16.mxu0 0
        %4092 = vmatpush1.bf16.msra.mxu0 %v3706
        %4093 = vmatprep.subr.bf16.mxu0 0
        %4094 = vmatpush1.bf16.msra.mxu0 %v3707
        %4095 = vmatprep.subr.bf16.mxu0 0
        %4096 = vmatpush1.bf16.msra.mxu0 %v3708
        %4097 = vmatprep.subr.bf16.mxu0 0
        %4098 = vmatpush1.bf16.msra.mxu0 %v3709
        %4099 = vmatprep.subr.bf16.mxu0 0
        %4100 = vmatpush1.bf16.msra.mxu0 %v3710
        %4101 = vmatprep.subr.bf16.mxu0 0
        %4102 = vmatpush1.bf16.msra.mxu0 %v3711
        %4103 = vmatprep.subr.bf16.mxu0 0
        %4104 = vmatpush1.bf16.msra.mxu0 %v3712
        %4105 = vmatprep.subr.bf16.mxu0 0
        %4106 = vmatpush1.bf16.msra.mxu0 %v3713
        %4107 = vmatprep.subr.bf16.mxu0 0
        %4108 = vmatpush1.bf16.msra.mxu0 %v3714
        %4109 = vmatprep.subr.bf16.mxu0 0
        %4110 = vmatpush1.bf16.msra.mxu0 %v3715
        %4111 = vmatprep.subr.bf16.mxu0 0
        %4112 = vmatpush1.bf16.msra.mxu0 %v3716
        %4113 = vmatprep.subr.bf16.mxu0 0
        %4114 = vmatpush1.bf16.msra.mxu0 %v3717
        %4115 = vmatprep.mubr.bf16.mxu0 %v2842
        %4116 = vmatmul.mubr.bf16.gmra.mrb[0].mxu0 %v2841
        %v4117 = vpop.f32.mrb[0].mxu0
        %v4118 = vadd.f32 %v4077, %v4117
        %v4119 = vpop.f32.mrb[0].mxu0
        %v4120 = vpop.f32.mrb[0].mxu0
        %v4121 = vadd.f32 %v4080, %v4120
        %v4122 = vpop.f32.mrb[0].mxu0
        %4123 = vdwg.mxu0
        %4124 = vmatprep.subr.bf16.mxu0 0
        %4125 = vmatpush1.bf16.msra.mxu0 %v3718
        %4126 = vmatprep.subr.bf16.mxu0 0
        %4127 = vmatpush1.bf16.msra.mxu0 %v3719
        %4128 = vmatprep.subr.bf16.mxu0 0
        %4129 = vmatpush1.bf16.msra.mxu0 %v3720
        %4130 = vmatprep.subr.bf16.mxu0 0
        %4131 = vmatpush1.bf16.msra.mxu0 %v3721
        %4132 = vmatprep.subr.bf16.mxu0 0
        %4133 = vmatpush1.bf16.msra.mxu0 %v3722
        %4134 = vmatprep.subr.bf16.mxu0 0
        %4135 = vmatpush1.bf16.msra.mxu0 %v3723
        %4136 = vmatprep.subr.bf16.mxu0 0
        %4137 = vmatpush1.bf16.msra.mxu0 %v3724
        %4138 = vmatprep.subr.bf16.mxu0 0
        %4139 = vmatpush1.bf16.msra.mxu0 %v3725
        %4140 = vmatprep.subr.bf16.mxu0 0
        %4141 = vmatpush1.bf16.msra.mxu0 %v3726
        %4142 = vmatprep.subr.bf16.mxu0 0
        %4143 = vmatpush1.bf16.msra.mxu0 %v3727
        %4144 = vmatprep.subr.bf16.mxu0 0
        %4145 = vmatpush1.bf16.msra.mxu0 %v3728
        %4146 = vmatprep.subr.bf16.mxu0 0
        %4147 = vmatpush1.bf16.msra.mxu0 %v3729
        %4148 = vmatprep.subr.bf16.mxu0 0
        %4149 = vmatpush1.bf16.msra.mxu0 %v3730
        %4150 = vmatprep.subr.bf16.mxu0 0
        %4151 = vmatpush1.bf16.msra.mxu0 %v3731
        %4152 = vmatprep.subr.bf16.mxu0 0
        %4153 = vmatpush1.bf16.msra.mxu0 %v3732
        %4154 = vmatprep.subr.bf16.mxu0 0
        %4155 = vmatpush1.bf16.msra.mxu0 %v3733
        %4156 = vmatprep.mubr.bf16.mxu0 %v2844
        %4157 = vmatmul.mubr.bf16.gmra.mrb[0].mxu0 %v2843
        %v4158 = vpop.f32.mrb[0].mxu0
        %v4159 = vadd.f32 %v4118, %v4158
        %v4160 = vpop.f32.mrb[0].mxu0
        %v4161 = vpop.f32.mrb[0].mxu0
        %v4162 = vadd.f32 %v4121, %v4161
        %v4163 = vpop.f32.mrb[0].mxu0
        %4164 = vdwg.mxu0
        %4165 = vmatprep.subr.bf16.mxu0 0
        %4166 = vmatpush1.bf16.msra.mxu0 %v3734
        %4167 = vmatprep.subr.bf16.mxu0 0
        %4168 = vmatpush1.bf16.msra.mxu0 %v3735
        %4169 = vmatprep.subr.bf16.mxu0 0
        %4170 = vmatpush1.bf16.msra.mxu0 %v3736
        %4171 = vmatprep.subr.bf16.mxu0 0
        %4172 = vmatpush1.bf16.msra.mxu0 %v3737
        %4173 = vmatprep.subr.bf16.mxu0 0
        %4174 = vmatpush1.bf16.msra.mxu0 %v3738
        %4175 = vmatprep.subr.bf16.mxu0 0
        %4176 = vmatpush1.bf16.msra.mxu0 %v3739
        %4177 = vmatprep.subr.bf16.mxu0 0
        %4178 = vmatpush1.bf16.msra.mxu0 %v3740
        %4179 = vmatprep.subr.bf16.mxu0 0
        %4180 = vmatpush1.bf16.msra.mxu0 %v3741
        %4181 = vmatprep.subr.bf16.mxu0 0
        %4182 = vmatpush1.bf16.msra.mxu0 %v3742
        %4183 = vmatprep.subr.bf16.mxu0 0
        %4184 = vmatpush1.bf16.msra.mxu0 %v3743
        %4185 = vmatprep.subr.bf16.mxu0 0
        %4186 = vmatpush1.bf16.msra.mxu0 %v3744
        %4187 = vmatprep.subr.bf16.mxu0 0
        %4188 = vmatpush1.bf16.msra.mxu0 %v3745
        %4189 = vmatprep.subr.bf16.mxu0 0
        %4190 = vmatpush1.bf16.msra.mxu0 %v3746
        %4191 = vmatprep.subr.bf16.mxu0 0
        %4192 = vmatpush1.bf16.msra.mxu0 %v3747
        %4193 = vmatprep.subr.bf16.mxu0 0
        %4194 = vmatpush1.bf16.msra.mxu0 %v3748
        %4195 = vmatprep.subr.bf16.mxu0 0
        %4196 = vmatpush1.bf16.msra.mxu0 %v3749
        %4197 = vmatprep.mubr.bf16.mxu0 %v2846
        %4198 = vmatmul.mubr.bf16.gmra.mrb[0].mxu0 %v2845
        %v4199 = vpop.f32.mrb[0].mxu0
        %v4200 = vadd.f32 %v4159, %v4199
        %v4201 = vpop.f32.mrb[0].mxu0
        %v4202 = vpop.f32.mrb[0].mxu0
        %v4203 = vadd.f32 %v4162, %v4202
        %v4204 = vpop.f32.mrb[0].mxu0
        %4205 = vdwg.mxu0
        %v4206 = vadd.f32 %v2173, %v4200
        %v4207 = vadd.f32 %v2174, %v4203
        %v4208 = vld [vmem:[%s813] sm:$0x1]
        %v4209 = vld [vmem:[%s816] sm:$0x1]
        %v4210 = vsel %vm1073, %v4206, 0.0
        %4211 = vadd.xlane.f32.xlu0 %v4210
        %v4212 = vpop.xlane.xlu0 %4211
        %v4213 = vsel %vm1073, %v4207, 0.0
        %4214 = vadd.xlane.f32.xlu0 %v4213
        %v4215 = vpop.xlane.xlu0 %4214
        %v4216 = vmul.f32 %v4212, %v2134
        %v4217 = vmul.f32 %v4215, %v2134
        %v4218 = vsub.f32 %v4206, %v4216
        %v4219 = vsub.f32 %v4207, %v4217
        %v4220 = vmul.f32 %v4218, %v4218
        %v4221 = vmul.f32 %v4219, %v4219
        %v4222 = vsel %vm1073, %v4220, 0.0
        %4223 = vadd.xlane.f32.xlu0 %v4222
        %v4224 = vpop.xlane.xlu0 %4223
        %v4225 = vsel %vm1073, %v4221, 0.0
        %4226 = vadd.xlane.f32.xlu0 %v4225
        %v4227 = vpop.xlane.xlu0 %4226
        %v4228 = vmul.f32 %v4224, %v2134
        %v4229 = vmul.f32 %v4227, %v2134
        %v4230 = vadd.f32 %v4228, 1e-05
        %v4231 = vadd.f32 %v4229, 1e-05
        %v4232 = vrsqrt.pop %v4230
        %v4233 = vrsqrt.pop %v4231
        %v4234 = vmul.f32 %v4218, %v4232
        %v4235 = vmul.f32 %v4219, %v4233
        %v4237 = vlaneseq
        %v4238 = vshrl.u32 %v4237, 7
        %v4239 = vsub.s32 0, %v4238
        %v4240 = vrot.slane %v4208, %v4239
        %v4242 = vmul.f32 %v4234, %v4240
        %v4243 = vmul.f32 %v4235, %v4240
        %v4245 = vlaneseq
        %v4246 = vshrl.u32 %v4245, 7
        %v4247 = vsub.s32 0, %v4246
        %v4248 = vrot.slane %v4209, %v4247
        %v4250 = vadd.f32 %v4242, %v4248
        %v4251 = vadd.f32 %v4243, %v4248
        %4252 = vst.msk [vmem:[#allocation2] sm:$0xff] %vm1073, %v4250
        %4253 = vst.msk [vmem:[#allocation2 + $0x8] sm:$0xff] %vm1073, %v4251
        %p4254 = scmp.eq.s32.totalorder %s35, 1
        // Predicated region
        $region97: #{tpu_custom_call.1} parent=91 // pred_check
          %p4255 = pneg %p4254
        $region98: #{tpu_custom_call.1} parent=91 // pred_check_branch
          %4257 = sbr.rel (%p4255) target = $region100
        $region99: #{tpu_custom_call.1} parent=91 // pred_region
          %v4258 = vld [vmem:[#allocation2] sm:$0xff]
          %v4259 = vld [vmem:[#allocation2 + $0x8] sm:$0xff]
          %v4262 = vrot.slane %v4259, 7
          %vm4265 = vcmask 261127
          %4266 = vst.msk [vmem:[#allocation3 - $0x7] sm:$0x80] %vm4265, %v4258
          %vm4267 = vcmask 253952
          %4268 = vst.msk [vmem:[#allocation3 + $0x1] sm:$0x1] %vm4267, %v4262
        $region100: #{tpu_custom_call.1} parent=91 // pred_fallthru
          _
        // Predicated region
        $region101: #{tpu_custom_call.1} parent=91 // pred_check
          %p4269 = pneg %p513
        $region102: #{tpu_custom_call.1} parent=91 // pred_check_branch
          %4271 = sbr.rel (%p4269) target = $region104
        $region103: #{tpu_custom_call.1} parent=91 // pred_region
          %s4273 = ssub.s32 32, 32
          %4274 = vsyncadd [#allocation4], %s4273
          %s4275 = smul.addr %s34, 32
          %s4276 = scalar_lea.hbm %s18, %s4275
          %s4278 = sshll.u32 [#allocation3], 4
          %s4279 = int_to_ptr.vmem [resolvable:$true] %s4278
          %4281 = dma.vmem_to_hbm [thread:$0]  %s4279, 32, %s4276, [#allocation4]
        $region104: #{tpu_custom_call.1} parent=91 // pred_fallthru
          _
        // Predicated region
        $region105: #{tpu_custom_call.1} parent=91 // pred_check
          %p4282 = pneg %p513
        $region106: #{tpu_custom_call.1} parent=91 // pred_check_branch
          %4284 = sbr.rel (%p4282) target = $region108
        $region107: #{tpu_custom_call.1} parent=91 // pred_region
          %4285 = dma.done [#allocation4], 32
        $region108: #{tpu_custom_call.1} parent=91 // pred_fallthru
          _
      $region92: #{tpu_custom_call.1} parent=5 // pred_fallthru
        _
      %p4286 = scmp.le.s32.totalorder 2, %s25
      // Predicated region
      $region109: #{tpu_custom_call.1} parent=5 // pred_check
        %p4287 = pneg %p4286
      $region110: #{tpu_custom_call.1} parent=5 // pred_check_branch
        %4289 = sbr.rel (%p4287) target = $region112
      $region111: #{tpu_custom_call.1} parent=5 // pred_region
        %s4290 = ssub.s32 %s25, 2
      $region112: #{tpu_custom_call.1} parent=5 // pred_fallthru
        _
    $region6: #{tpu_custom_call.1} parent=1 // loop_footer
      %s29 = sadd.s32 1, %s25
    $region7: #{tpu_custom_call.1} parent=1 // loop_footer_branch
      %24 = sbr.rel target = $region3
    $region8: #{tpu_custom_call.1} parent=1 // loop_exit
      _
    %4291 = vsyncpa [#allocation4], 1
    %s4292 = scalar_lea.sflag [#allocation4], 1
    %4293 = vsyncpa %s4292, 1

</llo_original>
